<compile_context>
chip_gen: v7x
topology: tpu7x:2x2x1
jax: 0.10.0
libtpu: 0.0.40
codegen_flags: <defaults>
</compile_context>

<pallas_src>
import jax
import jax.numpy as jnp
from jax.experimental import pallas as pl
from jax.experimental.pallas import tpu as pltpu


def mlp_kernel(x_ref, w1_ref, b1_ref, w2_ref, b2_ref, o_ref):
    # lin1: cast x to bf16 in-kernel (VPU), bf16 MXU operands, f32 accumulate.
    x = x_ref[...].astype(jnp.bfloat16)
    h = jnp.dot(x, w1_ref[...], preferred_element_type=jnp.float32)
    # bias + ReLU in f32 on the VPU; b1 is (1, H) -> broadcasts over the batch.
    h = jnp.maximum(h + b1_ref[...], 0.0)
    # lin2: re-quantize the activation to bf16 to feed the MXU, f32 accumulate.
    out = jnp.dot(h.astype(jnp.bfloat16), w2_ref[...],
                  preferred_element_type=jnp.float32)
    o_ref[...] = (out + b2_ref[...]).astype(o_ref.dtype)


def _pad_to(n, m):
    return (-n) % m


def prepare_params(w1, b1, w2, b2):
    """One-time model preparation (call once / cache; not on the hot path).

    w1: [D_in, H], b1: [H], w2: [H, O], b2: [O].
    Returns bf16 weights, f32 biases reshaped to (1, *), with the output dim
    zero-padded to a multiple of 128 so the kernel's output store is
    lane-dense.  Padded columns produce exactly 0 and are sliced off later.
    """
    O = w2.shape[1]
    Op = O + _pad_to(O, 128)
    w1b = w1.astype(jnp.bfloat16)                                    # [D_in, H]
    b1p = b1.reshape(1, -1).astype(jnp.float32)                      # [1, H]
    w2b = jnp.pad(w2, ((0, 0), (0, Op - O))).astype(jnp.bfloat16)    # [H, Op]
    b2p = jnp.pad(b2.reshape(1, -1), ((0, 0), (0, Op - O))).astype(jnp.float32)
    return w1b, b1p, w2b, b2p, O


def neural_net2_forward(x, prepared, *, batch_tile=256):
    """x: [B, D_in] f32; prepared: output of prepare_params()."""
    w1b, b1p, w2b, b2p, O = prepared
    B, D_in = x.shape
    H = w1b.shape[1]
    Op = w2b.shape[1]

    TB = min(batch_tile, B)
    assert B % TB == 0 and TB % 16 == 0, \
        "batch must tile into multiples of 16 rows (bf16 sublane packing)"

    cost = pl.CostEstimate(
        flops=2 * B * (D_in * H + H * Op),
        transcendentals=0,
        bytes_accessed=(x.size * 4 + w1b.size * 2 + w2b.size * 2
                        + b1p.size * 4 + b2p.size * 4 + B * Op * 4),
    )

    out_padded = pl.pallas_call(
        mlp_kernel,
        out_shape=jax.ShapeDtypeStruct((B, Op), jnp.float32),
        grid_spec=pltpu.PrefetchScalarGridSpec(
            num_scalar_prefetch=0,
            grid=(B // TB,),  # batch axis; collapses to (1,) at B == batch_tile
            in_specs=[
                pl.BlockSpec((TB, D_in), lambda i: (i, 0)),  # x tile (f32, unpadded)
                pl.BlockSpec((D_in, H), lambda i: (0, 0)),   # w1 VMEM-resident
                pl.BlockSpec((1, H), lambda i: (0, 0)),      # b1 resident
                pl.BlockSpec((H, Op), lambda i: (0, 0)),     # w2 resident
                pl.BlockSpec((1, Op), lambda i: (0, 0)),     # b2 resident
            ],
            out_specs=pl.BlockSpec((TB, Op), lambda i: (i, 0)),  # lane-dense (Op%128==0)
        ),
        compiler_params=pltpu.CompilerParams(
            dimension_semantics=("parallel",)),
        cost_estimate=cost,
    )(x, w1b, b1p, w2b, b2p)

    # Slice the 128-lane output slab back to the logical O columns.
    return out_padded[:, :O].astype(x.dtype)


if __name__ == "__main__":
    # Shapes consistent with the module: hidden_size=500, output_size=10,
    # MNIST-style input_siz=784.  Batch 256 fills the MXU in one grid step.
    B, D_in, H, O = 256, 784, 500, 10

    key = jax.random.PRNGKey(0)
    kx, kw1, kb1, kw2, kb2 = jax.random.split(key, 5)

    x = jax.random.normal(kx, (B, D_in), dtype=jnp.float32)
    w1 = jax.random.normal(kw1, (D_in, H), dtype=jnp.float32) * 0.1
    b1 = jax.random.normal(kb1, (H,), dtype=jnp.float32) * 0.1
    w2 = jax.random.normal(kw2, (H, O), dtype=jnp.float32) * 0.1
    b2 = jax.random.normal(kb2, (O,), dtype=jnp.float32) * 0.1

    # One-time parameter preparation (off the per-call fast path).
    prepared = prepare_params(w1, b1, w2, b2)

    out = neural_net2_forward(x, prepared)
    out = jax.block_until_ready(out)
    assert out.shape == (B, O)

    # Reference 1: identical bf16-operand / f32-accumulate recipe in plain JAX
    # (checks the kernel itself, tight tolerance).
    xb = x.astype(jnp.bfloat16)
    h_ref = jnp.dot(xb, w1.astype(jnp.bfloat16),
                    preferred_element_type=jnp.float32) + b1
    h_ref = jnp.maximum(h_ref, 0.0)
    ref_bf16 = jnp.dot(h_ref.astype(jnp.bfloat16), w2.astype(jnp.bfloat16),
                       preferred_element_type=jnp.float32) + b2
    assert jnp.allclose(out, ref_bf16, atol=1e-2, rtol=1e-2), \
        float(jnp.max(jnp.abs(out - ref_bf16)))

    # Reference 2: full-f32 PyTorch-equivalent forward (loose tolerance for
    # the deliberate bf16 matmul operands).
    ref_f32 = jnp.maximum(x @ w1 + b1, 0.0) @ w2 + b2
    assert jnp.allclose(out, ref_f32, atol=0.25, rtol=0.05), \
        float(jnp.max(jnp.abs(out - ref_f32)))

    print("KERNEL_OK")
</pallas_src>

<mosaic_0001>
module attributes {stable_mosaic.version = 11 : i64} {
  func.func @mlp_kernel(%arg0: i32, %arg1: memref<256x784xf32, #tpu.memory_space<vmem>>, %arg2: memref<784x500xbf16, #tpu.memory_space<vmem>>, %arg3: memref<1x500xf32, #tpu.memory_space<vmem>>, %arg4: memref<500x128xbf16, #tpu.memory_space<vmem>>, %arg5: memref<1x128xf32, #tpu.memory_space<vmem>>, %arg6: memref<256x128xf32, #tpu.memory_space<vmem>>) attributes {dimension_semantics = [#tpu.dimension_semantics<parallel>], iteration_bounds = array<i64: 1>, scalar_prefetch = 0 : i64, scratch_operands = 0 : i64, tpu.core_type = #tpu.core_type<tc>, window_params = [{transform_indices = @transform_0, window_bounds = array<i64: 256, 784>}, {pipeline_mode = #tpu.pipeline_mode<synchronous>, transform_indices = @transform_1, window_bounds = array<i64: 784, 500>}, {pipeline_mode = #tpu.pipeline_mode<synchronous>, transform_indices = @transform_2, window_bounds = array<i64: 1, 500>}, {pipeline_mode = #tpu.pipeline_mode<synchronous>, transform_indices = @transform_3, window_bounds = array<i64: 500, 128>}, {pipeline_mode = #tpu.pipeline_mode<synchronous>, transform_indices = @transform_4, window_bounds = array<i64: 1, 128>}, {transform_indices = @transform_5, window_bounds = array<i64: 256, 128>}]} {
    %c0 = arith.constant 0 : index
    %c0_0 = arith.constant 0 : index
    %0 = vector.load %arg1[%c0, %c0_0] : memref<256x784xf32, #tpu.memory_space<vmem>>, vector<256x784xf32>
    %1 = arith.truncf %0 : vector<256x784xf32> to vector<256x784xbf16>
    %c0_1 = arith.constant 0 : index
    %c0_2 = arith.constant 0 : index
    %2 = vector.load %arg2[%c0_1, %c0_2] : memref<784x500xbf16, #tpu.memory_space<vmem>>, vector<784x500xbf16>
    %cst = arith.constant dense<0.000000e+00> : vector<256x500xf32>
    %3 = tpu.matmul %1, %2, %cst {dimension_numbers = #tpu.dot_dimension_numbers<[1], [0], [0], [1], [0, 0, 1, 1], [], []>} : vector<256x784xbf16>, vector<784x500xbf16>, vector<256x500xf32> -> vector<256x500xf32>
    %c0_3 = arith.constant 0 : index
    %c0_4 = arith.constant 0 : index
    %4 = vector.load %arg3[%c0_3, %c0_4] : memref<1x500xf32, #tpu.memory_space<vmem>>, vector<1x500xf32>
    %5 = vector.broadcast %4 : vector<1x500xf32> to vector<256x500xf32>
    %6 = arith.addf %3, %5 : vector<256x500xf32>
    %cst_5 = arith.constant 0.000000e+00 : f32
    %7 = vector.broadcast %cst_5 : f32 to vector<256x500xf32>
    %8 = arith.maximumf %6, %7 : vector<256x500xf32>
    %9 = arith.truncf %8 : vector<256x500xf32> to vector<256x500xbf16>
    %c0_6 = arith.constant 0 : index
    %c0_7 = arith.constant 0 : index
    %10 = vector.load %arg4[%c0_6, %c0_7] : memref<500x128xbf16, #tpu.memory_space<vmem>>, vector<500x128xbf16>
    %cst_8 = arith.constant dense<0.000000e+00> : vector<256x128xf32>
    %11 = tpu.matmul %9, %10, %cst_8 {dimension_numbers = #tpu.dot_dimension_numbers<[1], [0], [0], [1], [0, 0, 1, 1], [], []>} : vector<256x500xbf16>, vector<500x128xbf16>, vector<256x128xf32> -> vector<256x128xf32>
    %c0_9 = arith.constant 0 : index
    %c0_10 = arith.constant 0 : index
    %12 = vector.load %arg5[%c0_9, %c0_10] : memref<1x128xf32, #tpu.memory_space<vmem>>, vector<1x128xf32>
    %13 = vector.broadcast %12 : vector<1x128xf32> to vector<256x128xf32>
    %14 = arith.addf %11, %13 : vector<256x128xf32>
    %c0_11 = arith.constant 0 : index
    %c0_12 = arith.constant 0 : index
    %15 = vector.load %arg6[%c0_11, %c0_12] : memref<256x128xf32, #tpu.memory_space<vmem>>, vector<256x128xf32>
    tpu.vector_store %arg6[%c0_11, %c0_12], %14 {strides = array<i32>} : memref<256x128xf32, #tpu.memory_space<vmem>>, vector<256x128xf32>,
    return
  }
  func.func @transform_0(%arg0: i32) -> (i32, i32) {
    %c0_i32 = arith.constant 0 : i32
    %c0_i32_0 = arith.constant 0 : i32
    return %arg0, %c0_i32 : i32, i32
  }
  func.func @transform_1(%arg0: i32) -> (i32, i32) {
    %c0_i32 = arith.constant 0 : i32
    %c0_i32_0 = arith.constant 0 : i32
    %c0_i32_1 = arith.constant 0 : i32
    return %c0_i32, %c0_i32_0 : i32, i32
  }
  func.func @transform_2(%arg0: i32) -> (i32, i32) {
    %c0_i32 = arith.constant 0 : i32
    %c0_i32_0 = arith.constant 0 : i32
    %c0_i32_1 = arith.constant 0 : i32
    return %c0_i32, %c0_i32_0 : i32, i32
  }
  func.func @transform_3(%arg0: i32) -> (i32, i32) {
    %c0_i32 = arith.constant 0 : i32
    %c0_i32_0 = arith.constant 0 : i32
    %c0_i32_1 = arith.constant 0 : i32
    return %c0_i32, %c0_i32_0 : i32, i32
  }
  func.func @transform_4(%arg0: i32) -> (i32, i32) {
    %c0_i32 = arith.constant 0 : i32
    %c0_i32_0 = arith.constant 0 : i32
    %c0_i32_1 = arith.constant 0 : i32
    return %c0_i32, %c0_i32_0 : i32, i32
  }
  func.func @transform_5(%arg0: i32) -> (i32, i32) {
    %c0_i32 = arith.constant 0 : i32
    %c0_i32_0 = arith.constant 0 : i32
    return %arg0, %c0_i32 : i32, i32
  }
}

</mosaic_0001>

<llo_original>
// kernel: tpu_custom_call.1
$region0: #{tpu_custom_call.1}
  #allocation0 [shape = 'u32[]', space=smem, size = 0x4, offset = 0x4, fixed_abs, tag = 'smem constant byte address 0x4 - core index']
  #allocation1 [shape = 'u32[144,128]{1,0:T(1,128)}', space=vmem, size = 0x12000, scoped, tag = 'internal scratch']
  %s0 = inlined_call_operand.vmem [shape: f32[256,784], index: 0, kind: input, shape index: {}]
  %s1 = inlined_call_operand.vmem [shape: bf16[784,500], index: 1, kind: input, shape index: {}]
  %s2 = inlined_call_operand.vmem [shape: f32[1,500], index: 2, kind: input, shape index: {}]
  %s3 = inlined_call_operand.vmem [shape: bf16[500,128], index: 3, kind: input, shape index: {}]
  %s4 = inlined_call_operand.vmem [shape: f32[1,128], index: 4, kind: input, shape index: {}]
  %s5 = inlined_call_operand.hbm [shape: f32[256,128], index: 5, kind: output, shape index: {}]
  %s6 = sld [smem:[#allocation0]]
  $region30: #{tpu_custom_call.1} parent=0
    _
  %s8 = ssub.s32 1, %s6
  %s9 = scalar_select 0, %s8, %s6
  $region1: #{tpu_custom_call.1} parent=0
    #allocation2 [shape = 'u8[131072]{0}', space=vmem, size = 0x20000, scoped, tag = 'output window, operand 0, single buffered']
    #allocation3 [shape = 's32[1]{0}', space=sflag, size = 0x4, scoped, tag = 'scoped memory for tpu_custom_call.1']
    %10 = vsyncpa [#allocation3], 0
    // Predicated region
    $region2: #{tpu_custom_call.1} parent=1 // pred_check
      _
    $region3: #{tpu_custom_call.1} parent=1 // pred_check_branch
      %12 = sbr.rel (0) target = $region5
    $region4: #{tpu_custom_call.1} parent=1 // pred_region
      _
    $region5: #{tpu_custom_call.1} parent=1 // pred_fallthru
      _
    // Predicated region
    $region6: #{tpu_custom_call.1} parent=1 // pred_check
      _
    $region7: #{tpu_custom_call.1} parent=1 // pred_check_branch
      %14 = sbr.rel (0) target = $region9
    $region8: #{tpu_custom_call.1} parent=1 // pred_region
      _
    $region9: #{tpu_custom_call.1} parent=1 // pred_fallthru
      _
    // Predicated region
    $region10: #{tpu_custom_call.1} parent=1 // pred_check
      _
    $region11: #{tpu_custom_call.1} parent=1 // pred_check_branch
      %16 = sbr.rel (0) target = $region13
    $region12: #{tpu_custom_call.1} parent=1 // pred_region
      _
    $region13: #{tpu_custom_call.1} parent=1 // pred_fallthru
      _
    // Predicated region
    $region14: #{tpu_custom_call.1} parent=1 // pred_check
      _
    $region15: #{tpu_custom_call.1} parent=1 // pred_check_branch
      %18 = sbr.rel (0) target = $region17
    $region16: #{tpu_custom_call.1} parent=1 // pred_region
      _
    $region17: #{tpu_custom_call.1} parent=1 // pred_fallthru
      _
    // Predicated region
    $region18: #{tpu_custom_call.1} parent=1 // pred_check
      _
    $region19: #{tpu_custom_call.1} parent=1 // pred_check_branch
      %20 = sbr.rel (0) target = $region21
    $region20: #{tpu_custom_call.1} parent=1 // pred_region
      _
    $region21: #{tpu_custom_call.1} parent=1 // pred_fallthru
      _
    %v22 = vld [vmem:[%s0] sm:$0xff]
    %v23 = vld [vmem:[%s0 + $0x8] sm:$0xff]
    %v24 = vld [vmem:[%s0 + $0x10] sm:$0xff]
    %v25 = vld [vmem:[%s0 + $0x18] sm:$0xff]
    %v26 = vld [vmem:[%s0 + $0x20] sm:$0xff]
    %v27 = vld [vmem:[%s0 + $0x28] sm:$0xff]
    %v28 = vld [vmem:[%s0 + $0x30] sm:$0xff]
    %v29 = vld [vmem:[%s0 + $0x38] sm:$0xff]
    %v30 = vld [vmem:[%s0 + $0x40] sm:$0xff]
    %v31 = vld [vmem:[%s0 + $0x48] sm:$0xff]
    %v32 = vld [vmem:[%s0 + $0x50] sm:$0xff]
    %v33 = vld [vmem:[%s0 + $0x58] sm:$0xff]
    %v34 = vld [vmem:[%s0 + $0x60] sm:$0xff]
    %v35 = vld [vmem:[%s0 + $0x68] sm:$0xff]
    %v36 = vld [vmem:[%s0 + $0x70] sm:$0xff]
    %v37 = vld [vmem:[%s0 + $0x78] sm:$0xff]
    %v38 = vld [vmem:[%s0 + $0x80] sm:$0xff]
    %v39 = vld [vmem:[%s0 + $0x88] sm:$0xff]
    %v40 = vld [vmem:[%s0 + $0x90] sm:$0xff]
    %v41 = vld [vmem:[%s0 + $0x98] sm:$0xff]
    %v42 = vld [vmem:[%s0 + $0xa0] sm:$0xff]
    %v43 = vld [vmem:[%s0 + $0xa8] sm:$0xff]
    %v44 = vld [vmem:[%s0 + $0xb0] sm:$0xff]
    %v45 = vld [vmem:[%s0 + $0xb8] sm:$0xff]
    %v46 = vld [vmem:[%s0 + $0xc0] sm:$0xff]
    %v47 = vld [vmem:[%s0 + $0xc8] sm:$0xff]
    %v48 = vld [vmem:[%s0 + $0xd0] sm:$0xff]
    %v49 = vld [vmem:[%s0 + $0xd8] sm:$0xff]
    %v50 = vld [vmem:[%s0 + $0xe0] sm:$0xff]
    %v51 = vld [vmem:[%s0 + $0xe8] sm:$0xff]
    %v52 = vld [vmem:[%s0 + $0xf0] sm:$0xff]
    %v53 = vld [vmem:[%s0 + $0xf8] sm:$0xff]
    %v54 = vld [vmem:[%s0 + $0x100] sm:$0xff]
    %v55 = vld [vmem:[%s0 + $0x108] sm:$0xff]
    %v56 = vld [vmem:[%s0 + $0x110] sm:$0xff]
    %v57 = vld [vmem:[%s0 + $0x118] sm:$0xff]
    %v58 = vld [vmem:[%s0 + $0x120] sm:$0xff]
    %v59 = vld [vmem:[%s0 + $0x128] sm:$0xff]
    %v60 = vld [vmem:[%s0 + $0x130] sm:$0xff]
    %v61 = vld [vmem:[%s0 + $0x138] sm:$0xff]
    %v62 = vld [vmem:[%s0 + $0x140] sm:$0xff]
    %v63 = vld [vmem:[%s0 + $0x148] sm:$0xff]
    %v64 = vld [vmem:[%s0 + $0x150] sm:$0xff]
    %v65 = vld [vmem:[%s0 + $0x158] sm:$0xff]
    %v66 = vld [vmem:[%s0 + $0x160] sm:$0xff]
    %v67 = vld [vmem:[%s0 + $0x168] sm:$0xff]
    %v68 = vld [vmem:[%s0 + $0x170] sm:$0xff]
    %v69 = vld [vmem:[%s0 + $0x178] sm:$0xff]
    %v70 = vld [vmem:[%s0 + $0x180] sm:$0xff]
    %v71 = vld [vmem:[%s0 + $0x188] sm:$0xff]
    %v72 = vld [vmem:[%s0 + $0x190] sm:$0xff]
    %v73 = vld [vmem:[%s0 + $0x198] sm:$0xff]
    %v74 = vld [vmem:[%s0 + $0x1a0] sm:$0xff]
    %v75 = vld [vmem:[%s0 + $0x1a8] sm:$0xff]
    %v76 = vld [vmem:[%s0 + $0x1b0] sm:$0xff]
    %v77 = vld [vmem:[%s0 + $0x1b8] sm:$0xff]
    %v78 = vld [vmem:[%s0 + $0x1c0] sm:$0xff]
    %v79 = vld [vmem:[%s0 + $0x1c8] sm:$0xff]
    %v80 = vld [vmem:[%s0 + $0x1d0] sm:$0xff]
    %v81 = vld [vmem:[%s0 + $0x1d8] sm:$0xff]
    %v82 = vld [vmem:[%s0 + $0x1e0] sm:$0xff]
    %v83 = vld [vmem:[%s0 + $0x1e8] sm:$0xff]
    %v84 = vld [vmem:[%s0 + $0x1f0] sm:$0xff]
    %v85 = vld [vmem:[%s0 + $0x1f8] sm:$0xff]
    %v86 = vld [vmem:[%s0 + $0x200] sm:$0xff]
    %v87 = vld [vmem:[%s0 + $0x208] sm:$0xff]
    %v88 = vld [vmem:[%s0 + $0x210] sm:$0xff]
    %v89 = vld [vmem:[%s0 + $0x218] sm:$0xff]
    %v90 = vld [vmem:[%s0 + $0x220] sm:$0xff]
    %v91 = vld [vmem:[%s0 + $0x228] sm:$0xff]
    %v92 = vld [vmem:[%s0 + $0x230] sm:$0xff]
    %v93 = vld [vmem:[%s0 + $0x238] sm:$0xff]
    %v94 = vld [vmem:[%s0 + $0x240] sm:$0xff]
    %v95 = vld [vmem:[%s0 + $0x248] sm:$0xff]
    %v96 = vld [vmem:[%s0 + $0x250] sm:$0xff]
    %v97 = vld [vmem:[%s0 + $0x258] sm:$0xff]
    %v98 = vld [vmem:[%s0 + $0x260] sm:$0xff]
    %v99 = vld [vmem:[%s0 + $0x268] sm:$0xff]
    %v100 = vld [vmem:[%s0 + $0x270] sm:$0xff]
    %v101 = vld [vmem:[%s0 + $0x278] sm:$0xff]
    %v102 = vld [vmem:[%s0 + $0x280] sm:$0xff]
    %v103 = vld [vmem:[%s0 + $0x288] sm:$0xff]
    %v104 = vld [vmem:[%s0 + $0x290] sm:$0xff]
    %v105 = vld [vmem:[%s0 + $0x298] sm:$0xff]
    %v106 = vld [vmem:[%s0 + $0x2a0] sm:$0xff]
    %v107 = vld [vmem:[%s0 + $0x2a8] sm:$0xff]
    %v108 = vld [vmem:[%s0 + $0x2b0] sm:$0xff]
    %v109 = vld [vmem:[%s0 + $0x2b8] sm:$0xff]
    %v110 = vld [vmem:[%s0 + $0x2c0] sm:$0xff]
    %v111 = vld [vmem:[%s0 + $0x2c8] sm:$0xff]
    %v112 = vld [vmem:[%s0 + $0x2d0] sm:$0xff]
    %v113 = vld [vmem:[%s0 + $0x2d8] sm:$0xff]
    %v114 = vld [vmem:[%s0 + $0x2e0] sm:$0xff]
    %v115 = vld [vmem:[%s0 + $0x2e8] sm:$0xff]
    %v116 = vld [vmem:[%s0 + $0x2f0] sm:$0xff]
    %v117 = vld [vmem:[%s0 + $0x2f8] sm:$0xff]
    %v118 = vld [vmem:[%s0 + $0x300] sm:$0xff]
    %v119 = vld [vmem:[%s0 + $0x308] sm:$0xff]
    %v120 = vld [vmem:[%s0 + $0x310] sm:$0xff]
    %v121 = vld [vmem:[%s0 + $0x318] sm:$0xff]
    %v122 = vld [vmem:[%s0 + $0x320] sm:$0xff]
    %v123 = vld [vmem:[%s0 + $0x328] sm:$0xff]
    %v124 = vld [vmem:[%s0 + $0x330] sm:$0xff]
    %v125 = vld [vmem:[%s0 + $0x338] sm:$0xff]
    %v126 = vld [vmem:[%s0 + $0x340] sm:$0xff]
    %v127 = vld [vmem:[%s0 + $0x348] sm:$0xff]
    %v128 = vld [vmem:[%s0 + $0x350] sm:$0xff]
    %v129 = vld [vmem:[%s0 + $0x358] sm:$0xff]
    %v130 = vld [vmem:[%s0 + $0x360] sm:$0xff]
    %v131 = vld [vmem:[%s0 + $0x368] sm:$0xff]
    %v132 = vld [vmem:[%s0 + $0x370] sm:$0xff]
    %v133 = vld [vmem:[%s0 + $0x378] sm:$0xff]
    %v134 = vld [vmem:[%s0 + $0x380] sm:$0xff]
    %v135 = vld [vmem:[%s0 + $0x388] sm:$0xff]
    %v136 = vld [vmem:[%s0 + $0x390] sm:$0xff]
    %v137 = vld [vmem:[%s0 + $0x398] sm:$0xff]
    %v138 = vld [vmem:[%s0 + $0x3a0] sm:$0xff]
    %v139 = vld [vmem:[%s0 + $0x3a8] sm:$0xff]
    %v140 = vld [vmem:[%s0 + $0x3b0] sm:$0xff]
    %v141 = vld [vmem:[%s0 + $0x3b8] sm:$0xff]
    %v142 = vld [vmem:[%s0 + $0x3c0] sm:$0xff]
    %v143 = vld [vmem:[%s0 + $0x3c8] sm:$0xff]
    %v144 = vld [vmem:[%s0 + $0x3d0] sm:$0xff]
    %v145 = vld [vmem:[%s0 + $0x3d8] sm:$0xff]
    %v146 = vld [vmem:[%s0 + $0x3e0] sm:$0xff]
    %v147 = vld [vmem:[%s0 + $0x3e8] sm:$0xff]
    %v148 = vld [vmem:[%s0 + $0x3f0] sm:$0xff]
    %v149 = vld [vmem:[%s0 + $0x3f8] sm:$0xff]
    %v150 = vld [vmem:[%s0 + $0x400] sm:$0xff]
    %v151 = vld [vmem:[%s0 + $0x408] sm:$0xff]
    %v152 = vld [vmem:[%s0 + $0x410] sm:$0xff]
    %v153 = vld [vmem:[%s0 + $0x418] sm:$0xff]
    %v154 = vld [vmem:[%s0 + $0x420] sm:$0xff]
    %v155 = vld [vmem:[%s0 + $0x428] sm:$0xff]
    %v156 = vld [vmem:[%s0 + $0x430] sm:$0xff]
    %v157 = vld [vmem:[%s0 + $0x438] sm:$0xff]
    %v158 = vld [vmem:[%s0 + $0x440] sm:$0xff]
    %v159 = vld [vmem:[%s0 + $0x448] sm:$0xff]
    %v160 = vld [vmem:[%s0 + $0x450] sm:$0xff]
    %v161 = vld [vmem:[%s0 + $0x458] sm:$0xff]
    %v162 = vld [vmem:[%s0 + $0x460] sm:$0xff]
    %v163 = vld [vmem:[%s0 + $0x468] sm:$0xff]
    %v164 = vld [vmem:[%s0 + $0x470] sm:$0xff]
    %v165 = vld [vmem:[%s0 + $0x478] sm:$0xff]
    %v166 = vld [vmem:[%s0 + $0x480] sm:$0xff]
    %v167 = vld [vmem:[%s0 + $0x488] sm:$0xff]
    %v168 = vld [vmem:[%s0 + $0x490] sm:$0xff]
    %v169 = vld [vmem:[%s0 + $0x498] sm:$0xff]
    %v170 = vld [vmem:[%s0 + $0x4a0] sm:$0xff]
    %v171 = vld [vmem:[%s0 + $0x4a8] sm:$0xff]
    %v172 = vld [vmem:[%s0 + $0x4b0] sm:$0xff]
    %v173 = vld [vmem:[%s0 + $0x4b8] sm:$0xff]
    %v174 = vld [vmem:[%s0 + $0x4c0] sm:$0xff]
    %v175 = vld [vmem:[%s0 + $0x4c8] sm:$0xff]
    %v176 = vld [vmem:[%s0 + $0x4d0] sm:$0xff]
    %v177 = vld [vmem:[%s0 + $0x4d8] sm:$0xff]
    %v178 = vld [vmem:[%s0 + $0x4e0] sm:$0xff]
    %v179 = vld [vmem:[%s0 + $0x4e8] sm:$0xff]
    %v180 = vld [vmem:[%s0 + $0x4f0] sm:$0xff]
    %v181 = vld [vmem:[%s0 + $0x4f8] sm:$0xff]
    %v182 = vld [vmem:[%s0 + $0x500] sm:$0xff]
    %v183 = vld [vmem:[%s0 + $0x508] sm:$0xff]
    %v184 = vld [vmem:[%s0 + $0x510] sm:$0xff]
    %v185 = vld [vmem:[%s0 + $0x518] sm:$0xff]
    %v186 = vld [vmem:[%s0 + $0x520] sm:$0xff]
    %v187 = vld [vmem:[%s0 + $0x528] sm:$0xff]
    %v188 = vld [vmem:[%s0 + $0x530] sm:$0xff]
    %v189 = vld [vmem:[%s0 + $0x538] sm:$0xff]
    %v190 = vld [vmem:[%s0 + $0x540] sm:$0xff]
    %v191 = vld [vmem:[%s0 + $0x548] sm:$0xff]
    %v192 = vld [vmem:[%s0 + $0x550] sm:$0xff]
    %v193 = vld [vmem:[%s0 + $0x558] sm:$0xff]
    %v194 = vld [vmem:[%s0 + $0x560] sm:$0xff]
    %v195 = vld [vmem:[%s0 + $0x568] sm:$0xff]
    %v196 = vld [vmem:[%s0 + $0x570] sm:$0xff]
    %v197 = vld [vmem:[%s0 + $0x578] sm:$0xff]
    %v198 = vld [vmem:[%s0 + $0x580] sm:$0xff]
    %v199 = vld [vmem:[%s0 + $0x588] sm:$0xff]
    %v200 = vld [vmem:[%s0 + $0x590] sm:$0xff]
    %v201 = vld [vmem:[%s0 + $0x598] sm:$0xff]
    %v202 = vld [vmem:[%s0 + $0x5a0] sm:$0xff]
    %v203 = vld [vmem:[%s0 + $0x5a8] sm:$0xff]
    %v204 = vld [vmem:[%s0 + $0x5b0] sm:$0xff]
    %v205 = vld [vmem:[%s0 + $0x5b8] sm:$0xff]
    %v206 = vld [vmem:[%s0 + $0x5c0] sm:$0xff]
    %v207 = vld [vmem:[%s0 + $0x5c8] sm:$0xff]
    %v208 = vld [vmem:[%s0 + $0x5d0] sm:$0xff]
    %v209 = vld [vmem:[%s0 + $0x5d8] sm:$0xff]
    %v210 = vld [vmem:[%s0 + $0x5e0] sm:$0xff]
    %v211 = vld [vmem:[%s0 + $0x5e8] sm:$0xff]
    %v212 = vld [vmem:[%s0 + $0x5f0] sm:$0xff]
    %v213 = vld [vmem:[%s0 + $0x5f8] sm:$0xff]
    %v214 = vld [vmem:[%s0 + $0x600] sm:$0xff]
    %v215 = vld [vmem:[%s0 + $0x608] sm:$0xff]
    %v216 = vld [vmem:[%s0 + $0x610] sm:$0xff]
    %v217 = vld [vmem:[%s0 + $0x618] sm:$0xff]
    %v218 = vld [vmem:[%s0 + $0x620] sm:$0xff]
    %v219 = vld [vmem:[%s0 + $0x628] sm:$0xff]
    %v220 = vld [vmem:[%s0 + $0x630] sm:$0xff]
    %v221 = vld [vmem:[%s0 + $0x638] sm:$0xff]
    %v222 = vld [vmem:[%s0 + $0x640] sm:$0xff]
    %v223 = vld [vmem:[%s0 + $0x648] sm:$0xff]
    %v224 = vld [vmem:[%s0 + $0x650] sm:$0xff]
    %v225 = vld [vmem:[%s0 + $0x658] sm:$0xff]
    %v226 = vld [vmem:[%s0 + $0x660] sm:$0xff]
    %v227 = vld [vmem:[%s0 + $0x668] sm:$0xff]
    %v228 = vld [vmem:[%s0 + $0x670] sm:$0xff]
    %v229 = vld [vmem:[%s0 + $0x678] sm:$0xff]
    %v230 = vld [vmem:[%s0 + $0x680] sm:$0xff]
    %v231 = vld [vmem:[%s0 + $0x688] sm:$0xff]
    %v232 = vld [vmem:[%s0 + $0x690] sm:$0xff]
    %v233 = vld [vmem:[%s0 + $0x698] sm:$0xff]
    %v234 = vld [vmem:[%s0 + $0x6a0] sm:$0xff]
    %v235 = vld [vmem:[%s0 + $0x6a8] sm:$0xff]
    %v236 = vld [vmem:[%s0 + $0x6b0] sm:$0xff]
    %v237 = vld [vmem:[%s0 + $0x6b8] sm:$0xff]
    %v238 = vld [vmem:[%s0 + $0x6c0] sm:$0xff]
    %v239 = vld [vmem:[%s0 + $0x6c8] sm:$0xff]
    %v240 = vld [vmem:[%s0 + $0x6d0] sm:$0xff]
    %v241 = vld [vmem:[%s0 + $0x6d8] sm:$0xff]
    %v242 = vld [vmem:[%s0 + $0x6e0] sm:$0xff]
    %v243 = vld [vmem:[%s0 + $0x6e8] sm:$0xff]
    %v244 = vld [vmem:[%s0 + $0x6f0] sm:$0xff]
    %v245 = vld [vmem:[%s0 + $0x6f8] sm:$0xff]
    %v246 = vpack.c.bf16 %v29, %v22
    %v247 = vpack.c.bf16 %v30, %v23
    %v248 = vpack.c.bf16 %v31, %v24
    %v249 = vpack.c.bf16 %v32, %v25
    %v250 = vpack.c.bf16 %v33, %v26
    %v251 = vpack.c.bf16 %v34, %v27
    %v252 = vpack.c.bf16 %v35, %v28
    %v253 = vpack.c.bf16 %v43, %v36
    %v254 = vpack.c.bf16 %v44, %v37
    %v255 = vpack.c.bf16 %v45, %v38
    %v256 = vpack.c.bf16 %v46, %v39
    %v257 = vpack.c.bf16 %v47, %v40
    %v258 = vpack.c.bf16 %v48, %v41
    %v259 = vpack.c.bf16 %v49, %v42
    %v260 = vpack.c.bf16 %v57, %v50
    %v261 = vpack.c.bf16 %v58, %v51
    %v262 = vpack.c.bf16 %v59, %v52
    %v263 = vpack.c.bf16 %v60, %v53
    %v264 = vpack.c.bf16 %v61, %v54
    %v265 = vpack.c.bf16 %v62, %v55
    %v266 = vpack.c.bf16 %v63, %v56
    %v267 = vpack.c.bf16 %v71, %v64
    %v268 = vpack.c.bf16 %v72, %v65
    %v269 = vpack.c.bf16 %v73, %v66
    %v270 = vpack.c.bf16 %v74, %v67
    %v271 = vpack.c.bf16 %v75, %v68
    %v272 = vpack.c.bf16 %v76, %v69
    %v273 = vpack.c.bf16 %v77, %v70
    %v274 = vpack.c.bf16 %v85, %v78
    %v275 = vpack.c.bf16 %v86, %v79
    %v276 = vpack.c.bf16 %v87, %v80
    %v277 = vpack.c.bf16 %v88, %v81
    %v278 = vpack.c.bf16 %v89, %v82
    %v279 = vpack.c.bf16 %v90, %v83
    %v280 = vpack.c.bf16 %v91, %v84
    %v281 = vpack.c.bf16 %v99, %v92
    %v282 = vpack.c.bf16 %v100, %v93
    %v283 = vpack.c.bf16 %v101, %v94
    %v284 = vpack.c.bf16 %v102, %v95
    %v285 = vpack.c.bf16 %v103, %v96
    %v286 = vpack.c.bf16 %v104, %v97
    %v287 = vpack.c.bf16 %v105, %v98
    %v288 = vpack.c.bf16 %v113, %v106
    %v289 = vpack.c.bf16 %v114, %v107
    %v290 = vpack.c.bf16 %v115, %v108
    %v291 = vpack.c.bf16 %v116, %v109
    %v292 = vpack.c.bf16 %v117, %v110
    %v293 = vpack.c.bf16 %v118, %v111
    %v294 = vpack.c.bf16 %v119, %v112
    %v295 = vpack.c.bf16 %v127, %v120
    %v296 = vpack.c.bf16 %v128, %v121
    %v297 = vpack.c.bf16 %v129, %v122
    %v298 = vpack.c.bf16 %v130, %v123
    %v299 = vpack.c.bf16 %v131, %v124
    %v300 = vpack.c.bf16 %v132, %v125
    %v301 = vpack.c.bf16 %v133, %v126
    %v302 = vpack.c.bf16 %v141, %v134
    %v303 = vpack.c.bf16 %v142, %v135
    %v304 = vpack.c.bf16 %v143, %v136
    %v305 = vpack.c.bf16 %v144, %v137
    %v306 = vpack.c.bf16 %v145, %v138
    %v307 = vpack.c.bf16 %v146, %v139
    %v308 = vpack.c.bf16 %v147, %v140
    %v309 = vpack.c.bf16 %v155, %v148
    %v310 = vpack.c.bf16 %v156, %v149
    %v311 = vpack.c.bf16 %v157, %v150
    %v312 = vpack.c.bf16 %v158, %v151
    %v313 = vpack.c.bf16 %v159, %v152
    %v314 = vpack.c.bf16 %v160, %v153
    %v315 = vpack.c.bf16 %v161, %v154
    %v316 = vpack.c.bf16 %v169, %v162
    %v317 = vpack.c.bf16 %v170, %v163
    %v318 = vpack.c.bf16 %v171, %v164
    %v319 = vpack.c.bf16 %v172, %v165
    %v320 = vpack.c.bf16 %v173, %v166
    %v321 = vpack.c.bf16 %v174, %v167
    %v322 = vpack.c.bf16 %v175, %v168
    %v323 = vpack.c.bf16 %v183, %v176
    %v324 = vpack.c.bf16 %v184, %v177
    %v325 = vpack.c.bf16 %v185, %v178
    %v326 = vpack.c.bf16 %v186, %v179
    %v327 = vpack.c.bf16 %v187, %v180
    %v328 = vpack.c.bf16 %v188, %v181
    %v329 = vpack.c.bf16 %v189, %v182
    %v330 = vpack.c.bf16 %v197, %v190
    %v331 = vpack.c.bf16 %v198, %v191
    %v332 = vpack.c.bf16 %v199, %v192
    %v333 = vpack.c.bf16 %v200, %v193
    %v334 = vpack.c.bf16 %v201, %v194
    %v335 = vpack.c.bf16 %v202, %v195
    %v336 = vpack.c.bf16 %v203, %v196
    %v337 = vpack.c.bf16 %v211, %v204
    %v338 = vpack.c.bf16 %v212, %v205
    %v339 = vpack.c.bf16 %v213, %v206
    %v340 = vpack.c.bf16 %v214, %v207
    %v341 = vpack.c.bf16 %v215, %v208
    %v342 = vpack.c.bf16 %v216, %v209
    %v343 = vpack.c.bf16 %v217, %v210
    %v344 = vpack.c.bf16 %v225, %v218
    %v345 = vpack.c.bf16 %v226, %v219
    %v346 = vpack.c.bf16 %v227, %v220
    %v347 = vpack.c.bf16 %v228, %v221
    %v348 = vpack.c.bf16 %v229, %v222
    %v349 = vpack.c.bf16 %v230, %v223
    %v350 = vpack.c.bf16 %v231, %v224
    %v351 = vpack.c.bf16 %v239, %v232
    %v352 = vpack.c.bf16 %v240, %v233
    %v353 = vpack.c.bf16 %v241, %v234
    %v354 = vpack.c.bf16 %v242, %v235
    %v355 = vpack.c.bf16 %v243, %v236
    %v356 = vpack.c.bf16 %v244, %v237
    %v357 = vpack.c.bf16 %v245, %v238
    %v358 = vld [vmem:[%s1] sm:$0xff]
    %v359 = vld [vmem:[%s1 + $0x8] sm:$0xff]
    %v360 = vld [vmem:[%s1 + $0x10] sm:$0xff]
    %v361 = vld [vmem:[%s1 + $0x18] sm:$0xff]
    %v362 = vld [vmem:[%s1 + $0x20] sm:$0xff]
    %v363 = vld [vmem:[%s1 + $0x28] sm:$0xff]
    %v364 = vld [vmem:[%s1 + $0x30] sm:$0xff]
    %v365 = vld [vmem:[%s1 + $0x38] sm:$0xff]
    %v366 = vld [vmem:[%s1 + $0x40] sm:$0xff]
    %v367 = vld [vmem:[%s1 + $0x48] sm:$0xff]
    %v368 = vld [vmem:[%s1 + $0x50] sm:$0xff]
    %v369 = vld [vmem:[%s1 + $0x58] sm:$0xff]
    %v370 = vld [vmem:[%s1 + $0x60] sm:$0xff]
    %v371 = vld [vmem:[%s1 + $0x68] sm:$0xff]
    %v372 = vld [vmem:[%s1 + $0x70] sm:$0xff]
    %v373 = vld [vmem:[%s1 + $0x78] sm:$0xff]
    %v374 = vld [vmem:[%s1 + $0x80] sm:$0xff]
    %v375 = vld [vmem:[%s1 + $0x88] sm:$0xff]
    %v376 = vld [vmem:[%s1 + $0x90] sm:$0xff]
    %v377 = vld [vmem:[%s1 + $0x98] sm:$0xff]
    %v378 = vld [vmem:[%s1 + $0xa0] sm:$0xff]
    %v379 = vld [vmem:[%s1 + $0xa8] sm:$0xff]
    %v380 = vld [vmem:[%s1 + $0xb0] sm:$0xff]
    %v381 = vld [vmem:[%s1 + $0xb8] sm:$0xff]
    %v382 = vld [vmem:[%s1 + $0xc0] sm:$0xff]
    %v383 = vld [vmem:[%s1 + $0xc8] sm:$0xff]
    %v384 = vld [vmem:[%s1 + $0xd0] sm:$0xff]
    %v385 = vld [vmem:[%s1 + $0xd8] sm:$0xff]
    %v386 = vld [vmem:[%s1 + $0xe0] sm:$0xff]
    %v387 = vld [vmem:[%s1 + $0xe8] sm:$0xff]
    %v388 = vld [vmem:[%s1 + $0xf0] sm:$0xff]
    %v389 = vld [vmem:[%s1 + $0xf8] sm:$0xff]
    %v390 = vld [vmem:[%s1 + $0x100] sm:$0xff]
    %v391 = vld [vmem:[%s1 + $0x108] sm:$0xff]
    %v392 = vld [vmem:[%s1 + $0x110] sm:$0xff]
    %v393 = vld [vmem:[%s1 + $0x118] sm:$0xff]
    %v394 = vld [vmem:[%s1 + $0x120] sm:$0xff]
    %v395 = vld [vmem:[%s1 + $0x128] sm:$0xff]
    %v396 = vld [vmem:[%s1 + $0x130] sm:$0xff]
    %v397 = vld [vmem:[%s1 + $0x138] sm:$0xff]
    %v398 = vld [vmem:[%s1 + $0x140] sm:$0xff]
    %v399 = vld [vmem:[%s1 + $0x148] sm:$0xff]
    %v400 = vld [vmem:[%s1 + $0x150] sm:$0xff]
    %v401 = vld [vmem:[%s1 + $0x158] sm:$0xff]
    %v402 = vld [vmem:[%s1 + $0x160] sm:$0xff]
    %v403 = vld [vmem:[%s1 + $0x168] sm:$0xff]
    %v404 = vld [vmem:[%s1 + $0x170] sm:$0xff]
    %v405 = vld [vmem:[%s1 + $0x178] sm:$0xff]
    %v406 = vld [vmem:[%s1 + $0x180] sm:$0xff]
    %v407 = vld [vmem:[%s1 + $0x188] sm:$0xff]
    %v408 = vld [vmem:[%s1 + $0x190] sm:$0xff]
    %v409 = vld [vmem:[%s1 + $0x198] sm:$0xff]
    %v410 = vld [vmem:[%s1 + $0x1a0] sm:$0xff]
    %v411 = vld [vmem:[%s1 + $0x1a8] sm:$0xff]
    %v412 = vld [vmem:[%s1 + $0x1b0] sm:$0xff]
    %v413 = vld [vmem:[%s1 + $0x1b8] sm:$0xff]
    %v414 = vld [vmem:[%s1 + $0x1c0] sm:$0xff]
    %v415 = vld [vmem:[%s1 + $0x1c8] sm:$0xff]
    %v416 = vld [vmem:[%s1 + $0x1d0] sm:$0xff]
    %v417 = vld [vmem:[%s1 + $0x1d8] sm:$0xff]
    %v418 = vld [vmem:[%s1 + $0x1e0] sm:$0xff]
    %v419 = vld [vmem:[%s1 + $0x1e8] sm:$0xff]
    %v420 = vld [vmem:[%s1 + $0x1f0] sm:$0xff]
    %v421 = vld [vmem:[%s1 + $0x1f8] sm:$0xff]
    %v422 = vld [vmem:[%s1 + $0x200] sm:$0xff]
    %v423 = vld [vmem:[%s1 + $0x208] sm:$0xff]
    %v424 = vld [vmem:[%s1 + $0x210] sm:$0xff]
    %v425 = vld [vmem:[%s1 + $0x218] sm:$0xff]
    %v426 = vld [vmem:[%s1 + $0x220] sm:$0xff]
    %v427 = vld [vmem:[%s1 + $0x228] sm:$0xff]
    %v428 = vld [vmem:[%s1 + $0x230] sm:$0xff]
    %v429 = vld [vmem:[%s1 + $0x238] sm:$0xff]
    %v430 = vld [vmem:[%s1 + $0x240] sm:$0xff]
    %v431 = vld [vmem:[%s1 + $0x248] sm:$0xff]
    %v432 = vld [vmem:[%s1 + $0x250] sm:$0xff]
    %v433 = vld [vmem:[%s1 + $0x258] sm:$0xff]
    %v434 = vld [vmem:[%s1 + $0x260] sm:$0xff]
    %v435 = vld [vmem:[%s1 + $0x268] sm:$0xff]
    %v436 = vld [vmem:[%s1 + $0x270] sm:$0xff]
    %v437 = vld [vmem:[%s1 + $0x278] sm:$0xff]
    %v438 = vld [vmem:[%s1 + $0x280] sm:$0xff]
    %v439 = vld [vmem:[%s1 + $0x288] sm:$0xff]
    %v440 = vld [vmem:[%s1 + $0x290] sm:$0xff]
    %v441 = vld [vmem:[%s1 + $0x298] sm:$0xff]
    %v442 = vld [vmem:[%s1 + $0x2a0] sm:$0xff]
    %v443 = vld [vmem:[%s1 + $0x2a8] sm:$0xff]
    %v444 = vld [vmem:[%s1 + $0x2b0] sm:$0xff]
    %v445 = vld [vmem:[%s1 + $0x2b8] sm:$0xff]
    %v446 = vld [vmem:[%s1 + $0x2c0] sm:$0xff]
    %v447 = vld [vmem:[%s1 + $0x2c8] sm:$0xff]
    %v448 = vld [vmem:[%s1 + $0x2d0] sm:$0xff]
    %v449 = vld [vmem:[%s1 + $0x2d8] sm:$0xff]
    %v450 = vld [vmem:[%s1 + $0x2e0] sm:$0xff]
    %v451 = vld [vmem:[%s1 + $0x2e8] sm:$0xff]
    %v452 = vld [vmem:[%s1 + $0x2f0] sm:$0xff]
    %v453 = vld [vmem:[%s1 + $0x2f8] sm:$0xff]
    %v454 = vld [vmem:[%s1 + $0x300] sm:$0xff]
    %v455 = vld [vmem:[%s1 + $0x308] sm:$0xff]
    %v456 = vld [vmem:[%s1 + $0x310] sm:$0xff]
    %v457 = vld [vmem:[%s1 + $0x318] sm:$0xff]
    %v458 = vld [vmem:[%s1 + $0x320] sm:$0xff]
    %v459 = vld [vmem:[%s1 + $0x328] sm:$0xff]
    %v460 = vld [vmem:[%s1 + $0x330] sm:$0xff]
    %v461 = vld [vmem:[%s1 + $0x338] sm:$0xff]
    %v462 = vld [vmem:[%s1 + $0x340] sm:$0xff]
    %v463 = vld [vmem:[%s1 + $0x348] sm:$0xff]
    %v464 = vld [vmem:[%s1 + $0x350] sm:$0xff]
    %v465 = vld [vmem:[%s1 + $0x358] sm:$0xff]
    %v466 = vld [vmem:[%s1 + $0x360] sm:$0xff]
    %v467 = vld [vmem:[%s1 + $0x368] sm:$0xff]
    %v468 = vld [vmem:[%s1 + $0x370] sm:$0xff]
    %v469 = vld [vmem:[%s1 + $0x378] sm:$0xff]
    %v470 = vld [vmem:[%s1 + $0x380] sm:$0xff]
    %v471 = vld [vmem:[%s1 + $0x388] sm:$0xff]
    %v472 = vld [vmem:[%s1 + $0x390] sm:$0xff]
    %v473 = vld [vmem:[%s1 + $0x398] sm:$0xff]
    %v474 = vld [vmem:[%s1 + $0x3a0] sm:$0xff]
    %v475 = vld [vmem:[%s1 + $0x3a8] sm:$0xff]
    %v476 = vld [vmem:[%s1 + $0x3b0] sm:$0xff]
    %v477 = vld [vmem:[%s1 + $0x3b8] sm:$0xff]
    %v478 = vld [vmem:[%s1 + $0x3c0] sm:$0xff]
    %v479 = vld [vmem:[%s1 + $0x3c8] sm:$0xff]
    %v480 = vld [vmem:[%s1 + $0x3d0] sm:$0xff]
    %v481 = vld [vmem:[%s1 + $0x3d8] sm:$0xff]
    %v482 = vld [vmem:[%s1 + $0x3e0] sm:$0xff]
    %v483 = vld [vmem:[%s1 + $0x3e8] sm:$0xff]
    %v484 = vld [vmem:[%s1 + $0x3f0] sm:$0xff]
    %v485 = vld [vmem:[%s1 + $0x3f8] sm:$0xff]
    %v486 = vld [vmem:[%s1 + $0x400] sm:$0xff]
    %v487 = vld [vmem:[%s1 + $0x408] sm:$0xff]
    %v488 = vld [vmem:[%s1 + $0x410] sm:$0xff]
    %v489 = vld [vmem:[%s1 + $0x418] sm:$0xff]
    %v490 = vld [vmem:[%s1 + $0x420] sm:$0xff]
    %v491 = vld [vmem:[%s1 + $0x428] sm:$0xff]
    %v492 = vld [vmem:[%s1 + $0x430] sm:$0xff]
    %v493 = vld [vmem:[%s1 + $0x438] sm:$0xff]
    %v494 = vld [vmem:[%s1 + $0x440] sm:$0xff]
    %v495 = vld [vmem:[%s1 + $0x448] sm:$0xff]
    %v496 = vld [vmem:[%s1 + $0x450] sm:$0xff]
    %v497 = vld [vmem:[%s1 + $0x458] sm:$0xff]
    %v498 = vld [vmem:[%s1 + $0x460] sm:$0xff]
    %v499 = vld [vmem:[%s1 + $0x468] sm:$0xff]
    %v500 = vld [vmem:[%s1 + $0x470] sm:$0xff]
    %v501 = vld [vmem:[%s1 + $0x478] sm:$0xff]
    %v502 = vld [vmem:[%s1 + $0x480] sm:$0xff]
    %v503 = vld [vmem:[%s1 + $0x488] sm:$0xff]
    %v504 = vld [vmem:[%s1 + $0x490] sm:$0xff]
    %v505 = vld [vmem:[%s1 + $0x498] sm:$0xff]
    %v506 = vld [vmem:[%s1 + $0x4a0] sm:$0xff]
    %v507 = vld [vmem:[%s1 + $0x4a8] sm:$0xff]
    %v508 = vld [vmem:[%s1 + $0x4b0] sm:$0xff]
    %v509 = vld [vmem:[%s1 + $0x4b8] sm:$0xff]
    %v510 = vld [vmem:[%s1 + $0x4c0] sm:$0xff]
    %v511 = vld [vmem:[%s1 + $0x4c8] sm:$0xff]
    %v512 = vld [vmem:[%s1 + $0x4d0] sm:$0xff]
    %v513 = vld [vmem:[%s1 + $0x4d8] sm:$0xff]
    %v514 = vld [vmem:[%s1 + $0x4e0] sm:$0xff]
    %v515 = vld [vmem:[%s1 + $0x4e8] sm:$0xff]
    %v516 = vld [vmem:[%s1 + $0x4f0] sm:$0xff]
    %v517 = vld [vmem:[%s1 + $0x4f8] sm:$0xff]
    %v518 = vld [vmem:[%s1 + $0x500] sm:$0xff]
    %v519 = vld [vmem:[%s1 + $0x508] sm:$0xff]
    %v520 = vld [vmem:[%s1 + $0x510] sm:$0xff]
    %v521 = vld [vmem:[%s1 + $0x518] sm:$0xff]
    %v522 = vld [vmem:[%s1 + $0x520] sm:$0xff]
    %v523 = vld [vmem:[%s1 + $0x528] sm:$0xff]
    %v524 = vld [vmem:[%s1 + $0x530] sm:$0xff]
    %v525 = vld [vmem:[%s1 + $0x538] sm:$0xff]
    %v526 = vld [vmem:[%s1 + $0x540] sm:$0xff]
    %v527 = vld [vmem:[%s1 + $0x548] sm:$0xff]
    %v528 = vld [vmem:[%s1 + $0x550] sm:$0xff]
    %v529 = vld [vmem:[%s1 + $0x558] sm:$0xff]
    %v530 = vld [vmem:[%s1 + $0x560] sm:$0xff]
    %v531 = vld [vmem:[%s1 + $0x568] sm:$0xff]
    %v532 = vld [vmem:[%s1 + $0x570] sm:$0xff]
    %v533 = vld [vmem:[%s1 + $0x578] sm:$0xff]
    %v534 = vld [vmem:[%s1 + $0x580] sm:$0xff]
    %v535 = vld [vmem:[%s1 + $0x588] sm:$0xff]
    %v536 = vld [vmem:[%s1 + $0x590] sm:$0xff]
    %v537 = vld [vmem:[%s1 + $0x598] sm:$0xff]
    %v538 = vld [vmem:[%s1 + $0x5a0] sm:$0xff]
    %v539 = vld [vmem:[%s1 + $0x5a8] sm:$0xff]
    %v540 = vld [vmem:[%s1 + $0x5b0] sm:$0xff]
    %v541 = vld [vmem:[%s1 + $0x5b8] sm:$0xff]
    %v542 = vld [vmem:[%s1 + $0x5c0] sm:$0xff]
    %v543 = vld [vmem:[%s1 + $0x5c8] sm:$0xff]
    %v544 = vld [vmem:[%s1 + $0x5d0] sm:$0xff]
    %v545 = vld [vmem:[%s1 + $0x5d8] sm:$0xff]
    %v546 = vld [vmem:[%s1 + $0x5e0] sm:$0xff]
    %v547 = vld [vmem:[%s1 + $0x5e8] sm:$0xff]
    %v548 = vld [vmem:[%s1 + $0x5f0] sm:$0xff]
    %v549 = vld [vmem:[%s1 + $0x5f8] sm:$0xff]
    %v550 = vld [vmem:[%s1 + $0x600] sm:$0xff]
    %v551 = vld [vmem:[%s1 + $0x608] sm:$0xff]
    %v552 = vld [vmem:[%s1 + $0x610] sm:$0xff]
    %v553 = vld [vmem:[%s1 + $0x618] sm:$0xff]
    %v554 = vld [vmem:[%s2] sm:$0xf]
    %v556 = vlaneseq
    %v557 = vshrl.u32 %v556, 7
    %v558 = vsub.s32 0, %v557
    %v559 = vrot.slane %v554, %v558
    %v560 = vlaneseq
    %v561 = vshrl.u32 %v560, 7
    %v562 = vsub.s32 1, %v561
    %v563 = vrot.slane %v554, %v562
    %v564 = vlaneseq
    %v565 = vshrl.u32 %v564, 7
    %v566 = vsub.s32 2, %v565
    %v567 = vrot.slane %v554, %v566
    %v568 = vlaneseq
    %v569 = vshrl.u32 %v568, 7
    %v570 = vsub.s32 3, %v569
    %v571 = vrot.slane %v554, %v570
    %v772 = vunpack.c.l.b16 %v358
    %v773 = vunpack.c.h.b16 %v358
    %v774 = vunpack.c.l.b16 %v359
    %v775 = vunpack.c.h.b16 %v359
    %v776 = vunpack.c.l.b16 %v360
    %v777 = vunpack.c.h.b16 %v360
    %v778 = vunpack.c.l.b16 %v361
    %v779 = vunpack.c.h.b16 %v361
    %v780 = vunpack.c.l.b16 %v362
    %v781 = vunpack.c.h.b16 %v362
    %v782 = vunpack.c.l.b16 %v363
    %v783 = vunpack.c.h.b16 %v363
    %v784 = vunpack.c.l.b16 %v364
    %v785 = vunpack.c.h.b16 %v364
    %v786 = vunpack.c.l.b16 %v365
    %v787 = vunpack.c.h.b16 %v365
    %v788 = vunpack.c.l.b16 %v366
    %v789 = vunpack.c.h.b16 %v366
    %v790 = vunpack.c.l.b16 %v367
    %v791 = vunpack.c.h.b16 %v367
    %v792 = vunpack.c.l.b16 %v368
    %v793 = vunpack.c.h.b16 %v368
    %v794 = vunpack.c.l.b16 %v369
    %v795 = vunpack.c.h.b16 %v369
    %v796 = vunpack.c.l.b16 %v370
    %v797 = vunpack.c.h.b16 %v370
    %v798 = vunpack.c.l.b16 %v371
    %v799 = vunpack.c.h.b16 %v371
    %v800 = vunpack.c.l.b16 %v372
    %v801 = vunpack.c.h.b16 %v372
    %v802 = vunpack.c.l.b16 %v373
    %v803 = vunpack.c.h.b16 %v373
    %v804 = vunpack.c.l.b16 %v374
    %v805 = vunpack.c.h.b16 %v374
    %v806 = vunpack.c.l.b16 %v375
    %v807 = vunpack.c.h.b16 %v375
    %v808 = vunpack.c.l.b16 %v376
    %v809 = vunpack.c.h.b16 %v376
    %v810 = vunpack.c.l.b16 %v377
    %v811 = vunpack.c.h.b16 %v377
    %v812 = vunpack.c.l.b16 %v378
    %v813 = vunpack.c.h.b16 %v378
    %v814 = vunpack.c.l.b16 %v379
    %v815 = vunpack.c.h.b16 %v379
    %v816 = vunpack.c.l.b16 %v380
    %v817 = vunpack.c.h.b16 %v380
    %v818 = vunpack.c.l.b16 %v381
    %v819 = vunpack.c.h.b16 %v381
    %v820 = vunpack.c.l.b16 %v382
    %v821 = vunpack.c.h.b16 %v382
    %v822 = vunpack.c.l.b16 %v383
    %v823 = vunpack.c.h.b16 %v383
    %v824 = vunpack.c.l.b16 %v384
    %v825 = vunpack.c.h.b16 %v384
    %v826 = vunpack.c.l.b16 %v385
    %v827 = vunpack.c.h.b16 %v385
    %v828 = vunpack.c.l.b16 %v386
    %v829 = vunpack.c.h.b16 %v386
    %v830 = vunpack.c.l.b16 %v387
    %v831 = vunpack.c.h.b16 %v387
    %v832 = vunpack.c.l.b16 %v388
    %v833 = vunpack.c.h.b16 %v388
    %v834 = vunpack.c.l.b16 %v389
    %v835 = vunpack.c.h.b16 %v389
    %v836 = vunpack.c.l.b16 %v390
    %v837 = vunpack.c.h.b16 %v390
    %v838 = vunpack.c.l.b16 %v391
    %v839 = vunpack.c.h.b16 %v391
    %v840 = vunpack.c.l.b16 %v392
    %v841 = vunpack.c.h.b16 %v392
    %v842 = vunpack.c.l.b16 %v393
    %v843 = vunpack.c.h.b16 %v393
    %v844 = vunpack.c.l.b16 %v394
    %v845 = vunpack.c.h.b16 %v394
    %v846 = vunpack.c.l.b16 %v395
    %v847 = vunpack.c.h.b16 %v395
    %v848 = vunpack.c.l.b16 %v396
    %v849 = vunpack.c.h.b16 %v396
    %v850 = vunpack.c.l.b16 %v397
    %v851 = vunpack.c.h.b16 %v397
    %v852 = vunpack.c.l.b16 %v398
    %v853 = vunpack.c.h.b16 %v398
    %v854 = vunpack.c.l.b16 %v399
    %v855 = vunpack.c.h.b16 %v399
    %v856 = vunpack.c.l.b16 %v400
    %v857 = vunpack.c.h.b16 %v400
    %v858 = vunpack.c.l.b16 %v401
    %v859 = vunpack.c.h.b16 %v401
    %v860 = vunpack.c.l.b16 %v402
    %v861 = vunpack.c.h.b16 %v402
    %v862 = vunpack.c.l.b16 %v403
    %v863 = vunpack.c.h.b16 %v403
    %v864 = vunpack.c.l.b16 %v404
    %v865 = vunpack.c.h.b16 %v404
    %v866 = vunpack.c.l.b16 %v405
    %v867 = vunpack.c.h.b16 %v405
    %v868 = vunpack.c.l.b16 %v406
    %v869 = vunpack.c.h.b16 %v406
    %v870 = vunpack.c.l.b16 %v407
    %v871 = vunpack.c.h.b16 %v407
    %v872 = vunpack.c.l.b16 %v408
    %v873 = vunpack.c.h.b16 %v408
    %v874 = vunpack.c.l.b16 %v409
    %v875 = vunpack.c.h.b16 %v409
    %v876 = vunpack.c.l.b16 %v410
    %v877 = vunpack.c.h.b16 %v410
    %v878 = vunpack.c.l.b16 %v411
    %v879 = vunpack.c.h.b16 %v411
    %v880 = vunpack.c.l.b16 %v412
    %v881 = vunpack.c.h.b16 %v412
    %v882 = vunpack.c.l.b16 %v413
    %v883 = vunpack.c.h.b16 %v413
    %v884 = vunpack.c.l.b16 %v414
    %v885 = vunpack.c.h.b16 %v414
    %v886 = vunpack.c.l.b16 %v415
    %v887 = vunpack.c.h.b16 %v415
    %v888 = vunpack.c.l.b16 %v416
    %v889 = vunpack.c.h.b16 %v416
    %v890 = vunpack.c.l.b16 %v417
    %v891 = vunpack.c.h.b16 %v417
    %v892 = vunpack.c.l.b16 %v418
    %v893 = vunpack.c.h.b16 %v418
    %v894 = vunpack.c.l.b16 %v419
    %v895 = vunpack.c.h.b16 %v419
    %v896 = vunpack.c.l.b16 %v420
    %v897 = vunpack.c.h.b16 %v420
    %v898 = vunpack.c.l.b16 %v421
    %v899 = vunpack.c.h.b16 %v421
    %v900 = vunpack.c.l.b16 %v422
    %v901 = vunpack.c.h.b16 %v422
    %v902 = vunpack.c.l.b16 %v423
    %v903 = vunpack.c.h.b16 %v423
    %v904 = vunpack.c.l.b16 %v424
    %v905 = vunpack.c.h.b16 %v424
    %v906 = vunpack.c.l.b16 %v425
    %v907 = vunpack.c.h.b16 %v425
    %v908 = vunpack.c.l.b16 %v426
    %v909 = vunpack.c.h.b16 %v426
    %v910 = vunpack.c.l.b16 %v427
    %v911 = vunpack.c.h.b16 %v427
    %v912 = vunpack.c.l.b16 %v428
    %v913 = vunpack.c.h.b16 %v428
    %v914 = vunpack.c.l.b16 %v429
    %v915 = vunpack.c.h.b16 %v429
    %v916 = vunpack.c.l.b16 %v430
    %v917 = vunpack.c.h.b16 %v430
    %v918 = vunpack.c.l.b16 %v431
    %v919 = vunpack.c.h.b16 %v431
    %v920 = vunpack.c.l.b16 %v432
    %v921 = vunpack.c.h.b16 %v432
    %v922 = vunpack.c.l.b16 %v433
    %v923 = vunpack.c.h.b16 %v433
    %v924 = vunpack.c.l.b16 %v434
    %v925 = vunpack.c.h.b16 %v434
    %v926 = vunpack.c.l.b16 %v435
    %v927 = vunpack.c.h.b16 %v435
    %v928 = vunpack.c.l.b16 %v436
    %v929 = vunpack.c.h.b16 %v436
    %v930 = vunpack.c.l.b16 %v437
    %v931 = vunpack.c.h.b16 %v437
    %v932 = vunpack.c.l.b16 %v438
    %v933 = vunpack.c.h.b16 %v438
    %v934 = vunpack.c.l.b16 %v439
    %v935 = vunpack.c.h.b16 %v439
    %v936 = vunpack.c.l.b16 %v440
    %v937 = vunpack.c.h.b16 %v440
    %v938 = vunpack.c.l.b16 %v441
    %v939 = vunpack.c.h.b16 %v441
    %v940 = vunpack.c.l.b16 %v442
    %v941 = vunpack.c.h.b16 %v442
    %v942 = vunpack.c.l.b16 %v443
    %v943 = vunpack.c.h.b16 %v443
    %v944 = vunpack.c.l.b16 %v444
    %v945 = vunpack.c.h.b16 %v444
    %v946 = vunpack.c.l.b16 %v445
    %v947 = vunpack.c.h.b16 %v445
    %v948 = vunpack.c.l.b16 %v446
    %v949 = vunpack.c.h.b16 %v446
    %v950 = vunpack.c.l.b16 %v447
    %v951 = vunpack.c.h.b16 %v447
    %v952 = vunpack.c.l.b16 %v448
    %v953 = vunpack.c.h.b16 %v448
    %v954 = vunpack.c.l.b16 %v449
    %v955 = vunpack.c.h.b16 %v449
    %v956 = vunpack.c.l.b16 %v450
    %v957 = vunpack.c.h.b16 %v450
    %v958 = vunpack.c.l.b16 %v451
    %v959 = vunpack.c.h.b16 %v451
    %v960 = vunpack.c.l.b16 %v452
    %v961 = vunpack.c.h.b16 %v452
    %v962 = vunpack.c.l.b16 %v453
    %v963 = vunpack.c.h.b16 %v453
    %v964 = vunpack.c.l.b16 %v454
    %v965 = vunpack.c.h.b16 %v454
    %v966 = vunpack.c.l.b16 %v455
    %v967 = vunpack.c.h.b16 %v455
    %v968 = vunpack.c.l.b16 %v456
    %v969 = vunpack.c.h.b16 %v456
    %v970 = vunpack.c.l.b16 %v457
    %v971 = vunpack.c.h.b16 %v457
    %v972 = vunpack.c.l.b16 %v458
    %v973 = vunpack.c.h.b16 %v458
    %v974 = vunpack.c.l.b16 %v459
    %v975 = vunpack.c.h.b16 %v459
    %v976 = vunpack.c.l.b16 %v460
    %v977 = vunpack.c.h.b16 %v460
    %v978 = vunpack.c.l.b16 %v461
    %v979 = vunpack.c.h.b16 %v461
    %v980 = vunpack.c.l.b16 %v462
    %v981 = vunpack.c.h.b16 %v462
    %v982 = vunpack.c.l.b16 %v463
    %v983 = vunpack.c.h.b16 %v463
    %v984 = vunpack.c.l.b16 %v464
    %v985 = vunpack.c.h.b16 %v464
    %v986 = vunpack.c.l.b16 %v465
    %v987 = vunpack.c.h.b16 %v465
    %v988 = vunpack.c.l.b16 %v466
    %v989 = vunpack.c.h.b16 %v466
    %v990 = vunpack.c.l.b16 %v467
    %v991 = vunpack.c.h.b16 %v467
    %v992 = vunpack.c.l.b16 %v468
    %v993 = vunpack.c.h.b16 %v468
    %v994 = vunpack.c.l.b16 %v469
    %v995 = vunpack.c.h.b16 %v469
    %v996 = vunpack.c.l.b16 %v470
    %v997 = vunpack.c.h.b16 %v470
    %v998 = vunpack.c.l.b16 %v471
    %v999 = vunpack.c.h.b16 %v471
    %v1000 = vunpack.c.l.b16 %v472
    %v1001 = vunpack.c.h.b16 %v472
    %v1002 = vunpack.c.l.b16 %v473
    %v1003 = vunpack.c.h.b16 %v473
    %v1004 = vunpack.c.l.b16 %v474
    %v1005 = vunpack.c.h.b16 %v474
    %v1006 = vunpack.c.l.b16 %v475
    %v1007 = vunpack.c.h.b16 %v475
    %v1008 = vunpack.c.l.b16 %v476
    %v1009 = vunpack.c.h.b16 %v476
    %v1010 = vunpack.c.l.b16 %v477
    %v1011 = vunpack.c.h.b16 %v477
    %v1012 = vunpack.c.l.b16 %v478
    %v1013 = vunpack.c.h.b16 %v478
    %v1014 = vunpack.c.l.b16 %v479
    %v1015 = vunpack.c.h.b16 %v479
    %v1016 = vunpack.c.l.b16 %v480
    %v1017 = vunpack.c.h.b16 %v480
    %v1018 = vunpack.c.l.b16 %v481
    %v1019 = vunpack.c.h.b16 %v481
    %v1020 = vunpack.c.l.b16 %v482
    %v1021 = vunpack.c.h.b16 %v482
    %v1022 = vunpack.c.l.b16 %v483
    %v1023 = vunpack.c.h.b16 %v483
    %v1024 = vunpack.c.l.b16 %v484
    %v1025 = vunpack.c.h.b16 %v484
    %v1026 = vunpack.c.l.b16 %v485
    %v1027 = vunpack.c.h.b16 %v485
    %v1028 = vunpack.c.l.b16 %v486
    %v1029 = vunpack.c.h.b16 %v486
    %v1030 = vunpack.c.l.b16 %v487
    %v1031 = vunpack.c.h.b16 %v487
    %v1032 = vunpack.c.l.b16 %v488
    %v1033 = vunpack.c.h.b16 %v488
    %v1034 = vunpack.c.l.b16 %v489
    %v1035 = vunpack.c.h.b16 %v489
    %v1036 = vunpack.c.l.b16 %v490
    %v1037 = vunpack.c.h.b16 %v490
    %v1038 = vunpack.c.l.b16 %v491
    %v1039 = vunpack.c.h.b16 %v491
    %v1040 = vunpack.c.l.b16 %v492
    %v1041 = vunpack.c.h.b16 %v492
    %v1042 = vunpack.c.l.b16 %v493
    %v1043 = vunpack.c.h.b16 %v493
    %v1044 = vunpack.c.l.b16 %v494
    %v1045 = vunpack.c.h.b16 %v494
    %v1046 = vunpack.c.l.b16 %v495
    %v1047 = vunpack.c.h.b16 %v495
    %v1048 = vunpack.c.l.b16 %v496
    %v1049 = vunpack.c.h.b16 %v496
    %v1050 = vunpack.c.l.b16 %v497
    %v1051 = vunpack.c.h.b16 %v497
    %v1052 = vunpack.c.l.b16 %v498
    %v1053 = vunpack.c.h.b16 %v498
    %v1054 = vunpack.c.l.b16 %v499
    %v1055 = vunpack.c.h.b16 %v499
    %v1056 = vunpack.c.l.b16 %v500
    %v1057 = vunpack.c.h.b16 %v500
    %v1058 = vunpack.c.l.b16 %v501
    %v1059 = vunpack.c.h.b16 %v501
    %v1060 = vunpack.c.l.b16 %v502
    %v1061 = vunpack.c.h.b16 %v502
    %v1062 = vunpack.c.l.b16 %v503
    %v1063 = vunpack.c.h.b16 %v503
    %v1064 = vunpack.c.l.b16 %v504
    %v1065 = vunpack.c.h.b16 %v504
    %v1066 = vunpack.c.l.b16 %v505
    %v1067 = vunpack.c.h.b16 %v505
    %v1068 = vunpack.c.l.b16 %v506
    %v1069 = vunpack.c.h.b16 %v506
    %v1070 = vunpack.c.l.b16 %v507
    %v1071 = vunpack.c.h.b16 %v507
    %v1072 = vunpack.c.l.b16 %v508
    %v1073 = vunpack.c.h.b16 %v508
    %v1074 = vunpack.c.l.b16 %v509
    %v1075 = vunpack.c.h.b16 %v509
    %v1076 = vunpack.c.l.b16 %v510
    %v1077 = vunpack.c.h.b16 %v510
    %v1078 = vunpack.c.l.b16 %v511
    %v1079 = vunpack.c.h.b16 %v511
    %v1080 = vunpack.c.l.b16 %v512
    %v1081 = vunpack.c.h.b16 %v512
    %v1082 = vunpack.c.l.b16 %v513
    %v1083 = vunpack.c.h.b16 %v513
    %v1084 = vunpack.c.l.b16 %v514
    %v1085 = vunpack.c.h.b16 %v514
    %v1086 = vunpack.c.l.b16 %v515
    %v1087 = vunpack.c.h.b16 %v515
    %v1088 = vunpack.c.l.b16 %v516
    %v1089 = vunpack.c.h.b16 %v516
    %v1090 = vunpack.c.l.b16 %v517
    %v1091 = vunpack.c.h.b16 %v517
    %v1092 = vunpack.c.l.b16 %v518
    %v1093 = vunpack.c.h.b16 %v518
    %v1094 = vunpack.c.l.b16 %v519
    %v1095 = vunpack.c.h.b16 %v519
    %v1096 = vunpack.c.l.b16 %v520
    %v1097 = vunpack.c.h.b16 %v520
    %v1098 = vunpack.c.l.b16 %v521
    %v1099 = vunpack.c.h.b16 %v521
    %v1100 = vunpack.c.l.b16 %v522
    %v1101 = vunpack.c.h.b16 %v522
    %v1102 = vunpack.c.l.b16 %v523
    %v1103 = vunpack.c.h.b16 %v523
    %v1104 = vunpack.c.l.b16 %v524
    %v1105 = vunpack.c.h.b16 %v524
    %v1106 = vunpack.c.l.b16 %v525
    %v1107 = vunpack.c.h.b16 %v525
    %v1108 = vunpack.c.l.b16 %v526
    %v1109 = vunpack.c.h.b16 %v526
    %v1110 = vunpack.c.l.b16 %v527
    %v1111 = vunpack.c.h.b16 %v527
    %v1112 = vunpack.c.l.b16 %v528
    %v1113 = vunpack.c.h.b16 %v528
    %v1114 = vunpack.c.l.b16 %v529
    %v1115 = vunpack.c.h.b16 %v529
    %v1116 = vunpack.c.l.b16 %v530
    %v1117 = vunpack.c.h.b16 %v530
    %v1118 = vunpack.c.l.b16 %v531
    %v1119 = vunpack.c.h.b16 %v531
    %v1120 = vunpack.c.l.b16 %v532
    %v1121 = vunpack.c.h.b16 %v532
    %v1122 = vunpack.c.l.b16 %v533
    %v1123 = vunpack.c.h.b16 %v533
    %v1124 = vunpack.c.l.b16 %v534
    %v1125 = vunpack.c.h.b16 %v534
    %v1126 = vunpack.c.l.b16 %v535
    %v1127 = vunpack.c.h.b16 %v535
    %v1128 = vunpack.c.l.b16 %v536
    %v1129 = vunpack.c.h.b16 %v536
    %v1130 = vunpack.c.l.b16 %v537
    %v1131 = vunpack.c.h.b16 %v537
    %v1132 = vunpack.c.l.b16 %v538
    %v1133 = vunpack.c.h.b16 %v538
    %v1134 = vunpack.c.l.b16 %v539
    %v1135 = vunpack.c.h.b16 %v539
    %v1136 = vunpack.c.l.b16 %v540
    %v1137 = vunpack.c.h.b16 %v540
    %v1138 = vunpack.c.l.b16 %v541
    %v1139 = vunpack.c.h.b16 %v541
    %v1140 = vunpack.c.l.b16 %v542
    %v1141 = vunpack.c.h.b16 %v542
    %v1142 = vunpack.c.l.b16 %v543
    %v1143 = vunpack.c.h.b16 %v543
    %v1144 = vunpack.c.l.b16 %v544
    %v1145 = vunpack.c.h.b16 %v544
    %v1146 = vunpack.c.l.b16 %v545
    %v1147 = vunpack.c.h.b16 %v545
    %v1148 = vunpack.c.l.b16 %v546
    %v1149 = vunpack.c.h.b16 %v546
    %v1150 = vunpack.c.l.b16 %v547
    %v1151 = vunpack.c.h.b16 %v547
    %v1152 = vunpack.c.l.b16 %v548
    %v1153 = vunpack.c.h.b16 %v548
    %v1154 = vunpack.c.l.b16 %v549
    %v1155 = vunpack.c.h.b16 %v549
    %v1156 = vunpack.c.l.b16 %v550
    %v1157 = vunpack.c.h.b16 %v550
    %v1158 = vunpack.c.l.b16 %v551
    %v1159 = vunpack.c.h.b16 %v551
    %v1160 = vunpack.c.l.b16 %v552
    %v1161 = vunpack.c.h.b16 %v552
    %v1162 = vunpack.c.l.b16 %v553
    %v1163 = vunpack.c.h.b16 %v553
    %v1164 = vpack.c.b16 %v776, %v772
    %v1165 = vpack.c.b16 %v777, %v773
    %v1166 = vpack.c.b16 %v778, %v774
    %v1167 = vpack.c.b16 %v779, %v775
    %v1168 = vpack.c.b16 %v784, %v780
    %v1169 = vpack.c.b16 %v785, %v781
    %v1170 = vpack.c.b16 %v786, %v782
    %v1171 = vpack.c.b16 %v787, %v783
    %v1172 = vpack.c.b16 %v792, %v788
    %v1173 = vpack.c.b16 %v793, %v789
    %v1174 = vpack.c.b16 %v794, %v790
    %v1175 = vpack.c.b16 %v795, %v791
    %v1176 = vpack.c.b16 %v800, %v796
    %v1177 = vpack.c.b16 %v801, %v797
    %v1178 = vpack.c.b16 %v802, %v798
    %v1179 = vpack.c.b16 %v803, %v799
    %v1180 = vpack.c.b16 %v808, %v804
    %v1181 = vpack.c.b16 %v809, %v805
    %v1182 = vpack.c.b16 %v810, %v806
    %v1183 = vpack.c.b16 %v811, %v807
    %v1184 = vpack.c.b16 %v816, %v812
    %v1185 = vpack.c.b16 %v817, %v813
    %v1186 = vpack.c.b16 %v818, %v814
    %v1187 = vpack.c.b16 %v819, %v815
    %v1188 = vpack.c.b16 %v824, %v820
    %v1189 = vpack.c.b16 %v825, %v821
    %v1190 = vpack.c.b16 %v826, %v822
    %v1191 = vpack.c.b16 %v827, %v823
    %v1192 = vpack.c.b16 %v832, %v828
    %v1193 = vpack.c.b16 %v833, %v829
    %v1194 = vpack.c.b16 %v834, %v830
    %v1195 = vpack.c.b16 %v835, %v831
    %v1196 = vpack.c.b16 %v840, %v836
    %v1197 = vpack.c.b16 %v841, %v837
    %v1198 = vpack.c.b16 %v842, %v838
    %v1199 = vpack.c.b16 %v843, %v839
    %v1200 = vpack.c.b16 %v848, %v844
    %v1201 = vpack.c.b16 %v849, %v845
    %v1202 = vpack.c.b16 %v850, %v846
    %v1203 = vpack.c.b16 %v851, %v847
    %v1204 = vpack.c.b16 %v856, %v852
    %v1205 = vpack.c.b16 %v857, %v853
    %v1206 = vpack.c.b16 %v858, %v854
    %v1207 = vpack.c.b16 %v859, %v855
    %v1208 = vpack.c.b16 %v864, %v860
    %v1209 = vpack.c.b16 %v865, %v861
    %v1210 = vpack.c.b16 %v866, %v862
    %v1211 = vpack.c.b16 %v867, %v863
    %v1212 = vpack.c.b16 %v872, %v868
    %v1213 = vpack.c.b16 %v873, %v869
    %v1214 = vpack.c.b16 %v874, %v870
    %v1215 = vpack.c.b16 %v875, %v871
    %v1216 = vpack.c.b16 %v880, %v876
    %v1217 = vpack.c.b16 %v881, %v877
    %v1218 = vpack.c.b16 %v882, %v878
    %v1219 = vpack.c.b16 %v883, %v879
    %v1220 = vpack.c.b16 %v888, %v884
    %v1221 = vpack.c.b16 %v889, %v885
    %v1222 = vpack.c.b16 %v890, %v886
    %v1223 = vpack.c.b16 %v891, %v887
    %v1224 = vpack.c.b16 %v896, %v892
    %v1225 = vpack.c.b16 %v897, %v893
    %v1226 = vpack.c.b16 %v898, %v894
    %v1227 = vpack.c.b16 %v899, %v895
    %v1228 = vpack.c.b16 %v904, %v900
    %v1229 = vpack.c.b16 %v905, %v901
    %v1230 = vpack.c.b16 %v906, %v902
    %v1231 = vpack.c.b16 %v907, %v903
    %v1232 = vpack.c.b16 %v912, %v908
    %v1233 = vpack.c.b16 %v913, %v909
    %v1234 = vpack.c.b16 %v914, %v910
    %v1235 = vpack.c.b16 %v915, %v911
    %v1236 = vpack.c.b16 %v920, %v916
    %v1237 = vpack.c.b16 %v921, %v917
    %v1238 = vpack.c.b16 %v922, %v918
    %v1239 = vpack.c.b16 %v923, %v919
    %v1240 = vpack.c.b16 %v928, %v924
    %v1241 = vpack.c.b16 %v929, %v925
    %v1242 = vpack.c.b16 %v930, %v926
    %v1243 = vpack.c.b16 %v931, %v927
    %v1244 = vpack.c.b16 %v936, %v932
    %v1245 = vpack.c.b16 %v937, %v933
    %v1246 = vpack.c.b16 %v938, %v934
    %v1247 = vpack.c.b16 %v939, %v935
    %v1248 = vpack.c.b16 %v944, %v940
    %v1249 = vpack.c.b16 %v945, %v941
    %v1250 = vpack.c.b16 %v946, %v942
    %v1251 = vpack.c.b16 %v947, %v943
    %v1252 = vpack.c.b16 %v952, %v948
    %v1253 = vpack.c.b16 %v953, %v949
    %v1254 = vpack.c.b16 %v954, %v950
    %v1255 = vpack.c.b16 %v955, %v951
    %v1256 = vpack.c.b16 %v960, %v956
    %v1257 = vpack.c.b16 %v961, %v957
    %v1258 = vpack.c.b16 %v962, %v958
    %v1259 = vpack.c.b16 %v963, %v959
    %v1260 = vpack.c.b16 %v968, %v964
    %v1261 = vpack.c.b16 %v969, %v965
    %v1262 = vpack.c.b16 %v970, %v966
    %v1263 = vpack.c.b16 %v971, %v967
    %v1264 = vpack.c.b16 %v976, %v972
    %v1265 = vpack.c.b16 %v977, %v973
    %v1266 = vpack.c.b16 %v978, %v974
    %v1267 = vpack.c.b16 %v979, %v975
    %v1268 = vpack.c.b16 %v984, %v980
    %v1269 = vpack.c.b16 %v985, %v981
    %v1270 = vpack.c.b16 %v986, %v982
    %v1271 = vpack.c.b16 %v987, %v983
    %v1272 = vpack.c.b16 %v992, %v988
    %v1273 = vpack.c.b16 %v993, %v989
    %v1274 = vpack.c.b16 %v994, %v990
    %v1275 = vpack.c.b16 %v995, %v991
    %v1276 = vpack.c.b16 %v1000, %v996
    %v1277 = vpack.c.b16 %v1001, %v997
    %v1278 = vpack.c.b16 %v1002, %v998
    %v1279 = vpack.c.b16 %v1003, %v999
    %v1280 = vpack.c.b16 %v1008, %v1004
    %v1281 = vpack.c.b16 %v1009, %v1005
    %v1282 = vpack.c.b16 %v1010, %v1006
    %v1283 = vpack.c.b16 %v1011, %v1007
    %v1284 = vpack.c.b16 %v1016, %v1012
    %v1285 = vpack.c.b16 %v1017, %v1013
    %v1286 = vpack.c.b16 %v1018, %v1014
    %v1287 = vpack.c.b16 %v1019, %v1015
    %v1288 = vpack.c.b16 %v1024, %v1020
    %v1289 = vpack.c.b16 %v1025, %v1021
    %v1290 = vpack.c.b16 %v1026, %v1022
    %v1291 = vpack.c.b16 %v1027, %v1023
    %v1292 = vpack.c.b16 %v1032, %v1028
    %v1293 = vpack.c.b16 %v1033, %v1029
    %v1294 = vpack.c.b16 %v1034, %v1030
    %v1295 = vpack.c.b16 %v1035, %v1031
    %v1296 = vpack.c.b16 %v1040, %v1036
    %v1297 = vpack.c.b16 %v1041, %v1037
    %v1298 = vpack.c.b16 %v1042, %v1038
    %v1299 = vpack.c.b16 %v1043, %v1039
    %v1300 = vpack.c.b16 %v1048, %v1044
    %v1301 = vpack.c.b16 %v1049, %v1045
    %v1302 = vpack.c.b16 %v1050, %v1046
    %v1303 = vpack.c.b16 %v1051, %v1047
    %v1304 = vpack.c.b16 %v1056, %v1052
    %v1305 = vpack.c.b16 %v1057, %v1053
    %v1306 = vpack.c.b16 %v1058, %v1054
    %v1307 = vpack.c.b16 %v1059, %v1055
    %v1308 = vpack.c.b16 %v1064, %v1060
    %v1309 = vpack.c.b16 %v1065, %v1061
    %v1310 = vpack.c.b16 %v1066, %v1062
    %v1311 = vpack.c.b16 %v1067, %v1063
    %v1312 = vpack.c.b16 %v1072, %v1068
    %v1313 = vpack.c.b16 %v1073, %v1069
    %v1314 = vpack.c.b16 %v1074, %v1070
    %v1315 = vpack.c.b16 %v1075, %v1071
    %v1316 = vpack.c.b16 %v1080, %v1076
    %v1317 = vpack.c.b16 %v1081, %v1077
    %v1318 = vpack.c.b16 %v1082, %v1078
    %v1319 = vpack.c.b16 %v1083, %v1079
    %v1320 = vpack.c.b16 %v1088, %v1084
    %v1321 = vpack.c.b16 %v1089, %v1085
    %v1322 = vpack.c.b16 %v1090, %v1086
    %v1323 = vpack.c.b16 %v1091, %v1087
    %v1324 = vpack.c.b16 %v1096, %v1092
    %v1325 = vpack.c.b16 %v1097, %v1093
    %v1326 = vpack.c.b16 %v1098, %v1094
    %v1327 = vpack.c.b16 %v1099, %v1095
    %v1328 = vpack.c.b16 %v1104, %v1100
    %v1329 = vpack.c.b16 %v1105, %v1101
    %v1330 = vpack.c.b16 %v1106, %v1102
    %v1331 = vpack.c.b16 %v1107, %v1103
    %v1332 = vpack.c.b16 %v1112, %v1108
    %v1333 = vpack.c.b16 %v1113, %v1109
    %v1334 = vpack.c.b16 %v1114, %v1110
    %v1335 = vpack.c.b16 %v1115, %v1111
    %v1336 = vpack.c.b16 %v1120, %v1116
    %v1337 = vpack.c.b16 %v1121, %v1117
    %v1338 = vpack.c.b16 %v1122, %v1118
    %v1339 = vpack.c.b16 %v1123, %v1119
    %v1340 = vpack.c.b16 %v1128, %v1124
    %v1341 = vpack.c.b16 %v1129, %v1125
    %v1342 = vpack.c.b16 %v1130, %v1126
    %v1343 = vpack.c.b16 %v1131, %v1127
    %v1344 = vpack.c.b16 %v1136, %v1132
    %v1345 = vpack.c.b16 %v1137, %v1133
    %v1346 = vpack.c.b16 %v1138, %v1134
    %v1347 = vpack.c.b16 %v1139, %v1135
    %v1348 = vpack.c.b16 %v1144, %v1140
    %v1349 = vpack.c.b16 %v1145, %v1141
    %v1350 = vpack.c.b16 %v1146, %v1142
    %v1351 = vpack.c.b16 %v1147, %v1143
    %v1352 = vpack.c.b16 %v1152, %v1148
    %v1353 = vpack.c.b16 %v1153, %v1149
    %v1354 = vpack.c.b16 %v1154, %v1150
    %v1355 = vpack.c.b16 %v1155, %v1151
    %v1356 = vpack.c.b16 %v1160, %v1156
    %v1357 = vpack.c.b16 %v1161, %v1157
    %v1358 = vpack.c.b16 %v1162, %v1158
    %v1359 = vpack.c.b16 %v1163, %v1159
    %vm1556 = vcmask 130048
    %v1558 = vsel %vm1556, %v252, 0
    %v1561 = vsel %vm1556, %v259, 0
    %v1564 = vsel %vm1556, %v266, 0
    %v1567 = vsel %vm1556, %v273, 0
    %v1570 = vsel %vm1556, %v280, 0
    %v1573 = vsel %vm1556, %v287, 0
    %v1576 = vsel %vm1556, %v294, 0
    %v1579 = vsel %vm1556, %v301, 0
    %v1582 = vsel %vm1556, %v308, 0
    %v1585 = vsel %vm1556, %v315, 0
    %v1588 = vsel %vm1556, %v322, 0
    %v1591 = vsel %vm1556, %v329, 0
    %v1594 = vsel %vm1556, %v336, 0
    %v1597 = vsel %vm1556, %v343, 0
    %v1600 = vsel %vm1556, %v350, 0
    %v1603 = vsel %vm1556, %v357, 0
    %1605 = vmatprep.subr.bf16.mxu0 %v1165
    %1606 = vmatpush1.bf16.msra.mxu0 %v1164
    %1607 = vmatprep.subr.bf16.mxu0 %v1169
    %1608 = vmatpush1.bf16.msra.mxu0 %v1168
    %1609 = vmatprep.subr.bf16.mxu0 %v1173
    %1610 = vmatpush1.bf16.msra.mxu0 %v1172
    %1611 = vmatprep.subr.bf16.mxu0 %v1177
    %1612 = vmatpush1.bf16.msra.mxu0 %v1176
    %1613 = vmatprep.subr.bf16.mxu0 %v1181
    %1614 = vmatpush1.bf16.msra.mxu0 %v1180
    %1615 = vmatprep.subr.bf16.mxu0 %v1185
    %1616 = vmatpush1.bf16.msra.mxu0 %v1184
    %1617 = vmatprep.subr.bf16.mxu0 %v1189
    %1618 = vmatpush1.bf16.msra.mxu0 %v1188
    %1619 = vmatprep.subr.bf16.mxu0 %v1193
    %1620 = vmatpush1.bf16.msra.mxu0 %v1192
    %1621 = vmatprep.subr.bf16.mxu0 %v1197
    %1622 = vmatpush1.bf16.msra.mxu0 %v1196
    %1623 = vmatprep.subr.bf16.mxu0 %v1201
    %1624 = vmatpush1.bf16.msra.mxu0 %v1200
    %1625 = vmatprep.subr.bf16.mxu0 %v1205
    %1626 = vmatpush1.bf16.msra.mxu0 %v1204
    %1627 = vmatprep.subr.bf16.mxu0 %v1209
    %1628 = vmatpush1.bf16.msra.mxu0 %v1208
    %1629 = vmatprep.subr.bf16.mxu0 %v1213
    %1630 = vmatpush1.bf16.msra.mxu0 %v1212
    %1631 = vmatprep.subr.bf16.mxu0 %v1217
    %1632 = vmatpush1.bf16.msra.mxu0 %v1216
    %1633 = vmatprep.subr.bf16.mxu0 %v1221
    %1634 = vmatpush1.bf16.msra.mxu0 %v1220
    %1635 = vmatprep.subr.bf16.mxu0 %v1225
    %1636 = vmatpush1.bf16.msra.mxu0 %v1224
    %1637 = vmatprep.mubr.bf16.mxu0 %v247
    %1638 = vmatmul.mubr.bf16.gmra.mrb[0].mxu0 %v246
    %v1639 = vpop.f32.mrb[0].mxu0
    %v1640 = vadd.f32 %v559, %v1639
    %v1641 = vpop.f32.mrb[0].mxu0
    %v1642 = vadd.f32 %v563, %v1641
    %v1643 = vpop.f32.mrb[0].mxu0
    %v1644 = vadd.f32 %v559, %v1643
    %v1645 = vpop.f32.mrb[0].mxu0
    %v1646 = vadd.f32 %v563, %v1645
    %1647 = vmatprep.mubr.bf16.mxu0 %v254
    %1648 = vmatmul.mubr.bf16.gmra.mrb[0].mxu0 %v253
    %v1649 = vpop.f32.mrb[0].mxu0
    %v1650 = vadd.f32 %v559, %v1649
    %v1651 = vpop.f32.mrb[0].mxu0
    %v1652 = vadd.f32 %v563, %v1651
    %v1653 = vpop.f32.mrb[0].mxu0
    %v1654 = vadd.f32 %v559, %v1653
    %v1655 = vpop.f32.mrb[0].mxu0
    %v1656 = vadd.f32 %v563, %v1655
    %1657 = vmatprep.mubr.bf16.mxu0 %v261
    %1658 = vmatmul.mubr.bf16.gmra.mrb[0].mxu0 %v260
    %v1659 = vpop.f32.mrb[0].mxu0
    %v1660 = vadd.f32 %v559, %v1659
    %v1661 = vpop.f32.mrb[0].mxu0
    %v1662 = vadd.f32 %v563, %v1661
    %v1663 = vpop.f32.mrb[0].mxu0
    %v1664 = vadd.f32 %v559, %v1663
    %v1665 = vpop.f32.mrb[0].mxu0
    %v1666 = vadd.f32 %v563, %v1665
    %1667 = vmatprep.mubr.bf16.mxu0 %v268
    %1668 = vmatmul.mubr.bf16.gmra.mrb[0].mxu0 %v267
    %v1669 = vpop.f32.mrb[0].mxu0
    %v1670 = vadd.f32 %v559, %v1669
    %v1671 = vpop.f32.mrb[0].mxu0
    %v1672 = vadd.f32 %v563, %v1671
    %v1673 = vpop.f32.mrb[0].mxu0
    %v1674 = vadd.f32 %v559, %v1673
    %v1675 = vpop.f32.mrb[0].mxu0
    %v1676 = vadd.f32 %v563, %v1675
    %1677 = vmatprep.mubr.bf16.mxu0 %v275
    %1678 = vmatmul.mubr.bf16.gmra.mrb[0].mxu0 %v274
    %v1679 = vpop.f32.mrb[0].mxu0
    %v1680 = vadd.f32 %v559, %v1679
    %v1681 = vpop.f32.mrb[0].mxu0
    %v1682 = vadd.f32 %v563, %v1681
    %v1683 = vpop.f32.mrb[0].mxu0
    %v1684 = vadd.f32 %v559, %v1683
    %v1685 = vpop.f32.mrb[0].mxu0
    %v1686 = vadd.f32 %v563, %v1685
    %1687 = vmatprep.mubr.bf16.mxu0 %v282
    %1688 = vmatmul.mubr.bf16.gmra.mrb[0].mxu0 %v281
    %v1689 = vpop.f32.mrb[0].mxu0
    %v1690 = vadd.f32 %v559, %v1689
    %v1691 = vpop.f32.mrb[0].mxu0
    %v1692 = vadd.f32 %v563, %v1691
    %v1693 = vpop.f32.mrb[0].mxu0
    %v1694 = vadd.f32 %v559, %v1693
    %v1695 = vpop.f32.mrb[0].mxu0
    %v1696 = vadd.f32 %v563, %v1695
    %1697 = vmatprep.mubr.bf16.mxu0 %v289
    %1698 = vmatmul.mubr.bf16.gmra.mrb[0].mxu0 %v288
    %v1699 = vpop.f32.mrb[0].mxu0
    %v1700 = vadd.f32 %v559, %v1699
    %v1701 = vpop.f32.mrb[0].mxu0
    %v1702 = vadd.f32 %v563, %v1701
    %v1703 = vpop.f32.mrb[0].mxu0
    %v1704 = vadd.f32 %v559, %v1703
    %v1705 = vpop.f32.mrb[0].mxu0
    %v1706 = vadd.f32 %v563, %v1705
    %1707 = vmatprep.mubr.bf16.mxu0 %v296
    %1708 = vmatmul.mubr.bf16.gmra.mrb[0].mxu0 %v295
    %v1709 = vpop.f32.mrb[0].mxu0
    %v1710 = vadd.f32 %v559, %v1709
    %v1711 = vpop.f32.mrb[0].mxu0
    %v1712 = vadd.f32 %v563, %v1711
    %v1713 = vpop.f32.mrb[0].mxu0
    %v1714 = vadd.f32 %v559, %v1713
    %v1715 = vpop.f32.mrb[0].mxu0
    %v1716 = vadd.f32 %v563, %v1715
    %1717 = vmatprep.mubr.bf16.mxu0 %v303
    %1718 = vmatmul.mubr.bf16.gmra.mrb[0].mxu0 %v302
    %v1719 = vpop.f32.mrb[0].mxu0
    %v1720 = vadd.f32 %v559, %v1719
    %v1721 = vpop.f32.mrb[0].mxu0
    %v1722 = vadd.f32 %v563, %v1721
    %v1723 = vpop.f32.mrb[0].mxu0
    %v1724 = vadd.f32 %v559, %v1723
    %v1725 = vpop.f32.mrb[0].mxu0
    %v1726 = vadd.f32 %v563, %v1725
    %1727 = vmatprep.mubr.bf16.mxu0 %v310
    %1728 = vmatmul.mubr.bf16.gmra.mrb[0].mxu0 %v309
    %v1729 = vpop.f32.mrb[0].mxu0
    %v1730 = vadd.f32 %v559, %v1729
    %v1731 = vpop.f32.mrb[0].mxu0
    %v1732 = vadd.f32 %v563, %v1731
    %v1733 = vpop.f32.mrb[0].mxu0
    %v1734 = vadd.f32 %v559, %v1733
    %v1735 = vpop.f32.mrb[0].mxu0
    %v1736 = vadd.f32 %v563, %v1735
    %1737 = vmatprep.mubr.bf16.mxu0 %v317
    %1738 = vmatmul.mubr.bf16.gmra.mrb[0].mxu0 %v316
    %v1739 = vpop.f32.mrb[0].mxu0
    %v1740 = vadd.f32 %v559, %v1739
    %v1741 = vpop.f32.mrb[0].mxu0
    %v1742 = vadd.f32 %v563, %v1741
    %v1743 = vpop.f32.mrb[0].mxu0
    %v1744 = vadd.f32 %v559, %v1743
    %v1745 = vpop.f32.mrb[0].mxu0
    %v1746 = vadd.f32 %v563, %v1745
    %1747 = vmatprep.mubr.bf16.mxu0 %v324
    %1748 = vmatmul.mubr.bf16.gmra.mrb[0].mxu0 %v323
    %v1749 = vpop.f32.mrb[0].mxu0
    %v1750 = vadd.f32 %v559, %v1749
    %v1751 = vpop.f32.mrb[0].mxu0
    %v1752 = vadd.f32 %v563, %v1751
    %v1753 = vpop.f32.mrb[0].mxu0
    %v1754 = vadd.f32 %v559, %v1753
    %v1755 = vpop.f32.mrb[0].mxu0
    %v1756 = vadd.f32 %v563, %v1755
    %1757 = vmatprep.mubr.bf16.mxu0 %v331
    %1758 = vmatmul.mubr.bf16.gmra.mrb[0].mxu0 %v330
    %v1759 = vpop.f32.mrb[0].mxu0
    %v1760 = vadd.f32 %v559, %v1759
    %v1761 = vpop.f32.mrb[0].mxu0
    %v1762 = vadd.f32 %v563, %v1761
    %v1763 = vpop.f32.mrb[0].mxu0
    %v1764 = vadd.f32 %v559, %v1763
    %v1765 = vpop.f32.mrb[0].mxu0
    %v1766 = vadd.f32 %v563, %v1765
    %1767 = vmatprep.mubr.bf16.mxu0 %v338
    %1768 = vmatmul.mubr.bf16.gmra.mrb[0].mxu0 %v337
    %v1769 = vpop.f32.mrb[0].mxu0
    %v1770 = vadd.f32 %v559, %v1769
    %v1771 = vpop.f32.mrb[0].mxu0
    %v1772 = vadd.f32 %v563, %v1771
    %v1773 = vpop.f32.mrb[0].mxu0
    %v1774 = vadd.f32 %v559, %v1773
    %v1775 = vpop.f32.mrb[0].mxu0
    %v1776 = vadd.f32 %v563, %v1775
    %1777 = vmatprep.mubr.bf16.mxu0 %v345
    %1778 = vmatmul.mubr.bf16.gmra.mrb[0].mxu0 %v344
    %v1779 = vpop.f32.mrb[0].mxu0
    %v1780 = vadd.f32 %v559, %v1779
    %v1781 = vpop.f32.mrb[0].mxu0
    %v1782 = vadd.f32 %v563, %v1781
    %v1783 = vpop.f32.mrb[0].mxu0
    %v1784 = vadd.f32 %v559, %v1783
    %v1785 = vpop.f32.mrb[0].mxu0
    %v1786 = vadd.f32 %v563, %v1785
    %1787 = vmatprep.mubr.bf16.mxu0 %v352
    %1788 = vmatmul.mubr.bf16.gmra.mrb[0].mxu0 %v351
    %v1789 = vpop.f32.mrb[0].mxu0
    %v1790 = vadd.f32 %v559, %v1789
    %v1791 = vpop.f32.mrb[0].mxu0
    %v1792 = vadd.f32 %v563, %v1791
    %v1793 = vpop.f32.mrb[0].mxu0
    %v1794 = vadd.f32 %v559, %v1793
    %v1795 = vpop.f32.mrb[0].mxu0
    %v1796 = vadd.f32 %v563, %v1795
    %1797 = vdwg.mxu0
    %1798 = vmatprep.subr.bf16.mxu0 %v1229
    %1799 = vmatpush1.bf16.msra.mxu0 %v1228
    %1800 = vmatprep.subr.bf16.mxu0 %v1233
    %1801 = vmatpush1.bf16.msra.mxu0 %v1232
    %1802 = vmatprep.subr.bf16.mxu0 %v1237
    %1803 = vmatpush1.bf16.msra.mxu0 %v1236
    %1804 = vmatprep.subr.bf16.mxu0 %v1241
    %1805 = vmatpush1.bf16.msra.mxu0 %v1240
    %1806 = vmatprep.subr.bf16.mxu0 %v1245
    %1807 = vmatpush1.bf16.msra.mxu0 %v1244
    %1808 = vmatprep.subr.bf16.mxu0 %v1249
    %1809 = vmatpush1.bf16.msra.mxu0 %v1248
    %1810 = vmatprep.subr.bf16.mxu0 %v1253
    %1811 = vmatpush1.bf16.msra.mxu0 %v1252
    %1812 = vmatprep.subr.bf16.mxu0 %v1257
    %1813 = vmatpush1.bf16.msra.mxu0 %v1256
    %1814 = vmatprep.subr.bf16.mxu0 %v1261
    %1815 = vmatpush1.bf16.msra.mxu0 %v1260
    %1816 = vmatprep.subr.bf16.mxu0 %v1265
    %1817 = vmatpush1.bf16.msra.mxu0 %v1264
    %1818 = vmatprep.subr.bf16.mxu0 %v1269
    %1819 = vmatpush1.bf16.msra.mxu0 %v1268
    %1820 = vmatprep.subr.bf16.mxu0 %v1273
    %1821 = vmatpush1.bf16.msra.mxu0 %v1272
    %1822 = vmatprep.subr.bf16.mxu0 %v1277
    %1823 = vmatpush1.bf16.msra.mxu0 %v1276
    %1824 = vmatprep.subr.bf16.mxu0 %v1281
    %1825 = vmatpush1.bf16.msra.mxu0 %v1280
    %1826 = vmatprep.subr.bf16.mxu0 %v1285
    %1827 = vmatpush1.bf16.msra.mxu0 %v1284
    %1828 = vmatprep.subr.bf16.mxu0 %v1289
    %1829 = vmatpush1.bf16.msra.mxu0 %v1288
    %1830 = vmatprep.mubr.bf16.mxu0 %v249
    %1831 = vmatmul.mubr.bf16.gmra.mrb[0].mxu0 %v248
    %v1832 = vpop.f32.mrb[0].mxu0
    %v1833 = vadd.f32 %v1640, %v1832
    %v1834 = vpop.f32.mrb[0].mxu0
    %v1835 = vadd.f32 %v1642, %v1834
    %v1836 = vpop.f32.mrb[0].mxu0
    %v1837 = vadd.f32 %v1644, %v1836
    %v1838 = vpop.f32.mrb[0].mxu0
    %v1839 = vadd.f32 %v1646, %v1838
    %1840 = vmatprep.mubr.bf16.mxu0 %v256
    %1841 = vmatmul.mubr.bf16.gmra.mrb[0].mxu0 %v255
    %v1842 = vpop.f32.mrb[0].mxu0
    %v1843 = vadd.f32 %v1650, %v1842
    %v1844 = vpop.f32.mrb[0].mxu0
    %v1845 = vadd.f32 %v1652, %v1844
    %v1846 = vpop.f32.mrb[0].mxu0
    %v1847 = vadd.f32 %v1654, %v1846
    %v1848 = vpop.f32.mrb[0].mxu0
    %v1849 = vadd.f32 %v1656, %v1848
    %1850 = vmatprep.mubr.bf16.mxu0 %v263
    %1851 = vmatmul.mubr.bf16.gmra.mrb[0].mxu0 %v262
    %v1852 = vpop.f32.mrb[0].mxu0
    %v1853 = vadd.f32 %v1660, %v1852
    %v1854 = vpop.f32.mrb[0].mxu0
    %v1855 = vadd.f32 %v1662, %v1854
    %v1856 = vpop.f32.mrb[0].mxu0
    %v1857 = vadd.f32 %v1664, %v1856
    %v1858 = vpop.f32.mrb[0].mxu0
    %v1859 = vadd.f32 %v1666, %v1858
    %1860 = vmatprep.mubr.bf16.mxu0 %v270
    %1861 = vmatmul.mubr.bf16.gmra.mrb[0].mxu0 %v269
    %v1862 = vpop.f32.mrb[0].mxu0
    %v1863 = vadd.f32 %v1670, %v1862
    %v1864 = vpop.f32.mrb[0].mxu0
    %v1865 = vadd.f32 %v1672, %v1864
    %v1866 = vpop.f32.mrb[0].mxu0
    %v1867 = vadd.f32 %v1674, %v1866
    %v1868 = vpop.f32.mrb[0].mxu0
    %v1869 = vadd.f32 %v1676, %v1868
    %1870 = vmatprep.mubr.bf16.mxu0 %v277
    %1871 = vmatmul.mubr.bf16.gmra.mrb[0].mxu0 %v276
    %v1872 = vpop.f32.mrb[0].mxu0
    %v1873 = vadd.f32 %v1680, %v1872
    %v1874 = vpop.f32.mrb[0].mxu0
    %v1875 = vadd.f32 %v1682, %v1874
    %v1876 = vpop.f32.mrb[0].mxu0
    %v1877 = vadd.f32 %v1684, %v1876
    %v1878 = vpop.f32.mrb[0].mxu0
    %v1879 = vadd.f32 %v1686, %v1878
    %1880 = vmatprep.mubr.bf16.mxu0 %v284
    %1881 = vmatmul.mubr.bf16.gmra.mrb[0].mxu0 %v283
    %v1882 = vpop.f32.mrb[0].mxu0
    %v1883 = vadd.f32 %v1690, %v1882
    %v1884 = vpop.f32.mrb[0].mxu0
    %v1885 = vadd.f32 %v1692, %v1884
    %v1886 = vpop.f32.mrb[0].mxu0
    %v1887 = vadd.f32 %v1694, %v1886
    %v1888 = vpop.f32.mrb[0].mxu0
    %v1889 = vadd.f32 %v1696, %v1888
    %1890 = vmatprep.mubr.bf16.mxu0 %v291
    %1891 = vmatmul.mubr.bf16.gmra.mrb[0].mxu0 %v290
    %v1892 = vpop.f32.mrb[0].mxu0
    %v1893 = vadd.f32 %v1700, %v1892
    %v1894 = vpop.f32.mrb[0].mxu0
    %v1895 = vadd.f32 %v1702, %v1894
    %v1896 = vpop.f32.mrb[0].mxu0
    %v1897 = vadd.f32 %v1704, %v1896
    %v1898 = vpop.f32.mrb[0].mxu0
    %v1899 = vadd.f32 %v1706, %v1898
    %1900 = vmatprep.mubr.bf16.mxu0 %v298
    %1901 = vmatmul.mubr.bf16.gmra.mrb[0].mxu0 %v297
    %v1902 = vpop.f32.mrb[0].mxu0
    %v1903 = vadd.f32 %v1710, %v1902
    %v1904 = vpop.f32.mrb[0].mxu0
    %v1905 = vadd.f32 %v1712, %v1904
    %v1906 = vpop.f32.mrb[0].mxu0
    %v1907 = vadd.f32 %v1714, %v1906
    %v1908 = vpop.f32.mrb[0].mxu0
    %v1909 = vadd.f32 %v1716, %v1908
    %1910 = vmatprep.mubr.bf16.mxu0 %v305
    %1911 = vmatmul.mubr.bf16.gmra.mrb[0].mxu0 %v304
    %v1912 = vpop.f32.mrb[0].mxu0
    %v1913 = vadd.f32 %v1720, %v1912
    %v1914 = vpop.f32.mrb[0].mxu0
    %v1915 = vadd.f32 %v1722, %v1914
    %v1916 = vpop.f32.mrb[0].mxu0
    %v1917 = vadd.f32 %v1724, %v1916
    %v1918 = vpop.f32.mrb[0].mxu0
    %v1919 = vadd.f32 %v1726, %v1918
    %1920 = vmatprep.mubr.bf16.mxu0 %v312
    %1921 = vmatmul.mubr.bf16.gmra.mrb[0].mxu0 %v311
    %v1922 = vpop.f32.mrb[0].mxu0
    %v1923 = vadd.f32 %v1730, %v1922
    %v1924 = vpop.f32.mrb[0].mxu0
    %v1925 = vadd.f32 %v1732, %v1924
    %v1926 = vpop.f32.mrb[0].mxu0
    %v1927 = vadd.f32 %v1734, %v1926
    %v1928 = vpop.f32.mrb[0].mxu0
    %v1929 = vadd.f32 %v1736, %v1928
    %1930 = vmatprep.mubr.bf16.mxu0 %v319
    %1931 = vmatmul.mubr.bf16.gmra.mrb[0].mxu0 %v318
    %v1932 = vpop.f32.mrb[0].mxu0
    %v1933 = vadd.f32 %v1740, %v1932
    %v1934 = vpop.f32.mrb[0].mxu0
    %v1935 = vadd.f32 %v1742, %v1934
    %v1936 = vpop.f32.mrb[0].mxu0
    %v1937 = vadd.f32 %v1744, %v1936
    %v1938 = vpop.f32.mrb[0].mxu0
    %v1939 = vadd.f32 %v1746, %v1938
    %1940 = vmatprep.mubr.bf16.mxu0 %v326
    %1941 = vmatmul.mubr.bf16.gmra.mrb[0].mxu0 %v325
    %v1942 = vpop.f32.mrb[0].mxu0
    %v1943 = vadd.f32 %v1750, %v1942
    %v1944 = vpop.f32.mrb[0].mxu0
    %v1945 = vadd.f32 %v1752, %v1944
    %v1946 = vpop.f32.mrb[0].mxu0
    %v1947 = vadd.f32 %v1754, %v1946
    %v1948 = vpop.f32.mrb[0].mxu0
    %v1949 = vadd.f32 %v1756, %v1948
    %1950 = vmatprep.mubr.bf16.mxu0 %v333
    %1951 = vmatmul.mubr.bf16.gmra.mrb[0].mxu0 %v332
    %v1952 = vpop.f32.mrb[0].mxu0
    %v1953 = vadd.f32 %v1760, %v1952
    %v1954 = vpop.f32.mrb[0].mxu0
    %v1955 = vadd.f32 %v1762, %v1954
    %v1956 = vpop.f32.mrb[0].mxu0
    %v1957 = vadd.f32 %v1764, %v1956
    %v1958 = vpop.f32.mrb[0].mxu0
    %v1959 = vadd.f32 %v1766, %v1958
    %1960 = vmatprep.mubr.bf16.mxu0 %v340
    %1961 = vmatmul.mubr.bf16.gmra.mrb[0].mxu0 %v339
    %v1962 = vpop.f32.mrb[0].mxu0
    %v1963 = vadd.f32 %v1770, %v1962
    %v1964 = vpop.f32.mrb[0].mxu0
    %v1965 = vadd.f32 %v1772, %v1964
    %v1966 = vpop.f32.mrb[0].mxu0
    %v1967 = vadd.f32 %v1774, %v1966
    %v1968 = vpop.f32.mrb[0].mxu0
    %v1969 = vadd.f32 %v1776, %v1968
    %1970 = vmatprep.mubr.bf16.mxu0 %v347
    %1971 = vmatmul.mubr.bf16.gmra.mrb[0].mxu0 %v346
    %v1972 = vpop.f32.mrb[0].mxu0
    %v1973 = vadd.f32 %v1780, %v1972
    %v1974 = vpop.f32.mrb[0].mxu0
    %v1975 = vadd.f32 %v1782, %v1974
    %v1976 = vpop.f32.mrb[0].mxu0
    %v1977 = vadd.f32 %v1784, %v1976
    %v1978 = vpop.f32.mrb[0].mxu0
    %v1979 = vadd.f32 %v1786, %v1978
    %1980 = vmatprep.mubr.bf16.mxu0 %v354
    %1981 = vmatmul.mubr.bf16.gmra.mrb[0].mxu0 %v353
    %v1982 = vpop.f32.mrb[0].mxu0
    %v1983 = vadd.f32 %v1790, %v1982
    %v1984 = vpop.f32.mrb[0].mxu0
    %v1985 = vadd.f32 %v1792, %v1984
    %v1986 = vpop.f32.mrb[0].mxu0
    %v1987 = vadd.f32 %v1794, %v1986
    %v1988 = vpop.f32.mrb[0].mxu0
    %v1989 = vadd.f32 %v1796, %v1988
    %1990 = vdwg.mxu0
    %1991 = vmatprep.subr.bf16.mxu0 %v1293
    %1992 = vmatpush1.bf16.msra.mxu0 %v1292
    %1993 = vmatprep.subr.bf16.mxu0 %v1297
    %1994 = vmatpush1.bf16.msra.mxu0 %v1296
    %1995 = vmatprep.subr.bf16.mxu0 %v1301
    %1996 = vmatpush1.bf16.msra.mxu0 %v1300
    %1997 = vmatprep.subr.bf16.mxu0 %v1305
    %1998 = vmatpush1.bf16.msra.mxu0 %v1304
    %1999 = vmatprep.subr.bf16.mxu0 %v1309
    %2000 = vmatpush1.bf16.msra.mxu0 %v1308
    %2001 = vmatprep.subr.bf16.mxu0 %v1313
    %2002 = vmatpush1.bf16.msra.mxu0 %v1312
    %2003 = vmatprep.subr.bf16.mxu0 %v1317
    %2004 = vmatpush1.bf16.msra.mxu0 %v1316
    %2005 = vmatprep.subr.bf16.mxu0 %v1321
    %2006 = vmatpush1.bf16.msra.mxu0 %v1320
    %2007 = vmatprep.subr.bf16.mxu0 %v1325
    %2008 = vmatpush1.bf16.msra.mxu0 %v1324
    %2009 = vmatprep.subr.bf16.mxu0 %v1329
    %2010 = vmatpush1.bf16.msra.mxu0 %v1328
    %2011 = vmatprep.subr.bf16.mxu0 %v1333
    %2012 = vmatpush1.bf16.msra.mxu0 %v1332
    %2013 = vmatprep.subr.bf16.mxu0 %v1337
    %2014 = vmatpush1.bf16.msra.mxu0 %v1336
    %2015 = vmatprep.subr.bf16.mxu0 %v1341
    %2016 = vmatpush1.bf16.msra.mxu0 %v1340
    %2017 = vmatprep.subr.bf16.mxu0 %v1345
    %2018 = vmatpush1.bf16.msra.mxu0 %v1344
    %2019 = vmatprep.subr.bf16.mxu0 %v1349
    %2020 = vmatpush1.bf16.msra.mxu0 %v1348
    %2021 = vmatprep.subr.bf16.mxu0 %v1353
    %2022 = vmatpush1.bf16.msra.mxu0 %v1352
    %2023 = vmatprep.mubr.bf16.mxu0 %v251
    %2024 = vmatmul.mubr.bf16.gmra.mrb[0].mxu0 %v250
    %v2025 = vpop.f32.mrb[0].mxu0
    %v2026 = vadd.f32 %v1833, %v2025
    %v2027 = vpop.f32.mrb[0].mxu0
    %v2028 = vadd.f32 %v1835, %v2027
    %v2029 = vpop.f32.mrb[0].mxu0
    %v2030 = vadd.f32 %v1837, %v2029
    %v2031 = vpop.f32.mrb[0].mxu0
    %v2032 = vadd.f32 %v1839, %v2031
    %2033 = vmatprep.mubr.bf16.mxu0 %v258
    %2034 = vmatmul.mubr.bf16.gmra.mrb[0].mxu0 %v257
    %v2035 = vpop.f32.mrb[0].mxu0
    %v2036 = vadd.f32 %v1843, %v2035
    %v2037 = vpop.f32.mrb[0].mxu0
    %v2038 = vadd.f32 %v1845, %v2037
    %v2039 = vpop.f32.mrb[0].mxu0
    %v2040 = vadd.f32 %v1847, %v2039
    %v2041 = vpop.f32.mrb[0].mxu0
    %v2042 = vadd.f32 %v1849, %v2041
    %2043 = vmatprep.mubr.bf16.mxu0 %v265
    %2044 = vmatmul.mubr.bf16.gmra.mrb[0].mxu0 %v264
    %v2045 = vpop.f32.mrb[0].mxu0
    %v2046 = vadd.f32 %v1853, %v2045
    %v2047 = vpop.f32.mrb[0].mxu0
    %v2048 = vadd.f32 %v1855, %v2047
    %v2049 = vpop.f32.mrb[0].mxu0
    %v2050 = vadd.f32 %v1857, %v2049
    %v2051 = vpop.f32.mrb[0].mxu0
    %v2052 = vadd.f32 %v1859, %v2051
    %2053 = vmatprep.mubr.bf16.mxu0 %v272
    %2054 = vmatmul.mubr.bf16.gmra.mrb[0].mxu0 %v271
    %v2055 = vpop.f32.mrb[0].mxu0
    %v2056 = vadd.f32 %v1863, %v2055
    %v2057 = vpop.f32.mrb[0].mxu0
    %v2058 = vadd.f32 %v1865, %v2057
    %v2059 = vpop.f32.mrb[0].mxu0
    %v2060 = vadd.f32 %v1867, %v2059
    %v2061 = vpop.f32.mrb[0].mxu0
    %v2062 = vadd.f32 %v1869, %v2061
    %2063 = vmatprep.mubr.bf16.mxu0 %v279
    %2064 = vmatmul.mubr.bf16.gmra.mrb[0].mxu0 %v278
    %v2065 = vpop.f32.mrb[0].mxu0
    %v2066 = vadd.f32 %v1873, %v2065
    %v2067 = vpop.f32.mrb[0].mxu0
    %v2068 = vadd.f32 %v1875, %v2067
    %v2069 = vpop.f32.mrb[0].mxu0
    %v2070 = vadd.f32 %v1877, %v2069
    %v2071 = vpop.f32.mrb[0].mxu0
    %v2072 = vadd.f32 %v1879, %v2071
    %2073 = vmatprep.mubr.bf16.mxu0 %v286
    %2074 = vmatmul.mubr.bf16.gmra.mrb[0].mxu0 %v285
    %v2075 = vpop.f32.mrb[0].mxu0
    %v2076 = vadd.f32 %v1883, %v2075
    %v2077 = vpop.f32.mrb[0].mxu0
    %v2078 = vadd.f32 %v1885, %v2077
    %v2079 = vpop.f32.mrb[0].mxu0
    %v2080 = vadd.f32 %v1887, %v2079
    %v2081 = vpop.f32.mrb[0].mxu0
    %v2082 = vadd.f32 %v1889, %v2081
    %2083 = vmatprep.mubr.bf16.mxu0 %v293
    %2084 = vmatmul.mubr.bf16.gmra.mrb[0].mxu0 %v292
    %v2085 = vpop.f32.mrb[0].mxu0
    %v2086 = vadd.f32 %v1893, %v2085
    %v2087 = vpop.f32.mrb[0].mxu0
    %v2088 = vadd.f32 %v1895, %v2087
    %v2089 = vpop.f32.mrb[0].mxu0
    %v2090 = vadd.f32 %v1897, %v2089
    %v2091 = vpop.f32.mrb[0].mxu0
    %v2092 = vadd.f32 %v1899, %v2091
    %2093 = vmatprep.mubr.bf16.mxu0 %v300
    %2094 = vmatmul.mubr.bf16.gmra.mrb[0].mxu0 %v299
    %v2095 = vpop.f32.mrb[0].mxu0
    %v2096 = vadd.f32 %v1903, %v2095
    %v2097 = vpop.f32.mrb[0].mxu0
    %v2098 = vadd.f32 %v1905, %v2097
    %v2099 = vpop.f32.mrb[0].mxu0
    %v2100 = vadd.f32 %v1907, %v2099
    %v2101 = vpop.f32.mrb[0].mxu0
    %v2102 = vadd.f32 %v1909, %v2101
    %2103 = vmatprep.mubr.bf16.mxu0 %v307
    %2104 = vmatmul.mubr.bf16.gmra.mrb[0].mxu0 %v306
    %v2105 = vpop.f32.mrb[0].mxu0
    %v2106 = vadd.f32 %v1913, %v2105
    %v2107 = vpop.f32.mrb[0].mxu0
    %v2108 = vadd.f32 %v1915, %v2107
    %v2109 = vpop.f32.mrb[0].mxu0
    %v2110 = vadd.f32 %v1917, %v2109
    %v2111 = vpop.f32.mrb[0].mxu0
    %v2112 = vadd.f32 %v1919, %v2111
    %2113 = vmatprep.mubr.bf16.mxu0 %v314
    %2114 = vmatmul.mubr.bf16.gmra.mrb[0].mxu0 %v313
    %v2115 = vpop.f32.mrb[0].mxu0
    %v2116 = vadd.f32 %v1923, %v2115
    %v2117 = vpop.f32.mrb[0].mxu0
    %v2118 = vadd.f32 %v1925, %v2117
    %v2119 = vpop.f32.mrb[0].mxu0
    %v2120 = vadd.f32 %v1927, %v2119
    %v2121 = vpop.f32.mrb[0].mxu0
    %v2122 = vadd.f32 %v1929, %v2121
    %2123 = vmatprep.mubr.bf16.mxu0 %v321
    %2124 = vmatmul.mubr.bf16.gmra.mrb[0].mxu0 %v320
    %v2125 = vpop.f32.mrb[0].mxu0
    %v2126 = vadd.f32 %v1933, %v2125
    %v2127 = vpop.f32.mrb[0].mxu0
    %v2128 = vadd.f32 %v1935, %v2127
    %v2129 = vpop.f32.mrb[0].mxu0
    %v2130 = vadd.f32 %v1937, %v2129
    %v2131 = vpop.f32.mrb[0].mxu0
    %v2132 = vadd.f32 %v1939, %v2131
    %2133 = vmatprep.mubr.bf16.mxu0 %v328
    %2134 = vmatmul.mubr.bf16.gmra.mrb[0].mxu0 %v327
    %v2135 = vpop.f32.mrb[0].mxu0
    %v2136 = vadd.f32 %v1943, %v2135
    %v2137 = vpop.f32.mrb[0].mxu0
    %v2138 = vadd.f32 %v1945, %v2137
    %v2139 = vpop.f32.mrb[0].mxu0
    %v2140 = vadd.f32 %v1947, %v2139
    %v2141 = vpop.f32.mrb[0].mxu0
    %v2142 = vadd.f32 %v1949, %v2141
    %2143 = vmatprep.mubr.bf16.mxu0 %v335
    %2144 = vmatmul.mubr.bf16.gmra.mrb[0].mxu0 %v334
    %v2145 = vpop.f32.mrb[0].mxu0
    %v2146 = vadd.f32 %v1953, %v2145
    %v2147 = vpop.f32.mrb[0].mxu0
    %v2148 = vadd.f32 %v1955, %v2147
    %v2149 = vpop.f32.mrb[0].mxu0
    %v2150 = vadd.f32 %v1957, %v2149
    %v2151 = vpop.f32.mrb[0].mxu0
    %v2152 = vadd.f32 %v1959, %v2151
    %2153 = vmatprep.mubr.bf16.mxu0 %v342
    %2154 = vmatmul.mubr.bf16.gmra.mrb[0].mxu0 %v341
    %v2155 = vpop.f32.mrb[0].mxu0
    %v2156 = vadd.f32 %v1963, %v2155
    %v2157 = vpop.f32.mrb[0].mxu0
    %v2158 = vadd.f32 %v1965, %v2157
    %v2159 = vpop.f32.mrb[0].mxu0
    %v2160 = vadd.f32 %v1967, %v2159
    %v2161 = vpop.f32.mrb[0].mxu0
    %v2162 = vadd.f32 %v1969, %v2161
    %2163 = vmatprep.mubr.bf16.mxu0 %v349
    %2164 = vmatmul.mubr.bf16.gmra.mrb[0].mxu0 %v348
    %v2165 = vpop.f32.mrb[0].mxu0
    %v2166 = vadd.f32 %v1973, %v2165
    %v2167 = vpop.f32.mrb[0].mxu0
    %v2168 = vadd.f32 %v1975, %v2167
    %v2169 = vpop.f32.mrb[0].mxu0
    %v2170 = vadd.f32 %v1977, %v2169
    %v2171 = vpop.f32.mrb[0].mxu0
    %v2172 = vadd.f32 %v1979, %v2171
    %2173 = vmatprep.mubr.bf16.mxu0 %v356
    %2174 = vmatmul.mubr.bf16.gmra.mrb[0].mxu0 %v355
    %v2175 = vpop.f32.mrb[0].mxu0
    %v2176 = vadd.f32 %v1983, %v2175
    %v2177 = vpop.f32.mrb[0].mxu0
    %v2178 = vadd.f32 %v1985, %v2177
    %v2179 = vpop.f32.mrb[0].mxu0
    %v2180 = vadd.f32 %v1987, %v2179
    %v2181 = vpop.f32.mrb[0].mxu0
    %v2182 = vadd.f32 %v1989, %v2181
    %2183 = vdwg.mxu0
    %2184 = vmatprep.subr.bf16.mxu0 %v1357
    %2185 = vmatpush1.bf16.msra.mxu0 %v1356
    %2186 = vmatprep.subr.bf16.mxu0 0
    %2187 = vmatpush1.bf16.msra.mxu0 0
    %2188 = vmatprep.subr.bf16.mxu0 0
    %2189 = vmatpush1.bf16.msra.mxu0 0
    %2190 = vmatprep.subr.bf16.mxu0 0
    %2191 = vmatpush1.bf16.msra.mxu0 0
    %2192 = vmatprep.subr.bf16.mxu0 0
    %2193 = vmatpush1.bf16.msra.mxu0 0
    %2194 = vmatprep.subr.bf16.mxu0 0
    %2195 = vmatpush1.bf16.msra.mxu0 0
    %2196 = vmatprep.subr.bf16.mxu0 0
    %2197 = vmatpush1.bf16.msra.mxu0 0
    %2198 = vmatprep.subr.bf16.mxu0 0
    %2199 = vmatpush1.bf16.msra.mxu0 0
    %2200 = vmatprep.subr.bf16.mxu0 0
    %2201 = vmatpush1.bf16.msra.mxu0 0
    %2202 = vmatprep.subr.bf16.mxu0 0
    %2203 = vmatpush1.bf16.msra.mxu0 0
    %2204 = vmatprep.subr.bf16.mxu0 0
    %2205 = vmatpush1.bf16.msra.mxu0 0
    %2206 = vmatprep.subr.bf16.mxu0 0
    %2207 = vmatpush1.bf16.msra.mxu0 0
    %2208 = vmatprep.subr.bf16.mxu0 0
    %2209 = vmatpush1.bf16.msra.mxu0 0
    %2210 = vmatprep.subr.bf16.mxu0 0
    %2211 = vmatpush1.bf16.msra.mxu0 0
    %2212 = vmatprep.subr.bf16.mxu0 0
    %2213 = vmatpush1.bf16.msra.mxu0 0
    %2214 = vmatprep.subr.bf16.mxu0 0
    %2215 = vmatpush1.bf16.msra.mxu0 0
    %2216 = vmatprep.mubr.bf16.mxu0 0
    %2217 = vmatmul.mubr.bf16.gmra.mrb[0].mxu0 %v1558
    %v2218 = vpop.f32.mrb[0].mxu0
    %v2219 = vadd.f32 %v2026, %v2218
    %v2220 = vpop.f32.mrb[0].mxu0
    %v2221 = vadd.f32 %v2028, %v2220
    %v2222 = vpop.f32.mrb[0].mxu0
    %v2223 = vadd.f32 %v2030, %v2222
    %v2224 = vpop.f32.mrb[0].mxu0
    %v2225 = vadd.f32 %v2032, %v2224
    %2226 = vmatprep.mubr.bf16.mxu0 0
    %2227 = vmatmul.mubr.bf16.gmra.mrb[0].mxu0 %v1561
    %v2228 = vpop.f32.mrb[0].mxu0
    %v2229 = vadd.f32 %v2036, %v2228
    %v2230 = vpop.f32.mrb[0].mxu0
    %v2231 = vadd.f32 %v2038, %v2230
    %v2232 = vpop.f32.mrb[0].mxu0
    %v2233 = vadd.f32 %v2040, %v2232
    %v2234 = vpop.f32.mrb[0].mxu0
    %v2235 = vadd.f32 %v2042, %v2234
    %2236 = vmatprep.mubr.bf16.mxu0 0
    %2237 = vmatmul.mubr.bf16.gmra.mrb[0].mxu0 %v1564
    %v2238 = vpop.f32.mrb[0].mxu0
    %v2239 = vadd.f32 %v2046, %v2238
    %v2240 = vpop.f32.mrb[0].mxu0
    %v2241 = vadd.f32 %v2048, %v2240
    %v2242 = vpop.f32.mrb[0].mxu0
    %v2243 = vadd.f32 %v2050, %v2242
    %v2244 = vpop.f32.mrb[0].mxu0
    %v2245 = vadd.f32 %v2052, %v2244
    %2246 = vmatprep.mubr.bf16.mxu0 0
    %2247 = vmatmul.mubr.bf16.gmra.mrb[0].mxu0 %v1567
    %v2248 = vpop.f32.mrb[0].mxu0
    %v2249 = vadd.f32 %v2056, %v2248
    %v2250 = vpop.f32.mrb[0].mxu0
    %v2251 = vadd.f32 %v2058, %v2250
    %v2252 = vpop.f32.mrb[0].mxu0
    %v2253 = vadd.f32 %v2060, %v2252
    %v2254 = vpop.f32.mrb[0].mxu0
    %v2255 = vadd.f32 %v2062, %v2254
    %2256 = vmatprep.mubr.bf16.mxu0 0
    %2257 = vmatmul.mubr.bf16.gmra.mrb[0].mxu0 %v1570
    %v2258 = vpop.f32.mrb[0].mxu0
    %v2259 = vadd.f32 %v2066, %v2258
    %v2260 = vpop.f32.mrb[0].mxu0
    %v2261 = vadd.f32 %v2068, %v2260
    %v2262 = vpop.f32.mrb[0].mxu0
    %v2263 = vadd.f32 %v2070, %v2262
    %v2264 = vpop.f32.mrb[0].mxu0
    %v2265 = vadd.f32 %v2072, %v2264
    %2266 = vmatprep.mubr.bf16.mxu0 0
    %2267 = vmatmul.mubr.bf16.gmra.mrb[0].mxu0 %v1573
    %v2268 = vpop.f32.mrb[0].mxu0
    %v2269 = vadd.f32 %v2076, %v2268
    %v2270 = vpop.f32.mrb[0].mxu0
    %v2271 = vadd.f32 %v2078, %v2270
    %v2272 = vpop.f32.mrb[0].mxu0
    %v2273 = vadd.f32 %v2080, %v2272
    %v2274 = vpop.f32.mrb[0].mxu0
    %v2275 = vadd.f32 %v2082, %v2274
    %2276 = vmatprep.mubr.bf16.mxu0 0
    %2277 = vmatmul.mubr.bf16.gmra.mrb[0].mxu0 %v1576
    %v2278 = vpop.f32.mrb[0].mxu0
    %v2279 = vadd.f32 %v2086, %v2278
    %v2280 = vpop.f32.mrb[0].mxu0
    %v2281 = vadd.f32 %v2088, %v2280
    %v2282 = vpop.f32.mrb[0].mxu0
    %v2283 = vadd.f32 %v2090, %v2282
    %v2284 = vpop.f32.mrb[0].mxu0
    %v2285 = vadd.f32 %v2092, %v2284
    %2286 = vmatprep.mubr.bf16.mxu0 0
    %2287 = vmatmul.mubr.bf16.gmra.mrb[0].mxu0 %v1579
    %v2288 = vpop.f32.mrb[0].mxu0
    %v2289 = vadd.f32 %v2096, %v2288
    %v2290 = vpop.f32.mrb[0].mxu0
    %v2291 = vadd.f32 %v2098, %v2290
    %v2292 = vpop.f32.mrb[0].mxu0
    %v2293 = vadd.f32 %v2100, %v2292
    %v2294 = vpop.f32.mrb[0].mxu0
    %v2295 = vadd.f32 %v2102, %v2294
    %2296 = vmatprep.mubr.bf16.mxu0 0
    %2297 = vmatmul.mubr.bf16.gmra.mrb[0].mxu0 %v1582
    %v2298 = vpop.f32.mrb[0].mxu0
    %v2299 = vadd.f32 %v2106, %v2298
    %v2300 = vpop.f32.mrb[0].mxu0
    %v2301 = vadd.f32 %v2108, %v2300
    %v2302 = vpop.f32.mrb[0].mxu0
    %v2303 = vadd.f32 %v2110, %v2302
    %v2304 = vpop.f32.mrb[0].mxu0
    %v2305 = vadd.f32 %v2112, %v2304
    %2306 = vmatprep.mubr.bf16.mxu0 0
    %2307 = vmatmul.mubr.bf16.gmra.mrb[0].mxu0 %v1585
    %v2308 = vpop.f32.mrb[0].mxu0
    %v2309 = vadd.f32 %v2116, %v2308
    %v2310 = vpop.f32.mrb[0].mxu0
    %v2311 = vadd.f32 %v2118, %v2310
    %v2312 = vpop.f32.mrb[0].mxu0
    %v2313 = vadd.f32 %v2120, %v2312
    %v2314 = vpop.f32.mrb[0].mxu0
    %v2315 = vadd.f32 %v2122, %v2314
    %2316 = vmatprep.mubr.bf16.mxu0 0
    %2317 = vmatmul.mubr.bf16.gmra.mrb[0].mxu0 %v1588
    %v2318 = vpop.f32.mrb[0].mxu0
    %v2319 = vadd.f32 %v2126, %v2318
    %v2320 = vpop.f32.mrb[0].mxu0
    %v2321 = vadd.f32 %v2128, %v2320
    %v2322 = vpop.f32.mrb[0].mxu0
    %v2323 = vadd.f32 %v2130, %v2322
    %v2324 = vpop.f32.mrb[0].mxu0
    %v2325 = vadd.f32 %v2132, %v2324
    %2326 = vmatprep.mubr.bf16.mxu0 0
    %2327 = vmatmul.mubr.bf16.gmra.mrb[0].mxu0 %v1591
    %v2328 = vpop.f32.mrb[0].mxu0
    %v2329 = vadd.f32 %v2136, %v2328
    %v2330 = vpop.f32.mrb[0].mxu0
    %v2331 = vadd.f32 %v2138, %v2330
    %v2332 = vpop.f32.mrb[0].mxu0
    %v2333 = vadd.f32 %v2140, %v2332
    %v2334 = vpop.f32.mrb[0].mxu0
    %v2335 = vadd.f32 %v2142, %v2334
    %2336 = vmatprep.mubr.bf16.mxu0 0
    %2337 = vmatmul.mubr.bf16.gmra.mrb[0].mxu0 %v1594
    %v2338 = vpop.f32.mrb[0].mxu0
    %v2339 = vadd.f32 %v2146, %v2338
    %v2340 = vpop.f32.mrb[0].mxu0
    %v2341 = vadd.f32 %v2148, %v2340
    %v2342 = vpop.f32.mrb[0].mxu0
    %v2343 = vadd.f32 %v2150, %v2342
    %v2344 = vpop.f32.mrb[0].mxu0
    %v2345 = vadd.f32 %v2152, %v2344
    %2346 = vmatprep.mubr.bf16.mxu0 0
    %2347 = vmatmul.mubr.bf16.gmra.mrb[0].mxu0 %v1597
    %v2348 = vpop.f32.mrb[0].mxu0
    %v2349 = vadd.f32 %v2156, %v2348
    %v2350 = vpop.f32.mrb[0].mxu0
    %v2351 = vadd.f32 %v2158, %v2350
    %v2352 = vpop.f32.mrb[0].mxu0
    %v2353 = vadd.f32 %v2160, %v2352
    %v2354 = vpop.f32.mrb[0].mxu0
    %v2355 = vadd.f32 %v2162, %v2354
    %2356 = vmatprep.mubr.bf16.mxu0 0
    %2357 = vmatmul.mubr.bf16.gmra.mrb[0].mxu0 %v1600
    %v2358 = vpop.f32.mrb[0].mxu0
    %v2359 = vadd.f32 %v2166, %v2358
    %v2360 = vpop.f32.mrb[0].mxu0
    %v2361 = vadd.f32 %v2168, %v2360
    %v2362 = vpop.f32.mrb[0].mxu0
    %v2363 = vadd.f32 %v2170, %v2362
    %v2364 = vpop.f32.mrb[0].mxu0
    %v2365 = vadd.f32 %v2172, %v2364
    %2366 = vmatprep.mubr.bf16.mxu0 0
    %2367 = vmatmul.mubr.bf16.gmra.mrb[0].mxu0 %v1603
    %v2368 = vpop.f32.mrb[0].mxu0
    %v2369 = vadd.f32 %v2176, %v2368
    %v2370 = vpop.f32.mrb[0].mxu0
    %v2371 = vadd.f32 %v2178, %v2370
    %v2372 = vpop.f32.mrb[0].mxu0
    %v2373 = vadd.f32 %v2180, %v2372
    %v2374 = vpop.f32.mrb[0].mxu0
    %v2375 = vadd.f32 %v2182, %v2374
    %2376 = vdwg.mxu0
    %2377 = vmatprep.subr.bf16.mxu0 %v1167
    %2378 = vmatpush1.bf16.msra.mxu0 %v1166
    %2379 = vmatprep.subr.bf16.mxu0 %v1171
    %2380 = vmatpush1.bf16.msra.mxu0 %v1170
    %2381 = vmatprep.subr.bf16.mxu0 %v1175
    %2382 = vmatpush1.bf16.msra.mxu0 %v1174
    %2383 = vmatprep.subr.bf16.mxu0 %v1179
    %2384 = vmatpush1.bf16.msra.mxu0 %v1178
    %2385 = vmatprep.subr.bf16.mxu0 %v1183
    %2386 = vmatpush1.bf16.msra.mxu0 %v1182
    %2387 = vmatprep.subr.bf16.mxu0 %v1187
    %2388 = vmatpush1.bf16.msra.mxu0 %v1186
    %2389 = vmatprep.subr.bf16.mxu0 %v1191
    %2390 = vmatpush1.bf16.msra.mxu0 %v1190
    %2391 = vmatprep.subr.bf16.mxu0 %v1195
    %2392 = vmatpush1.bf16.msra.mxu0 %v1194
    %2393 = vmatprep.subr.bf16.mxu0 %v1199
    %2394 = vmatpush1.bf16.msra.mxu0 %v1198
    %2395 = vmatprep.subr.bf16.mxu0 %v1203
    %2396 = vmatpush1.bf16.msra.mxu0 %v1202
    %2397 = vmatprep.subr.bf16.mxu0 %v1207
    %2398 = vmatpush1.bf16.msra.mxu0 %v1206
    %2399 = vmatprep.subr.bf16.mxu0 %v1211
    %2400 = vmatpush1.bf16.msra.mxu0 %v1210
    %2401 = vmatprep.subr.bf16.mxu0 %v1215
    %2402 = vmatpush1.bf16.msra.mxu0 %v1214
    %2403 = vmatprep.subr.bf16.mxu0 %v1219
    %2404 = vmatpush1.bf16.msra.mxu0 %v1218
    %2405 = vmatprep.subr.bf16.mxu0 %v1223
    %2406 = vmatpush1.bf16.msra.mxu0 %v1222
    %2407 = vmatprep.subr.bf16.mxu0 %v1227
    %2408 = vmatpush1.bf16.msra.mxu0 %v1226
    %2409 = vmatprep.mubr.bf16.mxu0 %v247
    %2410 = vmatmul.mubr.bf16.gmra.mrb[0].mxu0 %v246
    %v2411 = vpop.f32.mrb[0].mxu0
    %v2412 = vadd.f32 %v567, %v2411
    %v2413 = vpop.f32.mrb[0].mxu0
    %v2414 = vadd.f32 %v571, %v2413
    %v2415 = vpop.f32.mrb[0].mxu0
    %v2416 = vadd.f32 %v567, %v2415
    %v2417 = vpop.f32.mrb[0].mxu0
    %v2418 = vadd.f32 %v571, %v2417
    %2419 = vmatprep.mubr.bf16.mxu0 %v254
    %2420 = vmatmul.mubr.bf16.gmra.mrb[0].mxu0 %v253
    %v2421 = vpop.f32.mrb[0].mxu0
    %v2422 = vadd.f32 %v567, %v2421
    %v2423 = vpop.f32.mrb[0].mxu0
    %v2424 = vadd.f32 %v571, %v2423
    %v2425 = vpop.f32.mrb[0].mxu0
    %v2426 = vadd.f32 %v567, %v2425
    %v2427 = vpop.f32.mrb[0].mxu0
    %v2428 = vadd.f32 %v571, %v2427
    %2429 = vmatprep.mubr.bf16.mxu0 %v261
    %2430 = vmatmul.mubr.bf16.gmra.mrb[0].mxu0 %v260
    %v2431 = vpop.f32.mrb[0].mxu0
    %v2432 = vadd.f32 %v567, %v2431
    %v2433 = vpop.f32.mrb[0].mxu0
    %v2434 = vadd.f32 %v571, %v2433
    %v2435 = vpop.f32.mrb[0].mxu0
    %v2436 = vadd.f32 %v567, %v2435
    %v2437 = vpop.f32.mrb[0].mxu0
    %v2438 = vadd.f32 %v571, %v2437
    %2439 = vmatprep.mubr.bf16.mxu0 %v268
    %2440 = vmatmul.mubr.bf16.gmra.mrb[0].mxu0 %v267
    %v2441 = vpop.f32.mrb[0].mxu0
    %v2442 = vadd.f32 %v567, %v2441
    %v2443 = vpop.f32.mrb[0].mxu0
    %v2444 = vadd.f32 %v571, %v2443
    %v2445 = vpop.f32.mrb[0].mxu0
    %v2446 = vadd.f32 %v567, %v2445
    %v2447 = vpop.f32.mrb[0].mxu0
    %v2448 = vadd.f32 %v571, %v2447
    %2449 = vmatprep.mubr.bf16.mxu0 %v275
    %2450 = vmatmul.mubr.bf16.gmra.mrb[0].mxu0 %v274
    %v2451 = vpop.f32.mrb[0].mxu0
    %v2452 = vadd.f32 %v567, %v2451
    %v2453 = vpop.f32.mrb[0].mxu0
    %v2454 = vadd.f32 %v571, %v2453
    %v2455 = vpop.f32.mrb[0].mxu0
    %v2456 = vadd.f32 %v567, %v2455
    %v2457 = vpop.f32.mrb[0].mxu0
    %v2458 = vadd.f32 %v571, %v2457
    %2459 = vmatprep.mubr.bf16.mxu0 %v282
    %2460 = vmatmul.mubr.bf16.gmra.mrb[0].mxu0 %v281
    %v2461 = vpop.f32.mrb[0].mxu0
    %v2462 = vadd.f32 %v567, %v2461
    %v2463 = vpop.f32.mrb[0].mxu0
    %v2464 = vadd.f32 %v571, %v2463
    %v2465 = vpop.f32.mrb[0].mxu0
    %v2466 = vadd.f32 %v567, %v2465
    %v2467 = vpop.f32.mrb[0].mxu0
    %v2468 = vadd.f32 %v571, %v2467
    %2469 = vmatprep.mubr.bf16.mxu0 %v289
    %2470 = vmatmul.mubr.bf16.gmra.mrb[0].mxu0 %v288
    %v2471 = vpop.f32.mrb[0].mxu0
    %v2472 = vadd.f32 %v567, %v2471
    %v2473 = vpop.f32.mrb[0].mxu0
    %v2474 = vadd.f32 %v571, %v2473
    %v2475 = vpop.f32.mrb[0].mxu0
    %v2476 = vadd.f32 %v567, %v2475
    %v2477 = vpop.f32.mrb[0].mxu0
    %v2478 = vadd.f32 %v571, %v2477
    %2479 = vmatprep.mubr.bf16.mxu0 %v296
    %2480 = vmatmul.mubr.bf16.gmra.mrb[0].mxu0 %v295
    %v2481 = vpop.f32.mrb[0].mxu0
    %v2482 = vadd.f32 %v567, %v2481
    %v2483 = vpop.f32.mrb[0].mxu0
    %v2484 = vadd.f32 %v571, %v2483
    %v2485 = vpop.f32.mrb[0].mxu0
    %v2486 = vadd.f32 %v567, %v2485
    %v2487 = vpop.f32.mrb[0].mxu0
    %v2488 = vadd.f32 %v571, %v2487
    %2489 = vmatprep.mubr.bf16.mxu0 %v303
    %2490 = vmatmul.mubr.bf16.gmra.mrb[0].mxu0 %v302
    %v2491 = vpop.f32.mrb[0].mxu0
    %v2492 = vadd.f32 %v567, %v2491
    %v2493 = vpop.f32.mrb[0].mxu0
    %v2494 = vadd.f32 %v571, %v2493
    %v2495 = vpop.f32.mrb[0].mxu0
    %v2496 = vadd.f32 %v567, %v2495
    %v2497 = vpop.f32.mrb[0].mxu0
    %v2498 = vadd.f32 %v571, %v2497
    %2499 = vmatprep.mubr.bf16.mxu0 %v310
    %2500 = vmatmul.mubr.bf16.gmra.mrb[0].mxu0 %v309
    %v2501 = vpop.f32.mrb[0].mxu0
    %v2502 = vadd.f32 %v567, %v2501
    %v2503 = vpop.f32.mrb[0].mxu0
    %v2504 = vadd.f32 %v571, %v2503
    %v2505 = vpop.f32.mrb[0].mxu0
    %v2506 = vadd.f32 %v567, %v2505
    %v2507 = vpop.f32.mrb[0].mxu0
    %v2508 = vadd.f32 %v571, %v2507
    %2509 = vmatprep.mubr.bf16.mxu0 %v317
    %2510 = vmatmul.mubr.bf16.gmra.mrb[0].mxu0 %v316
    %v2511 = vpop.f32.mrb[0].mxu0
    %v2512 = vadd.f32 %v567, %v2511
    %v2513 = vpop.f32.mrb[0].mxu0
    %v2514 = vadd.f32 %v571, %v2513
    %v2515 = vpop.f32.mrb[0].mxu0
    %v2516 = vadd.f32 %v567, %v2515
    %v2517 = vpop.f32.mrb[0].mxu0
    %v2518 = vadd.f32 %v571, %v2517
    %2519 = vmatprep.mubr.bf16.mxu0 %v324
    %2520 = vmatmul.mubr.bf16.gmra.mrb[0].mxu0 %v323
    %v2521 = vpop.f32.mrb[0].mxu0
    %v2522 = vadd.f32 %v567, %v2521
    %v2523 = vpop.f32.mrb[0].mxu0
    %v2524 = vadd.f32 %v571, %v2523
    %v2525 = vpop.f32.mrb[0].mxu0
    %v2526 = vadd.f32 %v567, %v2525
    %v2527 = vpop.f32.mrb[0].mxu0
    %v2528 = vadd.f32 %v571, %v2527
    %2529 = vmatprep.mubr.bf16.mxu0 %v331
    %2530 = vmatmul.mubr.bf16.gmra.mrb[0].mxu0 %v330
    %v2531 = vpop.f32.mrb[0].mxu0
    %v2532 = vadd.f32 %v567, %v2531
    %v2533 = vpop.f32.mrb[0].mxu0
    %v2534 = vadd.f32 %v571, %v2533
    %v2535 = vpop.f32.mrb[0].mxu0
    %v2536 = vadd.f32 %v567, %v2535
    %v2537 = vpop.f32.mrb[0].mxu0
    %v2538 = vadd.f32 %v571, %v2537
    %2539 = vmatprep.mubr.bf16.mxu0 %v338
    %2540 = vmatmul.mubr.bf16.gmra.mrb[0].mxu0 %v337
    %v2541 = vpop.f32.mrb[0].mxu0
    %v2542 = vadd.f32 %v567, %v2541
    %v2543 = vpop.f32.mrb[0].mxu0
    %v2544 = vadd.f32 %v571, %v2543
    %v2545 = vpop.f32.mrb[0].mxu0
    %v2546 = vadd.f32 %v567, %v2545
    %v2547 = vpop.f32.mrb[0].mxu0
    %v2548 = vadd.f32 %v571, %v2547
    %2549 = vmatprep.mubr.bf16.mxu0 %v345
    %2550 = vmatmul.mubr.bf16.gmra.mrb[0].mxu0 %v344
    %v2551 = vpop.f32.mrb[0].mxu0
    %v2552 = vadd.f32 %v567, %v2551
    %v2553 = vpop.f32.mrb[0].mxu0
    %v2554 = vadd.f32 %v571, %v2553
    %v2555 = vpop.f32.mrb[0].mxu0
    %v2556 = vadd.f32 %v567, %v2555
    %v2557 = vpop.f32.mrb[0].mxu0
    %v2558 = vadd.f32 %v571, %v2557
    %2559 = vmatprep.mubr.bf16.mxu0 %v352
    %2560 = vmatmul.mubr.bf16.gmra.mrb[0].mxu0 %v351
    %v2561 = vpop.f32.mrb[0].mxu0
    %v2562 = vadd.f32 %v567, %v2561
    %v2563 = vpop.f32.mrb[0].mxu0
    %v2564 = vadd.f32 %v571, %v2563
    %v2565 = vpop.f32.mrb[0].mxu0
    %v2566 = vadd.f32 %v567, %v2565
    %v2567 = vpop.f32.mrb[0].mxu0
    %v2568 = vadd.f32 %v571, %v2567
    %2569 = vdwg.mxu0
    %2570 = vmatprep.subr.bf16.mxu0 %v1231
    %2571 = vmatpush1.bf16.msra.mxu0 %v1230
    %2572 = vmatprep.subr.bf16.mxu0 %v1235
    %2573 = vmatpush1.bf16.msra.mxu0 %v1234
    %2574 = vmatprep.subr.bf16.mxu0 %v1239
    %2575 = vmatpush1.bf16.msra.mxu0 %v1238
    %2576 = vmatprep.subr.bf16.mxu0 %v1243
    %2577 = vmatpush1.bf16.msra.mxu0 %v1242
    %2578 = vmatprep.subr.bf16.mxu0 %v1247
    %2579 = vmatpush1.bf16.msra.mxu0 %v1246
    %2580 = vmatprep.subr.bf16.mxu0 %v1251
    %2581 = vmatpush1.bf16.msra.mxu0 %v1250
    %2582 = vmatprep.subr.bf16.mxu0 %v1255
    %2583 = vmatpush1.bf16.msra.mxu0 %v1254
    %2584 = vmatprep.subr.bf16.mxu0 %v1259
    %2585 = vmatpush1.bf16.msra.mxu0 %v1258
    %2586 = vmatprep.subr.bf16.mxu0 %v1263
    %2587 = vmatpush1.bf16.msra.mxu0 %v1262
    %2588 = vmatprep.subr.bf16.mxu0 %v1267
    %2589 = vmatpush1.bf16.msra.mxu0 %v1266
    %2590 = vmatprep.subr.bf16.mxu0 %v1271
    %2591 = vmatpush1.bf16.msra.mxu0 %v1270
    %2592 = vmatprep.subr.bf16.mxu0 %v1275
    %2593 = vmatpush1.bf16.msra.mxu0 %v1274
    %2594 = vmatprep.subr.bf16.mxu0 %v1279
    %2595 = vmatpush1.bf16.msra.mxu0 %v1278
    %2596 = vmatprep.subr.bf16.mxu0 %v1283
    %2597 = vmatpush1.bf16.msra.mxu0 %v1282
    %2598 = vmatprep.subr.bf16.mxu0 %v1287
    %2599 = vmatpush1.bf16.msra.mxu0 %v1286
    %2600 = vmatprep.subr.bf16.mxu0 %v1291
    %2601 = vmatpush1.bf16.msra.mxu0 %v1290
    %2602 = vmatprep.mubr.bf16.mxu0 %v249
    %2603 = vmatmul.mubr.bf16.gmra.mrb[0].mxu0 %v248
    %v2604 = vpop.f32.mrb[0].mxu0
    %v2605 = vadd.f32 %v2412, %v2604
    %v2606 = vpop.f32.mrb[0].mxu0
    %v2607 = vadd.f32 %v2414, %v2606
    %v2608 = vpop.f32.mrb[0].mxu0
    %v2609 = vadd.f32 %v2416, %v2608
    %v2610 = vpop.f32.mrb[0].mxu0
    %v2611 = vadd.f32 %v2418, %v2610
    %2612 = vmatprep.mubr.bf16.mxu0 %v256
    %2613 = vmatmul.mubr.bf16.gmra.mrb[0].mxu0 %v255
    %v2614 = vpop.f32.mrb[0].mxu0
    %v2615 = vadd.f32 %v2422, %v2614
    %v2616 = vpop.f32.mrb[0].mxu0
    %v2617 = vadd.f32 %v2424, %v2616
    %v2618 = vpop.f32.mrb[0].mxu0
    %v2619 = vadd.f32 %v2426, %v2618
    %v2620 = vpop.f32.mrb[0].mxu0
    %v2621 = vadd.f32 %v2428, %v2620
    %2622 = vmatprep.mubr.bf16.mxu0 %v263
    %2623 = vmatmul.mubr.bf16.gmra.mrb[0].mxu0 %v262
    %v2624 = vpop.f32.mrb[0].mxu0
    %v2625 = vadd.f32 %v2432, %v2624
    %v2626 = vpop.f32.mrb[0].mxu0
    %v2627 = vadd.f32 %v2434, %v2626
    %v2628 = vpop.f32.mrb[0].mxu0
    %v2629 = vadd.f32 %v2436, %v2628
    %v2630 = vpop.f32.mrb[0].mxu0
    %v2631 = vadd.f32 %v2438, %v2630
    %2632 = vmatprep.mubr.bf16.mxu0 %v270
    %2633 = vmatmul.mubr.bf16.gmra.mrb[0].mxu0 %v269
    %v2634 = vpop.f32.mrb[0].mxu0
    %v2635 = vadd.f32 %v2442, %v2634
    %v2636 = vpop.f32.mrb[0].mxu0
    %v2637 = vadd.f32 %v2444, %v2636
    %v2638 = vpop.f32.mrb[0].mxu0
    %v2639 = vadd.f32 %v2446, %v2638
    %v2640 = vpop.f32.mrb[0].mxu0
    %v2641 = vadd.f32 %v2448, %v2640
    %2642 = vmatprep.mubr.bf16.mxu0 %v277
    %2643 = vmatmul.mubr.bf16.gmra.mrb[0].mxu0 %v276
    %v2644 = vpop.f32.mrb[0].mxu0
    %v2645 = vadd.f32 %v2452, %v2644
    %v2646 = vpop.f32.mrb[0].mxu0
    %v2647 = vadd.f32 %v2454, %v2646
    %v2648 = vpop.f32.mrb[0].mxu0
    %v2649 = vadd.f32 %v2456, %v2648
    %v2650 = vpop.f32.mrb[0].mxu0
    %v2651 = vadd.f32 %v2458, %v2650
    %2652 = vmatprep.mubr.bf16.mxu0 %v284
    %2653 = vmatmul.mubr.bf16.gmra.mrb[0].mxu0 %v283
    %v2654 = vpop.f32.mrb[0].mxu0
    %v2655 = vadd.f32 %v2462, %v2654
    %v2656 = vpop.f32.mrb[0].mxu0
    %v2657 = vadd.f32 %v2464, %v2656
    %v2658 = vpop.f32.mrb[0].mxu0
    %v2659 = vadd.f32 %v2466, %v2658
    %v2660 = vpop.f32.mrb[0].mxu0
    %v2661 = vadd.f32 %v2468, %v2660
    %2662 = vmatprep.mubr.bf16.mxu0 %v291
    %2663 = vmatmul.mubr.bf16.gmra.mrb[0].mxu0 %v290
    %v2664 = vpop.f32.mrb[0].mxu0
    %v2665 = vadd.f32 %v2472, %v2664
    %v2666 = vpop.f32.mrb[0].mxu0
    %v2667 = vadd.f32 %v2474, %v2666
    %v2668 = vpop.f32.mrb[0].mxu0
    %v2669 = vadd.f32 %v2476, %v2668
    %v2670 = vpop.f32.mrb[0].mxu0
    %v2671 = vadd.f32 %v2478, %v2670
    %2672 = vmatprep.mubr.bf16.mxu0 %v298
    %2673 = vmatmul.mubr.bf16.gmra.mrb[0].mxu0 %v297
    %v2674 = vpop.f32.mrb[0].mxu0
    %v2675 = vadd.f32 %v2482, %v2674
    %v2676 = vpop.f32.mrb[0].mxu0
    %v2677 = vadd.f32 %v2484, %v2676
    %v2678 = vpop.f32.mrb[0].mxu0
    %v2679 = vadd.f32 %v2486, %v2678
    %v2680 = vpop.f32.mrb[0].mxu0
    %v2681 = vadd.f32 %v2488, %v2680
    %2682 = vmatprep.mubr.bf16.mxu0 %v305
    %2683 = vmatmul.mubr.bf16.gmra.mrb[0].mxu0 %v304
    %v2684 = vpop.f32.mrb[0].mxu0
    %v2685 = vadd.f32 %v2492, %v2684
    %v2686 = vpop.f32.mrb[0].mxu0
    %v2687 = vadd.f32 %v2494, %v2686
    %v2688 = vpop.f32.mrb[0].mxu0
    %v2689 = vadd.f32 %v2496, %v2688
    %v2690 = vpop.f32.mrb[0].mxu0
    %v2691 = vadd.f32 %v2498, %v2690
    %2692 = vmatprep.mubr.bf16.mxu0 %v312
    %2693 = vmatmul.mubr.bf16.gmra.mrb[0].mxu0 %v311
    %v2694 = vpop.f32.mrb[0].mxu0
    %v2695 = vadd.f32 %v2502, %v2694
    %v2696 = vpop.f32.mrb[0].mxu0
    %v2697 = vadd.f32 %v2504, %v2696
    %v2698 = vpop.f32.mrb[0].mxu0
    %v2699 = vadd.f32 %v2506, %v2698
    %v2700 = vpop.f32.mrb[0].mxu0
    %v2701 = vadd.f32 %v2508, %v2700
    %2702 = vmatprep.mubr.bf16.mxu0 %v319
    %2703 = vmatmul.mubr.bf16.gmra.mrb[0].mxu0 %v318
    %v2704 = vpop.f32.mrb[0].mxu0
    %v2705 = vadd.f32 %v2512, %v2704
    %v2706 = vpop.f32.mrb[0].mxu0
    %v2707 = vadd.f32 %v2514, %v2706
    %v2708 = vpop.f32.mrb[0].mxu0
    %v2709 = vadd.f32 %v2516, %v2708
    %v2710 = vpop.f32.mrb[0].mxu0
    %v2711 = vadd.f32 %v2518, %v2710
    %2712 = vmatprep.mubr.bf16.mxu0 %v326
    %2713 = vmatmul.mubr.bf16.gmra.mrb[0].mxu0 %v325
    %v2714 = vpop.f32.mrb[0].mxu0
    %v2715 = vadd.f32 %v2522, %v2714
    %v2716 = vpop.f32.mrb[0].mxu0
    %v2717 = vadd.f32 %v2524, %v2716
    %v2718 = vpop.f32.mrb[0].mxu0
    %v2719 = vadd.f32 %v2526, %v2718
    %v2720 = vpop.f32.mrb[0].mxu0
    %v2721 = vadd.f32 %v2528, %v2720
    %2722 = vmatprep.mubr.bf16.mxu0 %v333
    %2723 = vmatmul.mubr.bf16.gmra.mrb[0].mxu0 %v332
    %v2724 = vpop.f32.mrb[0].mxu0
    %v2725 = vadd.f32 %v2532, %v2724
    %v2726 = vpop.f32.mrb[0].mxu0
    %v2727 = vadd.f32 %v2534, %v2726
    %v2728 = vpop.f32.mrb[0].mxu0
    %v2729 = vadd.f32 %v2536, %v2728
    %v2730 = vpop.f32.mrb[0].mxu0
    %v2731 = vadd.f32 %v2538, %v2730
    %2732 = vmatprep.mubr.bf16.mxu0 %v340
    %2733 = vmatmul.mubr.bf16.gmra.mrb[0].mxu0 %v339
    %v2734 = vpop.f32.mrb[0].mxu0
    %v2735 = vadd.f32 %v2542, %v2734
    %v2736 = vpop.f32.mrb[0].mxu0
    %v2737 = vadd.f32 %v2544, %v2736
    %v2738 = vpop.f32.mrb[0].mxu0
    %v2739 = vadd.f32 %v2546, %v2738
    %v2740 = vpop.f32.mrb[0].mxu0
    %v2741 = vadd.f32 %v2548, %v2740
    %2742 = vmatprep.mubr.bf16.mxu0 %v347
    %2743 = vmatmul.mubr.bf16.gmra.mrb[0].mxu0 %v346
    %v2744 = vpop.f32.mrb[0].mxu0
    %v2745 = vadd.f32 %v2552, %v2744
    %v2746 = vpop.f32.mrb[0].mxu0
    %v2747 = vadd.f32 %v2554, %v2746
    %v2748 = vpop.f32.mrb[0].mxu0
    %v2749 = vadd.f32 %v2556, %v2748
    %v2750 = vpop.f32.mrb[0].mxu0
    %v2751 = vadd.f32 %v2558, %v2750
    %2752 = vmatprep.mubr.bf16.mxu0 %v354
    %2753 = vmatmul.mubr.bf16.gmra.mrb[0].mxu0 %v353
    %v2754 = vpop.f32.mrb[0].mxu0
    %v2755 = vadd.f32 %v2562, %v2754
    %v2756 = vpop.f32.mrb[0].mxu0
    %v2757 = vadd.f32 %v2564, %v2756
    %v2758 = vpop.f32.mrb[0].mxu0
    %v2759 = vadd.f32 %v2566, %v2758
    %v2760 = vpop.f32.mrb[0].mxu0
    %v2761 = vadd.f32 %v2568, %v2760
    %2762 = vdwg.mxu0
    %2763 = vmatprep.subr.bf16.mxu0 %v1295
    %2764 = vmatpush1.bf16.msra.mxu0 %v1294
    %2765 = vmatprep.subr.bf16.mxu0 %v1299
    %2766 = vmatpush1.bf16.msra.mxu0 %v1298
    %2767 = vmatprep.subr.bf16.mxu0 %v1303
    %2768 = vmatpush1.bf16.msra.mxu0 %v1302
    %2769 = vmatprep.subr.bf16.mxu0 %v1307
    %2770 = vmatpush1.bf16.msra.mxu0 %v1306
    %2771 = vmatprep.subr.bf16.mxu0 %v1311
    %2772 = vmatpush1.bf16.msra.mxu0 %v1310
    %2773 = vmatprep.subr.bf16.mxu0 %v1315
    %2774 = vmatpush1.bf16.msra.mxu0 %v1314
    %2775 = vmatprep.subr.bf16.mxu0 %v1319
    %2776 = vmatpush1.bf16.msra.mxu0 %v1318
    %2777 = vmatprep.subr.bf16.mxu0 %v1323
    %2778 = vmatpush1.bf16.msra.mxu0 %v1322
    %2779 = vmatprep.subr.bf16.mxu0 %v1327
    %2780 = vmatpush1.bf16.msra.mxu0 %v1326
    %2781 = vmatprep.subr.bf16.mxu0 %v1331
    %2782 = vmatpush1.bf16.msra.mxu0 %v1330
    %2783 = vmatprep.subr.bf16.mxu0 %v1335
    %2784 = vmatpush1.bf16.msra.mxu0 %v1334
    %2785 = vmatprep.subr.bf16.mxu0 %v1339
    %2786 = vmatpush1.bf16.msra.mxu0 %v1338
    %2787 = vmatprep.subr.bf16.mxu0 %v1343
    %2788 = vmatpush1.bf16.msra.mxu0 %v1342
    %2789 = vmatprep.subr.bf16.mxu0 %v1347
    %2790 = vmatpush1.bf16.msra.mxu0 %v1346
    %2791 = vmatprep.subr.bf16.mxu0 %v1351
    %2792 = vmatpush1.bf16.msra.mxu0 %v1350
    %2793 = vmatprep.subr.bf16.mxu0 %v1355
    %2794 = vmatpush1.bf16.msra.mxu0 %v1354
    %2795 = vmatprep.mubr.bf16.mxu0 %v251
    %2796 = vmatmul.mubr.bf16.gmra.mrb[0].mxu0 %v250
    %v2797 = vpop.f32.mrb[0].mxu0
    %v2798 = vadd.f32 %v2605, %v2797
    %v2799 = vpop.f32.mrb[0].mxu0
    %v2800 = vadd.f32 %v2607, %v2799
    %v2801 = vpop.f32.mrb[0].mxu0
    %v2802 = vadd.f32 %v2609, %v2801
    %v2803 = vpop.f32.mrb[0].mxu0
    %v2804 = vadd.f32 %v2611, %v2803
    %2805 = vmatprep.mubr.bf16.mxu0 %v258
    %2806 = vmatmul.mubr.bf16.gmra.mrb[0].mxu0 %v257
    %v2807 = vpop.f32.mrb[0].mxu0
    %v2808 = vadd.f32 %v2615, %v2807
    %v2809 = vpop.f32.mrb[0].mxu0
    %v2810 = vadd.f32 %v2617, %v2809
    %v2811 = vpop.f32.mrb[0].mxu0
    %v2812 = vadd.f32 %v2619, %v2811
    %v2813 = vpop.f32.mrb[0].mxu0
    %v2814 = vadd.f32 %v2621, %v2813
    %2815 = vmatprep.mubr.bf16.mxu0 %v265
    %2816 = vmatmul.mubr.bf16.gmra.mrb[0].mxu0 %v264
    %v2817 = vpop.f32.mrb[0].mxu0
    %v2818 = vadd.f32 %v2625, %v2817
    %v2819 = vpop.f32.mrb[0].mxu0
    %v2820 = vadd.f32 %v2627, %v2819
    %v2821 = vpop.f32.mrb[0].mxu0
    %v2822 = vadd.f32 %v2629, %v2821
    %v2823 = vpop.f32.mrb[0].mxu0
    %v2824 = vadd.f32 %v2631, %v2823
    %2825 = vmatprep.mubr.bf16.mxu0 %v272
    %2826 = vmatmul.mubr.bf16.gmra.mrb[0].mxu0 %v271
    %v2827 = vpop.f32.mrb[0].mxu0
    %v2828 = vadd.f32 %v2635, %v2827
    %v2829 = vpop.f32.mrb[0].mxu0
    %v2830 = vadd.f32 %v2637, %v2829
    %v2831 = vpop.f32.mrb[0].mxu0
    %v2832 = vadd.f32 %v2639, %v2831
    %v2833 = vpop.f32.mrb[0].mxu0
    %v2834 = vadd.f32 %v2641, %v2833
    %2835 = vmatprep.mubr.bf16.mxu0 %v279
    %2836 = vmatmul.mubr.bf16.gmra.mrb[0].mxu0 %v278
    %v2837 = vpop.f32.mrb[0].mxu0
    %v2838 = vadd.f32 %v2645, %v2837
    %v2839 = vpop.f32.mrb[0].mxu0
    %v2840 = vadd.f32 %v2647, %v2839
    %v2841 = vpop.f32.mrb[0].mxu0
    %v2842 = vadd.f32 %v2649, %v2841
    %v2843 = vpop.f32.mrb[0].mxu0
    %v2844 = vadd.f32 %v2651, %v2843
    %2845 = vmatprep.mubr.bf16.mxu0 %v286
    %2846 = vmatmul.mubr.bf16.gmra.mrb[0].mxu0 %v285
    %v2847 = vpop.f32.mrb[0].mxu0
    %v2848 = vadd.f32 %v2655, %v2847
    %v2849 = vpop.f32.mrb[0].mxu0
    %v2850 = vadd.f32 %v2657, %v2849
    %v2851 = vpop.f32.mrb[0].mxu0
    %v2852 = vadd.f32 %v2659, %v2851
    %v2853 = vpop.f32.mrb[0].mxu0
    %v2854 = vadd.f32 %v2661, %v2853
    %2855 = vmatprep.mubr.bf16.mxu0 %v293
    %2856 = vmatmul.mubr.bf16.gmra.mrb[0].mxu0 %v292
    %v2857 = vpop.f32.mrb[0].mxu0
    %v2858 = vadd.f32 %v2665, %v2857
    %v2859 = vpop.f32.mrb[0].mxu0
    %v2860 = vadd.f32 %v2667, %v2859
    %v2861 = vpop.f32.mrb[0].mxu0
    %v2862 = vadd.f32 %v2669, %v2861
    %v2863 = vpop.f32.mrb[0].mxu0
    %v2864 = vadd.f32 %v2671, %v2863
    %2865 = vmatprep.mubr.bf16.mxu0 %v300
    %2866 = vmatmul.mubr.bf16.gmra.mrb[0].mxu0 %v299
    %v2867 = vpop.f32.mrb[0].mxu0
    %v2868 = vadd.f32 %v2675, %v2867
    %v2869 = vpop.f32.mrb[0].mxu0
    %v2870 = vadd.f32 %v2677, %v2869
    %v2871 = vpop.f32.mrb[0].mxu0
    %v2872 = vadd.f32 %v2679, %v2871
    %v2873 = vpop.f32.mrb[0].mxu0
    %v2874 = vadd.f32 %v2681, %v2873
    %2875 = vmatprep.mubr.bf16.mxu0 %v307
    %2876 = vmatmul.mubr.bf16.gmra.mrb[0].mxu0 %v306
    %v2877 = vpop.f32.mrb[0].mxu0
    %v2878 = vadd.f32 %v2685, %v2877
    %v2879 = vpop.f32.mrb[0].mxu0
    %v2880 = vadd.f32 %v2687, %v2879
    %v2881 = vpop.f32.mrb[0].mxu0
    %v2882 = vadd.f32 %v2689, %v2881
    %v2883 = vpop.f32.mrb[0].mxu0
    %v2884 = vadd.f32 %v2691, %v2883
    %2885 = vmatprep.mubr.bf16.mxu0 %v314
    %2886 = vmatmul.mubr.bf16.gmra.mrb[0].mxu0 %v313
    %v2887 = vpop.f32.mrb[0].mxu0
    %v2888 = vadd.f32 %v2695, %v2887
    %v2889 = vpop.f32.mrb[0].mxu0
    %v2890 = vadd.f32 %v2697, %v2889
    %v2891 = vpop.f32.mrb[0].mxu0
    %v2892 = vadd.f32 %v2699, %v2891
    %v2893 = vpop.f32.mrb[0].mxu0
    %v2894 = vadd.f32 %v2701, %v2893
    %2895 = vmatprep.mubr.bf16.mxu0 %v321
    %2896 = vmatmul.mubr.bf16.gmra.mrb[0].mxu0 %v320
    %v2897 = vpop.f32.mrb[0].mxu0
    %v2898 = vadd.f32 %v2705, %v2897
    %v2899 = vpop.f32.mrb[0].mxu0
    %v2900 = vadd.f32 %v2707, %v2899
    %v2901 = vpop.f32.mrb[0].mxu0
    %v2902 = vadd.f32 %v2709, %v2901
    %v2903 = vpop.f32.mrb[0].mxu0
    %v2904 = vadd.f32 %v2711, %v2903
    %2905 = vmatprep.mubr.bf16.mxu0 %v328
    %2906 = vmatmul.mubr.bf16.gmra.mrb[0].mxu0 %v327
    %v2907 = vpop.f32.mrb[0].mxu0
    %v2908 = vadd.f32 %v2715, %v2907
    %v2909 = vpop.f32.mrb[0].mxu0
    %v2910 = vadd.f32 %v2717, %v2909
    %v2911 = vpop.f32.mrb[0].mxu0
    %v2912 = vadd.f32 %v2719, %v2911
    %v2913 = vpop.f32.mrb[0].mxu0
    %v2914 = vadd.f32 %v2721, %v2913
    %2915 = vmatprep.mubr.bf16.mxu0 %v335
    %2916 = vmatmul.mubr.bf16.gmra.mrb[0].mxu0 %v334
    %v2917 = vpop.f32.mrb[0].mxu0
    %v2918 = vadd.f32 %v2725, %v2917
    %v2919 = vpop.f32.mrb[0].mxu0
    %v2920 = vadd.f32 %v2727, %v2919
    %v2921 = vpop.f32.mrb[0].mxu0
    %v2922 = vadd.f32 %v2729, %v2921
    %v2923 = vpop.f32.mrb[0].mxu0
    %v2924 = vadd.f32 %v2731, %v2923
    %2925 = vmatprep.mubr.bf16.mxu0 %v342
    %2926 = vmatmul.mubr.bf16.gmra.mrb[0].mxu0 %v341
    %v2927 = vpop.f32.mrb[0].mxu0
    %v2928 = vadd.f32 %v2735, %v2927
    %v2929 = vpop.f32.mrb[0].mxu0
    %v2930 = vadd.f32 %v2737, %v2929
    %v2931 = vpop.f32.mrb[0].mxu0
    %v2932 = vadd.f32 %v2739, %v2931
    %v2933 = vpop.f32.mrb[0].mxu0
    %v2934 = vadd.f32 %v2741, %v2933
    %2935 = vmatprep.mubr.bf16.mxu0 %v349
    %2936 = vmatmul.mubr.bf16.gmra.mrb[0].mxu0 %v348
    %v2937 = vpop.f32.mrb[0].mxu0
    %v2938 = vadd.f32 %v2745, %v2937
    %v2939 = vpop.f32.mrb[0].mxu0
    %v2940 = vadd.f32 %v2747, %v2939
    %v2941 = vpop.f32.mrb[0].mxu0
    %v2942 = vadd.f32 %v2749, %v2941
    %v2943 = vpop.f32.mrb[0].mxu0
    %v2944 = vadd.f32 %v2751, %v2943
    %2945 = vmatprep.mubr.bf16.mxu0 %v356
    %2946 = vmatmul.mubr.bf16.gmra.mrb[0].mxu0 %v355
    %v2947 = vpop.f32.mrb[0].mxu0
    %v2948 = vadd.f32 %v2755, %v2947
    %v2949 = vpop.f32.mrb[0].mxu0
    %v2950 = vadd.f32 %v2757, %v2949
    %v2951 = vpop.f32.mrb[0].mxu0
    %v2952 = vadd.f32 %v2759, %v2951
    %v2953 = vpop.f32.mrb[0].mxu0
    %v2954 = vadd.f32 %v2761, %v2953
    %2955 = vdwg.mxu0
    %2956 = vmatprep.subr.bf16.mxu0 %v1359
    %2957 = vmatpush1.bf16.msra.mxu0 %v1358
    %2958 = vmatprep.subr.bf16.mxu0 0
    %2959 = vmatpush1.bf16.msra.mxu0 0
    %2960 = vmatprep.subr.bf16.mxu0 0
    %2961 = vmatpush1.bf16.msra.mxu0 0
    %2962 = vmatprep.subr.bf16.mxu0 0
    %2963 = vmatpush1.bf16.msra.mxu0 0
    %2964 = vmatprep.subr.bf16.mxu0 0
    %2965 = vmatpush1.bf16.msra.mxu0 0
    %2966 = vmatprep.subr.bf16.mxu0 0
    %2967 = vmatpush1.bf16.msra.mxu0 0
    %2968 = vmatprep.subr.bf16.mxu0 0
    %2969 = vmatpush1.bf16.msra.mxu0 0
    %2970 = vmatprep.subr.bf16.mxu0 0
    %2971 = vmatpush1.bf16.msra.mxu0 0
    %2972 = vmatprep.subr.bf16.mxu0 0
    %2973 = vmatpush1.bf16.msra.mxu0 0
    %2974 = vmatprep.subr.bf16.mxu0 0
    %2975 = vmatpush1.bf16.msra.mxu0 0
    %2976 = vmatprep.subr.bf16.mxu0 0
    %2977 = vmatpush1.bf16.msra.mxu0 0
    %2978 = vmatprep.subr.bf16.mxu0 0
    %2979 = vmatpush1.bf16.msra.mxu0 0
    %2980 = vmatprep.subr.bf16.mxu0 0
    %2981 = vmatpush1.bf16.msra.mxu0 0
    %2982 = vmatprep.subr.bf16.mxu0 0
    %2983 = vmatpush1.bf16.msra.mxu0 0
    %2984 = vmatprep.subr.bf16.mxu0 0
    %2985 = vmatpush1.bf16.msra.mxu0 0
    %2986 = vmatprep.subr.bf16.mxu0 0
    %2987 = vmatpush1.bf16.msra.mxu0 0
    %2988 = vmatprep.mubr.bf16.mxu0 0
    %2989 = vmatmul.mubr.bf16.gmra.mrb[0].mxu0 %v1558
    %v2990 = vpop.f32.mrb[0].mxu0
    %v2991 = vadd.f32 %v2798, %v2990
    %v2992 = vpop.f32.mrb[0].mxu0
    %v2993 = vadd.f32 %v2800, %v2992
    %v2994 = vpop.f32.mrb[0].mxu0
    %v2995 = vadd.f32 %v2802, %v2994
    %v2996 = vpop.f32.mrb[0].mxu0
    %v2997 = vadd.f32 %v2804, %v2996
    %2998 = vmatprep.mubr.bf16.mxu0 0
    %2999 = vmatmul.mubr.bf16.gmra.mrb[0].mxu0 %v1561
    %v3000 = vpop.f32.mrb[0].mxu0
    %v3001 = vadd.f32 %v2808, %v3000
    %v3002 = vpop.f32.mrb[0].mxu0
    %v3003 = vadd.f32 %v2810, %v3002
    %v3004 = vpop.f32.mrb[0].mxu0
    %v3005 = vadd.f32 %v2812, %v3004
    %v3006 = vpop.f32.mrb[0].mxu0
    %v3007 = vadd.f32 %v2814, %v3006
    %3008 = vmatprep.mubr.bf16.mxu0 0
    %3009 = vmatmul.mubr.bf16.gmra.mrb[0].mxu0 %v1564
    %v3010 = vpop.f32.mrb[0].mxu0
    %v3011 = vadd.f32 %v2818, %v3010
    %v3012 = vpop.f32.mrb[0].mxu0
    %v3013 = vadd.f32 %v2820, %v3012
    %v3014 = vpop.f32.mrb[0].mxu0
    %v3015 = vadd.f32 %v2822, %v3014
    %v3016 = vpop.f32.mrb[0].mxu0
    %v3017 = vadd.f32 %v2824, %v3016
    %3018 = vmatprep.mubr.bf16.mxu0 0
    %3019 = vmatmul.mubr.bf16.gmra.mrb[0].mxu0 %v1567
    %v3020 = vpop.f32.mrb[0].mxu0
    %v3021 = vadd.f32 %v2828, %v3020
    %v3022 = vpop.f32.mrb[0].mxu0
    %v3023 = vadd.f32 %v2830, %v3022
    %v3024 = vpop.f32.mrb[0].mxu0
    %v3025 = vadd.f32 %v2832, %v3024
    %v3026 = vpop.f32.mrb[0].mxu0
    %v3027 = vadd.f32 %v2834, %v3026
    %3028 = vmatprep.mubr.bf16.mxu0 0
    %3029 = vmatmul.mubr.bf16.gmra.mrb[0].mxu0 %v1570
    %v3030 = vpop.f32.mrb[0].mxu0
    %v3031 = vadd.f32 %v2838, %v3030
    %v3032 = vpop.f32.mrb[0].mxu0
    %v3033 = vadd.f32 %v2840, %v3032
    %v3034 = vpop.f32.mrb[0].mxu0
    %v3035 = vadd.f32 %v2842, %v3034
    %v3036 = vpop.f32.mrb[0].mxu0
    %v3037 = vadd.f32 %v2844, %v3036
    %3038 = vmatprep.mubr.bf16.mxu0 0
    %3039 = vmatmul.mubr.bf16.gmra.mrb[0].mxu0 %v1573
    %v3040 = vpop.f32.mrb[0].mxu0
    %v3041 = vadd.f32 %v2848, %v3040
    %v3042 = vpop.f32.mrb[0].mxu0
    %v3043 = vadd.f32 %v2850, %v3042
    %v3044 = vpop.f32.mrb[0].mxu0
    %v3045 = vadd.f32 %v2852, %v3044
    %v3046 = vpop.f32.mrb[0].mxu0
    %v3047 = vadd.f32 %v2854, %v3046
    %3048 = vmatprep.mubr.bf16.mxu0 0
    %3049 = vmatmul.mubr.bf16.gmra.mrb[0].mxu0 %v1576
    %v3050 = vpop.f32.mrb[0].mxu0
    %v3051 = vadd.f32 %v2858, %v3050
    %v3052 = vpop.f32.mrb[0].mxu0
    %v3053 = vadd.f32 %v2860, %v3052
    %v3054 = vpop.f32.mrb[0].mxu0
    %v3055 = vadd.f32 %v2862, %v3054
    %v3056 = vpop.f32.mrb[0].mxu0
    %v3057 = vadd.f32 %v2864, %v3056
    %3058 = vmatprep.mubr.bf16.mxu0 0
    %3059 = vmatmul.mubr.bf16.gmra.mrb[0].mxu0 %v1579
    %v3060 = vpop.f32.mrb[0].mxu0
    %v3061 = vadd.f32 %v2868, %v3060
    %v3062 = vpop.f32.mrb[0].mxu0
    %v3063 = vadd.f32 %v2870, %v3062
    %v3064 = vpop.f32.mrb[0].mxu0
    %v3065 = vadd.f32 %v2872, %v3064
    %v3066 = vpop.f32.mrb[0].mxu0
    %v3067 = vadd.f32 %v2874, %v3066
    %3068 = vmatprep.mubr.bf16.mxu0 0
    %3069 = vmatmul.mubr.bf16.gmra.mrb[0].mxu0 %v1582
    %v3070 = vpop.f32.mrb[0].mxu0
    %v3071 = vadd.f32 %v2878, %v3070
    %v3072 = vpop.f32.mrb[0].mxu0
    %v3073 = vadd.f32 %v2880, %v3072
    %v3074 = vpop.f32.mrb[0].mxu0
    %v3075 = vadd.f32 %v2882, %v3074
    %v3076 = vpop.f32.mrb[0].mxu0
    %v3077 = vadd.f32 %v2884, %v3076
    %3078 = vmatprep.mubr.bf16.mxu0 0
    %3079 = vmatmul.mubr.bf16.gmra.mrb[0].mxu0 %v1585
    %v3080 = vpop.f32.mrb[0].mxu0
    %v3081 = vadd.f32 %v2888, %v3080
    %v3082 = vpop.f32.mrb[0].mxu0
    %v3083 = vadd.f32 %v2890, %v3082
    %v3084 = vpop.f32.mrb[0].mxu0
    %v3085 = vadd.f32 %v2892, %v3084
    %v3086 = vpop.f32.mrb[0].mxu0
    %v3087 = vadd.f32 %v2894, %v3086
    %3088 = vmatprep.mubr.bf16.mxu0 0
    %3089 = vmatmul.mubr.bf16.gmra.mrb[0].mxu0 %v1588
    %v3090 = vpop.f32.mrb[0].mxu0
    %v3091 = vadd.f32 %v2898, %v3090
    %v3092 = vpop.f32.mrb[0].mxu0
    %v3093 = vadd.f32 %v2900, %v3092
    %v3094 = vpop.f32.mrb[0].mxu0
    %v3095 = vadd.f32 %v2902, %v3094
    %v3096 = vpop.f32.mrb[0].mxu0
    %v3097 = vadd.f32 %v2904, %v3096
    %3098 = vmatprep.mubr.bf16.mxu0 0
    %3099 = vmatmul.mubr.bf16.gmra.mrb[0].mxu0 %v1591
    %v3100 = vpop.f32.mrb[0].mxu0
    %v3101 = vadd.f32 %v2908, %v3100
    %v3102 = vpop.f32.mrb[0].mxu0
    %v3103 = vadd.f32 %v2910, %v3102
    %v3104 = vpop.f32.mrb[0].mxu0
    %v3105 = vadd.f32 %v2912, %v3104
    %v3106 = vpop.f32.mrb[0].mxu0
    %v3107 = vadd.f32 %v2914, %v3106
    %3108 = vmatprep.mubr.bf16.mxu0 0
    %3109 = vmatmul.mubr.bf16.gmra.mrb[0].mxu0 %v1594
    %v3110 = vpop.f32.mrb[0].mxu0
    %v3111 = vadd.f32 %v2918, %v3110
    %v3112 = vpop.f32.mrb[0].mxu0
    %v3113 = vadd.f32 %v2920, %v3112
    %v3114 = vpop.f32.mrb[0].mxu0
    %v3115 = vadd.f32 %v2922, %v3114
    %v3116 = vpop.f32.mrb[0].mxu0
    %v3117 = vadd.f32 %v2924, %v3116
    %3118 = vmatprep.mubr.bf16.mxu0 0
    %3119 = vmatmul.mubr.bf16.gmra.mrb[0].mxu0 %v1597
    %v3120 = vpop.f32.mrb[0].mxu0
    %v3121 = vadd.f32 %v2928, %v3120
    %v3122 = vpop.f32.mrb[0].mxu0
    %v3123 = vadd.f32 %v2930, %v3122
    %v3124 = vpop.f32.mrb[0].mxu0
    %v3125 = vadd.f32 %v2932, %v3124
    %v3126 = vpop.f32.mrb[0].mxu0
    %v3127 = vadd.f32 %v2934, %v3126
    %3128 = vmatprep.mubr.bf16.mxu0 0
    %3129 = vmatmul.mubr.bf16.gmra.mrb[0].mxu0 %v1600
    %v3130 = vpop.f32.mrb[0].mxu0
    %v3131 = vadd.f32 %v2938, %v3130
    %v3132 = vpop.f32.mrb[0].mxu0
    %v3133 = vadd.f32 %v2940, %v3132
    %v3134 = vpop.f32.mrb[0].mxu0
    %v3135 = vadd.f32 %v2942, %v3134
    %v3136 = vpop.f32.mrb[0].mxu0
    %v3137 = vadd.f32 %v2944, %v3136
    %3138 = vmatprep.mubr.bf16.mxu0 0
    %3139 = vmatmul.mubr.bf16.gmra.mrb[0].mxu0 %v1603
    %v3140 = vpop.f32.mrb[0].mxu0
    %v3141 = vadd.f32 %v2948, %v3140
    %v3142 = vpop.f32.mrb[0].mxu0
    %v3143 = vadd.f32 %v2950, %v3142
    %v3144 = vpop.f32.mrb[0].mxu0
    %v3145 = vadd.f32 %v2952, %v3144
    %v3146 = vpop.f32.mrb[0].mxu0
    %v3147 = vadd.f32 %v2954, %v3146
    %3148 = vdwg.mxu0
    %v3149 = vmax.f32 %v2219, 0.0
    %v3150 = vmax.f32 %v2221, 0.0
    %v3151 = vmax.f32 %v2991, 0.0
    %v3152 = vmax.f32 %v2993, 0.0
    %v3153 = vmax.f32 %v2223, 0.0
    %v3154 = vmax.f32 %v2225, 0.0
    %v3155 = vmax.f32 %v2995, 0.0
    %v3156 = vmax.f32 %v2997, 0.0
    %v3157 = vmax.f32 %v2229, 0.0
    %v3158 = vmax.f32 %v2231, 0.0
    %v3159 = vmax.f32 %v3001, 0.0
    %v3160 = vmax.f32 %v3003, 0.0
    %v3161 = vmax.f32 %v2233, 0.0
    %v3162 = vmax.f32 %v2235, 0.0
    %v3163 = vmax.f32 %v3005, 0.0
    %v3164 = vmax.f32 %v3007, 0.0
    %v3165 = vmax.f32 %v2239, 0.0
    %v3166 = vmax.f32 %v2241, 0.0
    %v3167 = vmax.f32 %v3011, 0.0
    %v3168 = vmax.f32 %v3013, 0.0
    %v3169 = vmax.f32 %v2243, 0.0
    %v3170 = vmax.f32 %v2245, 0.0
    %v3171 = vmax.f32 %v3015, 0.0
    %v3172 = vmax.f32 %v3017, 0.0
    %v3173 = vmax.f32 %v2249, 0.0
    %v3174 = vmax.f32 %v2251, 0.0
    %v3175 = vmax.f32 %v3021, 0.0
    %v3176 = vmax.f32 %v3023, 0.0
    %v3177 = vmax.f32 %v2253, 0.0
    %v3178 = vmax.f32 %v2255, 0.0
    %v3179 = vmax.f32 %v3025, 0.0
    %v3180 = vmax.f32 %v3027, 0.0
    %v3181 = vmax.f32 %v2259, 0.0
    %v3182 = vmax.f32 %v2261, 0.0
    %v3183 = vmax.f32 %v3031, 0.0
    %v3184 = vmax.f32 %v3033, 0.0
    %v3185 = vmax.f32 %v2263, 0.0
    %v3186 = vmax.f32 %v2265, 0.0
    %v3187 = vmax.f32 %v3035, 0.0
    %v3188 = vmax.f32 %v3037, 0.0
    %v3189 = vmax.f32 %v2269, 0.0
    %v3190 = vmax.f32 %v2271, 0.0
    %v3191 = vmax.f32 %v3041, 0.0
    %v3192 = vmax.f32 %v3043, 0.0
    %v3193 = vmax.f32 %v2273, 0.0
    %v3194 = vmax.f32 %v2275, 0.0
    %v3195 = vmax.f32 %v3045, 0.0
    %v3196 = vmax.f32 %v3047, 0.0
    %v3197 = vmax.f32 %v2279, 0.0
    %v3198 = vmax.f32 %v2281, 0.0
    %v3199 = vmax.f32 %v3051, 0.0
    %v3200 = vmax.f32 %v3053, 0.0
    %v3201 = vmax.f32 %v2283, 0.0
    %v3202 = vmax.f32 %v2285, 0.0
    %v3203 = vmax.f32 %v3055, 0.0
    %v3204 = vmax.f32 %v3057, 0.0
    %v3205 = vmax.f32 %v2289, 0.0
    %v3206 = vmax.f32 %v2291, 0.0
    %v3207 = vmax.f32 %v3061, 0.0
    %v3208 = vmax.f32 %v3063, 0.0
    %v3209 = vmax.f32 %v2293, 0.0
    %v3210 = vmax.f32 %v2295, 0.0
    %v3211 = vmax.f32 %v3065, 0.0
    %v3212 = vmax.f32 %v3067, 0.0
    %v3213 = vmax.f32 %v2299, 0.0
    %v3214 = vmax.f32 %v2301, 0.0
    %v3215 = vmax.f32 %v3071, 0.0
    %v3216 = vmax.f32 %v3073, 0.0
    %v3217 = vmax.f32 %v2303, 0.0
    %v3218 = vmax.f32 %v2305, 0.0
    %v3219 = vmax.f32 %v3075, 0.0
    %v3220 = vmax.f32 %v3077, 0.0
    %v3221 = vmax.f32 %v2309, 0.0
    %v3222 = vmax.f32 %v2311, 0.0
    %v3223 = vmax.f32 %v3081, 0.0
    %v3224 = vmax.f32 %v3083, 0.0
    %v3225 = vmax.f32 %v2313, 0.0
    %v3226 = vmax.f32 %v2315, 0.0
    %v3227 = vmax.f32 %v3085, 0.0
    %v3228 = vmax.f32 %v3087, 0.0
    %v3229 = vmax.f32 %v2319, 0.0
    %v3230 = vmax.f32 %v2321, 0.0
    %v3231 = vmax.f32 %v3091, 0.0
    %v3232 = vmax.f32 %v3093, 0.0
    %v3233 = vmax.f32 %v2323, 0.0
    %v3234 = vmax.f32 %v2325, 0.0
    %v3235 = vmax.f32 %v3095, 0.0
    %v3236 = vmax.f32 %v3097, 0.0
    %v3237 = vmax.f32 %v2329, 0.0
    %v3238 = vmax.f32 %v2331, 0.0
    %v3239 = vmax.f32 %v3101, 0.0
    %v3240 = vmax.f32 %v3103, 0.0
    %v3241 = vmax.f32 %v2333, 0.0
    %v3242 = vmax.f32 %v2335, 0.0
    %v3243 = vmax.f32 %v3105, 0.0
    %v3244 = vmax.f32 %v3107, 0.0
    %v3245 = vmax.f32 %v2339, 0.0
    %v3246 = vmax.f32 %v2341, 0.0
    %v3247 = vmax.f32 %v3111, 0.0
    %v3248 = vmax.f32 %v3113, 0.0
    %v3249 = vmax.f32 %v2343, 0.0
    %v3250 = vmax.f32 %v2345, 0.0
    %v3251 = vmax.f32 %v3115, 0.0
    %v3252 = vmax.f32 %v3117, 0.0
    %v3253 = vmax.f32 %v2349, 0.0
    %v3254 = vmax.f32 %v2351, 0.0
    %v3255 = vmax.f32 %v3121, 0.0
    %v3256 = vmax.f32 %v3123, 0.0
    %v3257 = vmax.f32 %v2353, 0.0
    %v3258 = vmax.f32 %v2355, 0.0
    %v3259 = vmax.f32 %v3125, 0.0
    %v3260 = vmax.f32 %v3127, 0.0
    %v3261 = vmax.f32 %v2359, 0.0
    %v3262 = vmax.f32 %v2361, 0.0
    %v3263 = vmax.f32 %v3131, 0.0
    %v3264 = vmax.f32 %v3133, 0.0
    %v3265 = vmax.f32 %v2363, 0.0
    %v3266 = vmax.f32 %v2365, 0.0
    %v3267 = vmax.f32 %v3135, 0.0
    %v3268 = vmax.f32 %v3137, 0.0
    %v3269 = vmax.f32 %v2369, 0.0
    %v3270 = vmax.f32 %v2371, 0.0
    %v3271 = vmax.f32 %v3141, 0.0
    %v3272 = vmax.f32 %v3143, 0.0
    %v3273 = vmax.f32 %v2373, 0.0
    %v3274 = vmax.f32 %v2375, 0.0
    %v3275 = vmax.f32 %v3145, 0.0
    %v3276 = vmax.f32 %v3147, 0.0
    %v3277 = vpack.c.bf16 %v3153, %v3149
    %v3278 = vpack.c.bf16 %v3154, %v3150
    %v3279 = vpack.c.bf16 %v3155, %v3151
    %v3280 = vpack.c.bf16 %v3156, %v3152
    %v3281 = vpack.c.bf16 %v3161, %v3157
    %v3282 = vpack.c.bf16 %v3162, %v3158
    %v3283 = vpack.c.bf16 %v3163, %v3159
    %v3284 = vpack.c.bf16 %v3164, %v3160
    %v3285 = vpack.c.bf16 %v3169, %v3165
    %v3286 = vpack.c.bf16 %v3170, %v3166
    %v3287 = vpack.c.bf16 %v3171, %v3167
    %v3288 = vpack.c.bf16 %v3172, %v3168
    %v3289 = vpack.c.bf16 %v3177, %v3173
    %v3290 = vpack.c.bf16 %v3178, %v3174
    %v3291 = vpack.c.bf16 %v3179, %v3175
    %v3292 = vpack.c.bf16 %v3180, %v3176
    %v3293 = vpack.c.bf16 %v3185, %v3181
    %v3294 = vpack.c.bf16 %v3186, %v3182
    %v3295 = vpack.c.bf16 %v3187, %v3183
    %v3296 = vpack.c.bf16 %v3188, %v3184
    %v3297 = vpack.c.bf16 %v3193, %v3189
    %v3298 = vpack.c.bf16 %v3194, %v3190
    %v3299 = vpack.c.bf16 %v3195, %v3191
    %v3300 = vpack.c.bf16 %v3196, %v3192
    %v3301 = vpack.c.bf16 %v3201, %v3197
    %v3302 = vpack.c.bf16 %v3202, %v3198
    %v3303 = vpack.c.bf16 %v3203, %v3199
    %v3304 = vpack.c.bf16 %v3204, %v3200
    %v3305 = vpack.c.bf16 %v3209, %v3205
    %v3306 = vpack.c.bf16 %v3210, %v3206
    %v3307 = vpack.c.bf16 %v3211, %v3207
    %v3308 = vpack.c.bf16 %v3212, %v3208
    %v3309 = vpack.c.bf16 %v3217, %v3213
    %v3310 = vpack.c.bf16 %v3218, %v3214
    %v3311 = vpack.c.bf16 %v3219, %v3215
    %v3312 = vpack.c.bf16 %v3220, %v3216
    %v3313 = vpack.c.bf16 %v3225, %v3221
    %v3314 = vpack.c.bf16 %v3226, %v3222
    %v3315 = vpack.c.bf16 %v3227, %v3223
    %v3316 = vpack.c.bf16 %v3228, %v3224
    %v3317 = vpack.c.bf16 %v3233, %v3229
    %v3318 = vpack.c.bf16 %v3234, %v3230
    %v3319 = vpack.c.bf16 %v3235, %v3231
    %v3320 = vpack.c.bf16 %v3236, %v3232
    %v3321 = vpack.c.bf16 %v3241, %v3237
    %v3322 = vpack.c.bf16 %v3242, %v3238
    %v3323 = vpack.c.bf16 %v3243, %v3239
    %v3324 = vpack.c.bf16 %v3244, %v3240
    %v3325 = vpack.c.bf16 %v3249, %v3245
    %v3326 = vpack.c.bf16 %v3250, %v3246
    %v3327 = vpack.c.bf16 %v3251, %v3247
    %v3328 = vpack.c.bf16 %v3252, %v3248
    %v3329 = vpack.c.bf16 %v3257, %v3253
    %v3330 = vpack.c.bf16 %v3258, %v3254
    %v3331 = vpack.c.bf16 %v3259, %v3255
    %v3332 = vpack.c.bf16 %v3260, %v3256
    %v3333 = vpack.c.bf16 %v3265, %v3261
    %v3334 = vpack.c.bf16 %v3266, %v3262
    %v3335 = vpack.c.bf16 %v3267, %v3263
    %v3336 = vpack.c.bf16 %v3268, %v3264
    %v3337 = vpack.c.bf16 %v3273, %v3269
    %v3338 = vpack.c.bf16 %v3274, %v3270
    %v3339 = vpack.c.bf16 %v3275, %v3271
    %v3340 = vpack.c.bf16 %v3276, %v3272
    %v3341 = vld [vmem:[%s3] sm:$0xf]
    %v3342 = vld [vmem:[%s3 + $0x4] sm:$0xf]
    %v3343 = vld [vmem:[%s3 + $0x8] sm:$0xf]
    %v3344 = vld [vmem:[%s3 + $0xc] sm:$0xf]
    %v3345 = vld [vmem:[%s3 + $0x10] sm:$0xf]
    %v3346 = vld [vmem:[%s3 + $0x14] sm:$0xf]
    %v3347 = vld [vmem:[%s3 + $0x18] sm:$0xf]
    %v3348 = vld [vmem:[%s3 + $0x1c] sm:$0xf]
    %v3349 = vld [vmem:[%s3 + $0x20] sm:$0xf]
    %v3350 = vld [vmem:[%s3 + $0x24] sm:$0xf]
    %v3351 = vld [vmem:[%s3 + $0x28] sm:$0xf]
    %v3352 = vld [vmem:[%s3 + $0x2c] sm:$0xf]
    %v3353 = vld [vmem:[%s3 + $0x30] sm:$0xf]
    %v3354 = vld [vmem:[%s3 + $0x34] sm:$0xf]
    %v3355 = vld [vmem:[%s3 + $0x38] sm:$0xf]
    %v3356 = vld [vmem:[%s3 + $0x3c] sm:$0xf]
    %v3357 = vld [vmem:[%s3 + $0x40] sm:$0xf]
    %v3358 = vld [vmem:[%s3 + $0x44] sm:$0xf]
    %v3359 = vld [vmem:[%s3 + $0x48] sm:$0xf]
    %v3360 = vld [vmem:[%s3 + $0x4c] sm:$0xf]
    %v3361 = vld [vmem:[%s3 + $0x50] sm:$0xf]
    %v3362 = vld [vmem:[%s3 + $0x54] sm:$0xf]
    %v3363 = vld [vmem:[%s3 + $0x58] sm:$0xf]
    %v3364 = vld [vmem:[%s3 + $0x5c] sm:$0xf]
    %v3365 = vld [vmem:[%s3 + $0x60] sm:$0xf]
    %v3366 = vld [vmem:[%s3 + $0x64] sm:$0xf]
    %v3367 = vld [vmem:[%s3 + $0x68] sm:$0xf]
    %v3368 = vld [vmem:[%s3 + $0x6c] sm:$0xf]
    %v3369 = vld [vmem:[%s3 + $0x70] sm:$0xf]
    %v3370 = vld [vmem:[%s3 + $0x74] sm:$0xf]
    %v3371 = vld [vmem:[%s3 + $0x78] sm:$0xf]
    %v3372 = vld [vmem:[%s3 + $0x7c] sm:$0xf]
    %v3373 = vld [vmem:[%s3 + $0x80] sm:$0xf]
    %v3374 = vld [vmem:[%s3 + $0x84] sm:$0xf]
    %v3375 = vld [vmem:[%s3 + $0x88] sm:$0xf]
    %v3376 = vld [vmem:[%s3 + $0x8c] sm:$0xf]
    %v3377 = vld [vmem:[%s3 + $0x90] sm:$0xf]
    %v3378 = vld [vmem:[%s3 + $0x94] sm:$0xf]
    %v3379 = vld [vmem:[%s3 + $0x98] sm:$0xf]
    %v3380 = vld [vmem:[%s3 + $0x9c] sm:$0xf]
    %v3381 = vld [vmem:[%s3 + $0xa0] sm:$0xf]
    %v3382 = vld [vmem:[%s3 + $0xa4] sm:$0xf]
    %v3383 = vld [vmem:[%s3 + $0xa8] sm:$0xf]
    %v3384 = vld [vmem:[%s3 + $0xac] sm:$0xf]
    %v3385 = vld [vmem:[%s3 + $0xb0] sm:$0xf]
    %v3386 = vld [vmem:[%s3 + $0xb4] sm:$0xf]
    %v3387 = vld [vmem:[%s3 + $0xb8] sm:$0xf]
    %v3388 = vld [vmem:[%s3 + $0xbc] sm:$0xf]
    %v3389 = vld [vmem:[%s3 + $0xc0] sm:$0xf]
    %v3390 = vld [vmem:[%s3 + $0xc4] sm:$0xf]
    %v3391 = vld [vmem:[%s3 + $0xc8] sm:$0xf]
    %v3392 = vld [vmem:[%s3 + $0xcc] sm:$0xf]
    %v3393 = vld [vmem:[%s3 + $0xd0] sm:$0xf]
    %v3394 = vld [vmem:[%s3 + $0xd4] sm:$0xf]
    %v3395 = vld [vmem:[%s3 + $0xd8] sm:$0xf]
    %v3396 = vld [vmem:[%s3 + $0xdc] sm:$0xf]
    %v3397 = vld [vmem:[%s3 + $0xe0] sm:$0xf]
    %v3398 = vld [vmem:[%s3 + $0xe4] sm:$0xf]
    %v3399 = vld [vmem:[%s3 + $0xe8] sm:$0xf]
    %v3400 = vld [vmem:[%s3 + $0xec] sm:$0xf]
    %v3401 = vld [vmem:[%s3 + $0xf0] sm:$0xf]
    %v3402 = vld [vmem:[%s3 + $0xf4] sm:$0xf]
    %v3403 = vld [vmem:[%s3 + $0xf8] sm:$0x3]
    %v3404 = vld [vmem:[%s4] sm:$0x1]
    %v3406 = vlaneseq
    %v3407 = vshrl.u32 %v3406, 7
    %v3408 = vsub.s32 0, %v3407
    %v3409 = vrot.slane %v3404, %v3408
    %v3474 = vunpack.c.l.b16 %v3341
    %v3475 = vunpack.c.l.b16 %v3342
    %v3476 = vunpack.c.l.b16 %v3343
    %v3477 = vunpack.c.l.b16 %v3344
    %v3478 = vunpack.c.l.b16 %v3345
    %v3479 = vunpack.c.l.b16 %v3346
    %v3480 = vunpack.c.l.b16 %v3347
    %v3481 = vunpack.c.l.b16 %v3348
    %v3482 = vunpack.c.l.b16 %v3349
    %v3483 = vunpack.c.l.b16 %v3350
    %v3484 = vunpack.c.l.b16 %v3351
    %v3485 = vunpack.c.l.b16 %v3352
    %v3486 = vunpack.c.l.b16 %v3353
    %v3487 = vunpack.c.l.b16 %v3354
    %v3488 = vunpack.c.l.b16 %v3355
    %v3489 = vunpack.c.l.b16 %v3356
    %v3490 = vunpack.c.l.b16 %v3357
    %v3491 = vunpack.c.l.b16 %v3358
    %v3492 = vunpack.c.l.b16 %v3359
    %v3493 = vunpack.c.l.b16 %v3360
    %v3494 = vunpack.c.l.b16 %v3361
    %v3495 = vunpack.c.l.b16 %v3362
    %v3496 = vunpack.c.l.b16 %v3363
    %v3497 = vunpack.c.l.b16 %v3364
    %v3498 = vunpack.c.l.b16 %v3365
    %v3499 = vunpack.c.l.b16 %v3366
    %v3500 = vunpack.c.l.b16 %v3367
    %v3501 = vunpack.c.l.b16 %v3368
    %v3502 = vunpack.c.l.b16 %v3369
    %v3503 = vunpack.c.l.b16 %v3370
    %v3504 = vunpack.c.l.b16 %v3371
    %v3505 = vunpack.c.l.b16 %v3372
    %v3506 = vunpack.c.l.b16 %v3373
    %v3507 = vunpack.c.l.b16 %v3374
    %v3508 = vunpack.c.l.b16 %v3375
    %v3509 = vunpack.c.l.b16 %v3376
    %v3510 = vunpack.c.l.b16 %v3377
    %v3511 = vunpack.c.l.b16 %v3378
    %v3512 = vunpack.c.l.b16 %v3379
    %v3513 = vunpack.c.l.b16 %v3380
    %v3514 = vunpack.c.l.b16 %v3381
    %v3515 = vunpack.c.l.b16 %v3382
    %v3516 = vunpack.c.l.b16 %v3383
    %v3517 = vunpack.c.l.b16 %v3384
    %v3518 = vunpack.c.l.b16 %v3385
    %v3519 = vunpack.c.l.b16 %v3386
    %v3520 = vunpack.c.l.b16 %v3387
    %v3521 = vunpack.c.l.b16 %v3388
    %v3522 = vunpack.c.l.b16 %v3389
    %v3523 = vunpack.c.l.b16 %v3390
    %v3524 = vunpack.c.l.b16 %v3391
    %v3525 = vunpack.c.l.b16 %v3392
    %v3526 = vunpack.c.l.b16 %v3393
    %v3527 = vunpack.c.l.b16 %v3394
    %v3528 = vunpack.c.l.b16 %v3395
    %v3529 = vunpack.c.l.b16 %v3396
    %v3530 = vunpack.c.l.b16 %v3397
    %v3531 = vunpack.c.l.b16 %v3398
    %v3532 = vunpack.c.l.b16 %v3399
    %v3533 = vunpack.c.l.b16 %v3400
    %v3534 = vunpack.c.l.b16 %v3401
    %v3535 = vunpack.c.l.b16 %v3402
    %v3536 = vunpack.c.l.b16 %v3403
    %v3537 = vpack.c.b16 %v3475, %v3474
    %v3538 = vpack.c.b16 %v3477, %v3476
    %v3539 = vpack.c.b16 %v3479, %v3478
    %v3540 = vpack.c.b16 %v3481, %v3480
    %v3541 = vpack.c.b16 %v3483, %v3482
    %v3542 = vpack.c.b16 %v3485, %v3484
    %v3543 = vpack.c.b16 %v3487, %v3486
    %v3544 = vpack.c.b16 %v3489, %v3488
    %v3545 = vpack.c.b16 %v3491, %v3490
    %v3546 = vpack.c.b16 %v3493, %v3492
    %v3547 = vpack.c.b16 %v3495, %v3494
    %v3548 = vpack.c.b16 %v3497, %v3496
    %v3549 = vpack.c.b16 %v3499, %v3498
    %v3550 = vpack.c.b16 %v3501, %v3500
    %v3551 = vpack.c.b16 %v3503, %v3502
    %v3552 = vpack.c.b16 %v3505, %v3504
    %v3553 = vpack.c.b16 %v3507, %v3506
    %v3554 = vpack.c.b16 %v3509, %v3508
    %v3555 = vpack.c.b16 %v3511, %v3510
    %v3556 = vpack.c.b16 %v3513, %v3512
    %v3557 = vpack.c.b16 %v3515, %v3514
    %v3558 = vpack.c.b16 %v3517, %v3516
    %v3559 = vpack.c.b16 %v3519, %v3518
    %v3560 = vpack.c.b16 %v3521, %v3520
    %v3561 = vpack.c.b16 %v3523, %v3522
    %v3562 = vpack.c.b16 %v3525, %v3524
    %v3563 = vpack.c.b16 %v3527, %v3526
    %v3564 = vpack.c.b16 %v3529, %v3528
    %v3565 = vpack.c.b16 %v3531, %v3530
    %v3566 = vpack.c.b16 %v3533, %v3532
    %v3567 = vpack.c.b16 %v3535, %v3534
    %v3568 = vpack.c.b16 %v3536, %v3536
    %vm3600 = vcmask 949248
    %v3602 = vsel %vm3600, %v3280, 0
    %v3605 = vsel %vm3600, %v3284, 0
    %v3608 = vsel %vm3600, %v3288, 0
    %v3611 = vsel %vm3600, %v3292, 0
    %v3614 = vsel %vm3600, %v3296, 0
    %v3617 = vsel %vm3600, %v3300, 0
    %v3620 = vsel %vm3600, %v3304, 0
    %v3623 = vsel %vm3600, %v3308, 0
    %v3626 = vsel %vm3600, %v3312, 0
    %v3629 = vsel %vm3600, %v3316, 0
    %v3632 = vsel %vm3600, %v3320, 0
    %v3635 = vsel %vm3600, %v3324, 0
    %v3638 = vsel %vm3600, %v3328, 0
    %v3641 = vsel %vm3600, %v3332, 0
    %v3644 = vsel %vm3600, %v3336, 0
    %v3647 = vsel %vm3600, %v3340, 0
    %vm3649 = vcmask 1041408
    %v3651 = vsel %vm3649, %v3568, 0
    %3653 = vmatprep.subr.bf16.mxu0 0
    %3654 = vmatpush1.bf16.msra.mxu0 %v3537
    %3655 = vmatprep.subr.bf16.mxu0 0
    %3656 = vmatpush1.bf16.msra.mxu0 %v3538
    %3657 = vmatprep.subr.bf16.mxu0 0
    %3658 = vmatpush1.bf16.msra.mxu0 %v3539
    %3659 = vmatprep.subr.bf16.mxu0 0
    %3660 = vmatpush1.bf16.msra.mxu0 %v3540
    %3661 = vmatprep.subr.bf16.mxu0 0
    %3662 = vmatpush1.bf16.msra.mxu0 %v3541
    %3663 = vmatprep.subr.bf16.mxu0 0
    %3664 = vmatpush1.bf16.msra.mxu0 %v3542
    %3665 = vmatprep.subr.bf16.mxu0 0
    %3666 = vmatpush1.bf16.msra.mxu0 %v3543
    %3667 = vmatprep.subr.bf16.mxu0 0
    %3668 = vmatpush1.bf16.msra.mxu0 %v3544
    %3669 = vmatprep.subr.bf16.mxu0 0
    %3670 = vmatpush1.bf16.msra.mxu0 %v3545
    %3671 = vmatprep.subr.bf16.mxu0 0
    %3672 = vmatpush1.bf16.msra.mxu0 %v3546
    %3673 = vmatprep.subr.bf16.mxu0 0
    %3674 = vmatpush1.bf16.msra.mxu0 %v3547
    %3675 = vmatprep.subr.bf16.mxu0 0
    %3676 = vmatpush1.bf16.msra.mxu0 %v3548
    %3677 = vmatprep.subr.bf16.mxu0 0
    %3678 = vmatpush1.bf16.msra.mxu0 %v3549
    %3679 = vmatprep.subr.bf16.mxu0 0
    %3680 = vmatpush1.bf16.msra.mxu0 %v3550
    %3681 = vmatprep.subr.bf16.mxu0 0
    %3682 = vmatpush1.bf16.msra.mxu0 %v3551
    %3683 = vmatprep.subr.bf16.mxu0 0
    %3684 = vmatpush1.bf16.msra.mxu0 %v3552
    %3685 = vmatprep.mubr.bf16.mxu0 %v3278
    %3686 = vmatmul.mubr.bf16.gmra.mrb[0].mxu0 %v3277
    %v3687 = vpop.f32.mrb[0].mxu0
    %v3688 = vadd.f32 %v3409, %v3687
    %v3689 = vpop.f32.mrb[0].mxu0
    %v3690 = vpop.f32.mrb[0].mxu0
    %v3691 = vadd.f32 %v3409, %v3690
    %v3692 = vpop.f32.mrb[0].mxu0
    %3693 = vmatprep.mubr.bf16.mxu0 %v3282
    %3694 = vmatmul.mubr.bf16.gmra.mrb[0].mxu0 %v3281
    %v3695 = vpop.f32.mrb[0].mxu0
    %v3696 = vadd.f32 %v3409, %v3695
    %v3697 = vpop.f32.mrb[0].mxu0
    %v3698 = vpop.f32.mrb[0].mxu0
    %v3699 = vadd.f32 %v3409, %v3698
    %v3700 = vpop.f32.mrb[0].mxu0
    %3701 = vmatprep.mubr.bf16.mxu0 %v3286
    %3702 = vmatmul.mubr.bf16.gmra.mrb[0].mxu0 %v3285
    %v3703 = vpop.f32.mrb[0].mxu0
    %v3704 = vadd.f32 %v3409, %v3703
    %v3705 = vpop.f32.mrb[0].mxu0
    %v3706 = vpop.f32.mrb[0].mxu0
    %v3707 = vadd.f32 %v3409, %v3706
    %v3708 = vpop.f32.mrb[0].mxu0
    %3709 = vmatprep.mubr.bf16.mxu0 %v3290
    %3710 = vmatmul.mubr.bf16.gmra.mrb[0].mxu0 %v3289
    %v3711 = vpop.f32.mrb[0].mxu0
    %v3712 = vadd.f32 %v3409, %v3711
    %v3713 = vpop.f32.mrb[0].mxu0
    %v3714 = vpop.f32.mrb[0].mxu0
    %v3715 = vadd.f32 %v3409, %v3714
    %v3716 = vpop.f32.mrb[0].mxu0
    %3717 = vmatprep.mubr.bf16.mxu0 %v3294
    %3718 = vmatmul.mubr.bf16.gmra.mrb[0].mxu0 %v3293
    %v3719 = vpop.f32.mrb[0].mxu0
    %v3720 = vadd.f32 %v3409, %v3719
    %v3721 = vpop.f32.mrb[0].mxu0
    %v3722 = vpop.f32.mrb[0].mxu0
    %v3723 = vadd.f32 %v3409, %v3722
    %v3724 = vpop.f32.mrb[0].mxu0
    %3725 = vmatprep.mubr.bf16.mxu0 %v3298
    %3726 = vmatmul.mubr.bf16.gmra.mrb[0].mxu0 %v3297
    %v3727 = vpop.f32.mrb[0].mxu0
    %v3728 = vadd.f32 %v3409, %v3727
    %v3729 = vpop.f32.mrb[0].mxu0
    %v3730 = vpop.f32.mrb[0].mxu0
    %v3731 = vadd.f32 %v3409, %v3730
    %v3732 = vpop.f32.mrb[0].mxu0
    %3733 = vmatprep.mubr.bf16.mxu0 %v3302
    %3734 = vmatmul.mubr.bf16.gmra.mrb[0].mxu0 %v3301
    %v3735 = vpop.f32.mrb[0].mxu0
    %v3736 = vadd.f32 %v3409, %v3735
    %v3737 = vpop.f32.mrb[0].mxu0
    %v3738 = vpop.f32.mrb[0].mxu0
    %v3739 = vadd.f32 %v3409, %v3738
    %v3740 = vpop.f32.mrb[0].mxu0
    %3741 = vmatprep.mubr.bf16.mxu0 %v3306
    %3742 = vmatmul.mubr.bf16.gmra.mrb[0].mxu0 %v3305
    %v3743 = vpop.f32.mrb[0].mxu0
    %v3744 = vadd.f32 %v3409, %v3743
    %v3745 = vpop.f32.mrb[0].mxu0
    %v3746 = vpop.f32.mrb[0].mxu0
    %v3747 = vadd.f32 %v3409, %v3746
    %v3748 = vpop.f32.mrb[0].mxu0
    %3749 = vmatprep.mubr.bf16.mxu0 %v3310
    %3750 = vmatmul.mubr.bf16.gmra.mrb[0].mxu0 %v3309
    %v3751 = vpop.f32.mrb[0].mxu0
    %v3752 = vadd.f32 %v3409, %v3751
    %v3753 = vpop.f32.mrb[0].mxu0
    %v3754 = vpop.f32.mrb[0].mxu0
    %v3755 = vadd.f32 %v3409, %v3754
    %v3756 = vpop.f32.mrb[0].mxu0
    %3757 = vmatprep.mubr.bf16.mxu0 %v3314
    %3758 = vmatmul.mubr.bf16.gmra.mrb[0].mxu0 %v3313
    %v3759 = vpop.f32.mrb[0].mxu0
    %v3760 = vadd.f32 %v3409, %v3759
    %v3761 = vpop.f32.mrb[0].mxu0
    %v3762 = vpop.f32.mrb[0].mxu0
    %v3763 = vadd.f32 %v3409, %v3762
    %v3764 = vpop.f32.mrb[0].mxu0
    %3765 = vmatprep.mubr.bf16.mxu0 %v3318
    %3766 = vmatmul.mubr.bf16.gmra.mrb[0].mxu0 %v3317
    %v3767 = vpop.f32.mrb[0].mxu0
    %v3768 = vadd.f32 %v3409, %v3767
    %v3769 = vpop.f32.mrb[0].mxu0
    %v3770 = vpop.f32.mrb[0].mxu0
    %v3771 = vadd.f32 %v3409, %v3770
    %v3772 = vpop.f32.mrb[0].mxu0
    %3773 = vmatprep.mubr.bf16.mxu0 %v3322
    %3774 = vmatmul.mubr.bf16.gmra.mrb[0].mxu0 %v3321
    %v3775 = vpop.f32.mrb[0].mxu0
    %v3776 = vadd.f32 %v3409, %v3775
    %v3777 = vpop.f32.mrb[0].mxu0
    %v3778 = vpop.f32.mrb[0].mxu0
    %v3779 = vadd.f32 %v3409, %v3778
    %v3780 = vpop.f32.mrb[0].mxu0
    %3781 = vmatprep.mubr.bf16.mxu0 %v3326
    %3782 = vmatmul.mubr.bf16.gmra.mrb[0].mxu0 %v3325
    %v3783 = vpop.f32.mrb[0].mxu0
    %v3784 = vadd.f32 %v3409, %v3783
    %v3785 = vpop.f32.mrb[0].mxu0
    %v3786 = vpop.f32.mrb[0].mxu0
    %v3787 = vadd.f32 %v3409, %v3786
    %v3788 = vpop.f32.mrb[0].mxu0
    %3789 = vmatprep.mubr.bf16.mxu0 %v3330
    %3790 = vmatmul.mubr.bf16.gmra.mrb[0].mxu0 %v3329
    %v3791 = vpop.f32.mrb[0].mxu0
    %v3792 = vadd.f32 %v3409, %v3791
    %v3793 = vpop.f32.mrb[0].mxu0
    %v3794 = vpop.f32.mrb[0].mxu0
    %v3795 = vadd.f32 %v3409, %v3794
    %v3796 = vpop.f32.mrb[0].mxu0
    %3797 = vmatprep.mubr.bf16.mxu0 %v3334
    %3798 = vmatmul.mubr.bf16.gmra.mrb[0].mxu0 %v3333
    %v3799 = vpop.f32.mrb[0].mxu0
    %v3800 = vadd.f32 %v3409, %v3799
    %v3801 = vpop.f32.mrb[0].mxu0
    %v3802 = vpop.f32.mrb[0].mxu0
    %v3803 = vadd.f32 %v3409, %v3802
    %v3804 = vpop.f32.mrb[0].mxu0
    %3805 = vmatprep.mubr.bf16.mxu0 %v3338
    %3806 = vmatmul.mubr.bf16.gmra.mrb[0].mxu0 %v3337
    %v3807 = vpop.f32.mrb[0].mxu0
    %v3808 = vadd.f32 %v3409, %v3807
    %v3809 = vpop.f32.mrb[0].mxu0
    %v3810 = vpop.f32.mrb[0].mxu0
    %v3811 = vadd.f32 %v3409, %v3810
    %v3812 = vpop.f32.mrb[0].mxu0
    %3813 = vdwg.mxu0
    %3814 = vmatprep.subr.bf16.mxu0 0
    %3815 = vmatpush1.bf16.msra.mxu0 %v3553
    %3816 = vmatprep.subr.bf16.mxu0 0
    %3817 = vmatpush1.bf16.msra.mxu0 %v3554
    %3818 = vmatprep.subr.bf16.mxu0 0
    %3819 = vmatpush1.bf16.msra.mxu0 %v3555
    %3820 = vmatprep.subr.bf16.mxu0 0
    %3821 = vmatpush1.bf16.msra.mxu0 %v3556
    %3822 = vmatprep.subr.bf16.mxu0 0
    %3823 = vmatpush1.bf16.msra.mxu0 %v3557
    %3824 = vmatprep.subr.bf16.mxu0 0
    %3825 = vmatpush1.bf16.msra.mxu0 %v3558
    %3826 = vmatprep.subr.bf16.mxu0 0
    %3827 = vmatpush1.bf16.msra.mxu0 %v3559
    %3828 = vmatprep.subr.bf16.mxu0 0
    %3829 = vmatpush1.bf16.msra.mxu0 %v3560
    %3830 = vmatprep.subr.bf16.mxu0 0
    %3831 = vmatpush1.bf16.msra.mxu0 %v3561
    %3832 = vmatprep.subr.bf16.mxu0 0
    %3833 = vmatpush1.bf16.msra.mxu0 %v3562
    %3834 = vmatprep.subr.bf16.mxu0 0
    %3835 = vmatpush1.bf16.msra.mxu0 %v3563
    %3836 = vmatprep.subr.bf16.mxu0 0
    %3837 = vmatpush1.bf16.msra.mxu0 %v3564
    %3838 = vmatprep.subr.bf16.mxu0 0
    %3839 = vmatpush1.bf16.msra.mxu0 %v3565
    %3840 = vmatprep.subr.bf16.mxu0 0
    %3841 = vmatpush1.bf16.msra.mxu0 %v3566
    %3842 = vmatprep.subr.bf16.mxu0 0
    %3843 = vmatpush1.bf16.msra.mxu0 %v3567
    %3844 = vmatprep.subr.bf16.mxu0 0
    %3845 = vmatpush1.bf16.msra.mxu0 %v3651
    %3846 = vmatprep.mubr.bf16.mxu0 %v3602
    %3847 = vmatmul.mubr.bf16.gmra.mrb[0].mxu0 %v3279
    %v3848 = vpop.f32.mrb[0].mxu0
    %v3849 = vadd.f32 %v3688, %v3848
    %v3850 = vpop.f32.mrb[0].mxu0
    %v3851 = vpop.f32.mrb[0].mxu0
    %v3852 = vadd.f32 %v3691, %v3851
    %v3853 = vpop.f32.mrb[0].mxu0
    %3854 = vmatprep.mubr.bf16.mxu0 %v3605
    %3855 = vmatmul.mubr.bf16.gmra.mrb[0].mxu0 %v3283
    %v3856 = vpop.f32.mrb[0].mxu0
    %v3857 = vadd.f32 %v3696, %v3856
    %v3858 = vpop.f32.mrb[0].mxu0
    %v3859 = vpop.f32.mrb[0].mxu0
    %v3860 = vadd.f32 %v3699, %v3859
    %v3861 = vpop.f32.mrb[0].mxu0
    %3862 = vmatprep.mubr.bf16.mxu0 %v3608
    %3863 = vmatmul.mubr.bf16.gmra.mrb[0].mxu0 %v3287
    %v3864 = vpop.f32.mrb[0].mxu0
    %v3865 = vadd.f32 %v3704, %v3864
    %v3866 = vpop.f32.mrb[0].mxu0
    %v3867 = vpop.f32.mrb[0].mxu0
    %v3868 = vadd.f32 %v3707, %v3867
    %v3869 = vpop.f32.mrb[0].mxu0
    %3870 = vmatprep.mubr.bf16.mxu0 %v3611
    %3871 = vmatmul.mubr.bf16.gmra.mrb[0].mxu0 %v3291
    %v3872 = vpop.f32.mrb[0].mxu0
    %v3873 = vadd.f32 %v3712, %v3872
    %v3874 = vpop.f32.mrb[0].mxu0
    %v3875 = vpop.f32.mrb[0].mxu0
    %v3876 = vadd.f32 %v3715, %v3875
    %v3877 = vpop.f32.mrb[0].mxu0
    %3878 = vmatprep.mubr.bf16.mxu0 %v3614
    %3879 = vmatmul.mubr.bf16.gmra.mrb[0].mxu0 %v3295
    %v3880 = vpop.f32.mrb[0].mxu0
    %v3881 = vadd.f32 %v3720, %v3880
    %v3882 = vpop.f32.mrb[0].mxu0
    %v3883 = vpop.f32.mrb[0].mxu0
    %v3884 = vadd.f32 %v3723, %v3883
    %v3885 = vpop.f32.mrb[0].mxu0
    %3886 = vmatprep.mubr.bf16.mxu0 %v3617
    %3887 = vmatmul.mubr.bf16.gmra.mrb[0].mxu0 %v3299
    %v3888 = vpop.f32.mrb[0].mxu0
    %v3889 = vadd.f32 %v3728, %v3888
    %v3890 = vpop.f32.mrb[0].mxu0
    %v3891 = vpop.f32.mrb[0].mxu0
    %v3892 = vadd.f32 %v3731, %v3891
    %v3893 = vpop.f32.mrb[0].mxu0
    %3894 = vmatprep.mubr.bf16.mxu0 %v3620
    %3895 = vmatmul.mubr.bf16.gmra.mrb[0].mxu0 %v3303
    %v3896 = vpop.f32.mrb[0].mxu0
    %v3897 = vadd.f32 %v3736, %v3896
    %v3898 = vpop.f32.mrb[0].mxu0
    %v3899 = vpop.f32.mrb[0].mxu0
    %v3900 = vadd.f32 %v3739, %v3899
    %v3901 = vpop.f32.mrb[0].mxu0
    %3902 = vmatprep.mubr.bf16.mxu0 %v3623
    %3903 = vmatmul.mubr.bf16.gmra.mrb[0].mxu0 %v3307
    %v3904 = vpop.f32.mrb[0].mxu0
    %v3905 = vadd.f32 %v3744, %v3904
    %v3906 = vpop.f32.mrb[0].mxu0
    %v3907 = vpop.f32.mrb[0].mxu0
    %v3908 = vadd.f32 %v3747, %v3907
    %v3909 = vpop.f32.mrb[0].mxu0
    %3910 = vmatprep.mubr.bf16.mxu0 %v3626
    %3911 = vmatmul.mubr.bf16.gmra.mrb[0].mxu0 %v3311
    %v3912 = vpop.f32.mrb[0].mxu0
    %v3913 = vadd.f32 %v3752, %v3912
    %v3914 = vpop.f32.mrb[0].mxu0
    %v3915 = vpop.f32.mrb[0].mxu0
    %v3916 = vadd.f32 %v3755, %v3915
    %v3917 = vpop.f32.mrb[0].mxu0
    %3918 = vmatprep.mubr.bf16.mxu0 %v3629
    %3919 = vmatmul.mubr.bf16.gmra.mrb[0].mxu0 %v3315
    %v3920 = vpop.f32.mrb[0].mxu0
    %v3921 = vadd.f32 %v3760, %v3920
    %v3922 = vpop.f32.mrb[0].mxu0
    %v3923 = vpop.f32.mrb[0].mxu0
    %v3924 = vadd.f32 %v3763, %v3923
    %v3925 = vpop.f32.mrb[0].mxu0
    %3926 = vmatprep.mubr.bf16.mxu0 %v3632
    %3927 = vmatmul.mubr.bf16.gmra.mrb[0].mxu0 %v3319
    %v3928 = vpop.f32.mrb[0].mxu0
    %v3929 = vadd.f32 %v3768, %v3928
    %v3930 = vpop.f32.mrb[0].mxu0
    %v3931 = vpop.f32.mrb[0].mxu0
    %v3932 = vadd.f32 %v3771, %v3931
    %v3933 = vpop.f32.mrb[0].mxu0
    %3934 = vmatprep.mubr.bf16.mxu0 %v3635
    %3935 = vmatmul.mubr.bf16.gmra.mrb[0].mxu0 %v3323
    %v3936 = vpop.f32.mrb[0].mxu0
    %v3937 = vadd.f32 %v3776, %v3936
    %v3938 = vpop.f32.mrb[0].mxu0
    %v3939 = vpop.f32.mrb[0].mxu0
    %v3940 = vadd.f32 %v3779, %v3939
    %v3941 = vpop.f32.mrb[0].mxu0
    %3942 = vmatprep.mubr.bf16.mxu0 %v3638
    %3943 = vmatmul.mubr.bf16.gmra.mrb[0].mxu0 %v3327
    %v3944 = vpop.f32.mrb[0].mxu0
    %v3945 = vadd.f32 %v3784, %v3944
    %v3946 = vpop.f32.mrb[0].mxu0
    %v3947 = vpop.f32.mrb[0].mxu0
    %v3948 = vadd.f32 %v3787, %v3947
    %v3949 = vpop.f32.mrb[0].mxu0
    %3950 = vmatprep.mubr.bf16.mxu0 %v3641
    %3951 = vmatmul.mubr.bf16.gmra.mrb[0].mxu0 %v3331
    %v3952 = vpop.f32.mrb[0].mxu0
    %v3953 = vadd.f32 %v3792, %v3952
    %v3954 = vpop.f32.mrb[0].mxu0
    %v3955 = vpop.f32.mrb[0].mxu0
    %v3956 = vadd.f32 %v3795, %v3955
    %v3957 = vpop.f32.mrb[0].mxu0
    %3958 = vmatprep.mubr.bf16.mxu0 %v3644
    %3959 = vmatmul.mubr.bf16.gmra.mrb[0].mxu0 %v3335
    %v3960 = vpop.f32.mrb[0].mxu0
    %v3961 = vadd.f32 %v3800, %v3960
    %v3962 = vpop.f32.mrb[0].mxu0
    %v3963 = vpop.f32.mrb[0].mxu0
    %v3964 = vadd.f32 %v3803, %v3963
    %v3965 = vpop.f32.mrb[0].mxu0
    %3966 = vmatprep.mubr.bf16.mxu0 %v3647
    %3967 = vmatmul.mubr.bf16.gmra.mrb[0].mxu0 %v3339
    %v3968 = vpop.f32.mrb[0].mxu0
    %v3969 = vadd.f32 %v3808, %v3968
    %v3970 = vpop.f32.mrb[0].mxu0
    %v3971 = vpop.f32.mrb[0].mxu0
    %v3972 = vadd.f32 %v3811, %v3971
    %v3973 = vpop.f32.mrb[0].mxu0
    %3974 = vdwg.mxu0
    %3975 = vst [vmem:[#allocation2] sm:$0xff] %v3849
    %3976 = vst [vmem:[#allocation2 + $0x8] sm:$0xff] %v3852
    %3977 = vst [vmem:[#allocation2 + $0x10] sm:$0xff] %v3857
    %3978 = vst [vmem:[#allocation2 + $0x18] sm:$0xff] %v3860
    %3979 = vst [vmem:[#allocation2 + $0x20] sm:$0xff] %v3865
    %3980 = vst [vmem:[#allocation2 + $0x28] sm:$0xff] %v3868
    %3981 = vst [vmem:[#allocation2 + $0x30] sm:$0xff] %v3873
    %3982 = vst [vmem:[#allocation2 + $0x38] sm:$0xff] %v3876
    %3983 = vst [vmem:[#allocation2 + $0x40] sm:$0xff] %v3881
    %3984 = vst [vmem:[#allocation2 + $0x48] sm:$0xff] %v3884
    %3985 = vst [vmem:[#allocation2 + $0x50] sm:$0xff] %v3889
    %3986 = vst [vmem:[#allocation2 + $0x58] sm:$0xff] %v3892
    %3987 = vst [vmem:[#allocation2 + $0x60] sm:$0xff] %v3897
    %3988 = vst [vmem:[#allocation2 + $0x68] sm:$0xff] %v3900
    %3989 = vst [vmem:[#allocation2 + $0x70] sm:$0xff] %v3905
    %3990 = vst [vmem:[#allocation2 + $0x78] sm:$0xff] %v3908
    %3991 = vst [vmem:[#allocation2 + $0x80] sm:$0xff] %v3913
    %3992 = vst [vmem:[#allocation2 + $0x88] sm:$0xff] %v3916
    %3993 = vst [vmem:[#allocation2 + $0x90] sm:$0xff] %v3921
    %3994 = vst [vmem:[#allocation2 + $0x98] sm:$0xff] %v3924
    %3995 = vst [vmem:[#allocation2 + $0xa0] sm:$0xff] %v3929
    %3996 = vst [vmem:[#allocation2 + $0xa8] sm:$0xff] %v3932
    %3997 = vst [vmem:[#allocation2 + $0xb0] sm:$0xff] %v3937
    %3998 = vst [vmem:[#allocation2 + $0xb8] sm:$0xff] %v3940
    %3999 = vst [vmem:[#allocation2 + $0xc0] sm:$0xff] %v3945
    %4000 = vst [vmem:[#allocation2 + $0xc8] sm:$0xff] %v3948
    %4001 = vst [vmem:[#allocation2 + $0xd0] sm:$0xff] %v3953
    %4002 = vst [vmem:[#allocation2 + $0xd8] sm:$0xff] %v3956
    %4003 = vst [vmem:[#allocation2 + $0xe0] sm:$0xff] %v3961
    %4004 = vst [vmem:[#allocation2 + $0xe8] sm:$0xff] %v3964
    %4005 = vst [vmem:[#allocation2 + $0xf0] sm:$0xff] %v3969
    %4006 = vst [vmem:[#allocation2 + $0xf8] sm:$0xff] %v3972
    // Predicated region
    $region22: #{tpu_custom_call.1} parent=1 // pred_check
      _
    $region23: #{tpu_custom_call.1} parent=1 // pred_check_branch
      %4008 = sbr.rel (0) target = $region25
    $region24: #{tpu_custom_call.1} parent=1 // pred_region
      %s4010 = ssub.s32 4096, 4096
      %4011 = vsyncadd [#allocation3], %s4010
      %s4012 = sshll.u32 [#allocation2], 4
      %s4013 = int_to_ptr.vmem [resolvable:$true] %s4012
      %4018 = dma.vmem_to_hbm [thread:$0]  %s4013, 4096, %s5, [#allocation3], 128, 128, 8
    $region25: #{tpu_custom_call.1} parent=1 // pred_fallthru
      _
    // Predicated region
    $region26: #{tpu_custom_call.1} parent=1 // pred_check
      _
    $region27: #{tpu_custom_call.1} parent=1 // pred_check_branch
      %4020 = sbr.rel (0) target = $region29
    $region28: #{tpu_custom_call.1} parent=1 // pred_region
      %4021 = dma.done [#allocation3], 4096
    $region29: #{tpu_custom_call.1} parent=1 // pred_fallthru
      _
    %4022 = vsyncpa [#allocation3], 1

</llo_original>
